<compile_context>
chip_gen: v6e
topology: v6e:2x2x1
jax: 0.10.0
libtpu: 0.0.40
codegen_flags: <defaults>
</compile_context>

<pallas_src>
import functools

import jax
import jax.numpy as jnp
from jax.experimental import pallas as pl
from jax.experimental.pallas import tpu as pltpu


def _vmem():
    return pl.BlockSpec(memory_space=pltpu.MemorySpace.VMEM)


# ---------------------------------------------------------------------------
# Fused forward kernel
# ---------------------------------------------------------------------------
def _fused_forward_kernel(
        col1_ref,                    # (N*H*W, 36)  host-built im2col of the input
        w1_ref, b1_ref,              # (36, 32),  (1, 32)
        w2_ref, b2_ref,              # (288, 64), (1, 64)
        w3_ref, b3_ref,              # (576, 128),(1, 128)
        hdw_ref, hdb_ref,            # (8, 128),  (8, 1)  rows: 4 policy + 2 value + 2 zero
        w1a_ref, w1b_ref,            # (HW, 64)   value_fc1 weight, per value-conv channel
        vb1_ref,                     # (1, 64)
        vw2_ref, vb2_ref,            # (64, 1), (1, 1)
        pol_ref,                     # out: (4, N*H*W)  softmax'ed policy, cols (n,h,w)
        val_ref,                     # out: (N, 128)    tanh value, lane-broadcast
        pad2, pad3,                  # VMEM halo scratch
        *, n, h, w):
    nhw = n * h * w
    hwsz = h * w

    def conv3x3_relu(a_nhwc, pad_ref, w_ref, b_ref):
        """3x3 'same' conv + bias + relu: halo buffer + 9 per-tap MXU dots."""
        cin = a_nhwc.shape[-1]
        # Zero only the 1-pixel border (not the whole buffer), then the interior.
        pad_ref[:, 0:1, :, :] = jnp.zeros((n, 1, w + 2, cin), jnp.float32)
        pad_ref[:, h + 1:h + 2, :, :] = jnp.zeros((n, 1, w + 2, cin), jnp.float32)
        pad_ref[:, 1:h + 1, 0:1, :] = jnp.zeros((n, h, 1, cin), jnp.float32)
        pad_ref[:, 1:h + 1, w + 1:w + 2, :] = jnp.zeros((n, h, 1, cin), jnp.float32)
        pad_ref[:, 1:h + 1, 1:w + 1, :] = a_nhwc
        acc = None
        for dy in range(3):
            for dx in range(3):
                k = dy * 3 + dx
                patch = pad_ref[:, dy:dy + h, dx:dx + w, :].reshape(nhw, cin)
                d = jnp.dot(patch, w_ref[k * cin:(k + 1) * cin, :],
                            preferred_element_type=jnp.float32)
                acc = d if acc is None else acc + d
        return jnp.maximum(acc + b_ref[...], 0.0)               # (nhw, cout)

    # conv1: im2col was built on the host (the input is only ~2 KiB).
    a = jnp.dot(col1_ref[...], w1_ref[...], preferred_element_type=jnp.float32)
    a = jnp.maximum(a + b1_ref[...], 0.0)                                   # (nhw, 32)
    a = conv3x3_relu(a.reshape(n, h, w, -1), pad2, w2_ref, b2_ref)          # (nhw, 64)
    a = conv3x3_relu(a.reshape(n, h, w, -1), pad3, w3_ref, b3_ref)          # (nhw, 128)

    # Fused 1x1 policy(4)+value(2) heads in channel-major form: one
    # (8,128)x(128,nhw) matmul -> a lane-dense (8, nhw) tile.
    a_t = jnp.transpose(a, (1, 0))                                          # (128, nhw)
    heads = jnp.dot(hdw_ref[...], a_t, preferred_element_type=jnp.float32)
    heads = jnp.maximum(heads + hdb_ref[...], 0.0)                          # (8, nhw)

    # Global softmax over EVERY policy element (batch included), exactly like
    # the module's custom `softmax`.  Already channel-major -> no transpose.
    pol = heads[0:4, :]
    m = jnp.max(pol, axis=(0, 1), keepdims=True)
    e = jnp.exp(pol - m)
    s = jnp.sum(e, axis=(0, 1), keepdims=True)
    pol_ref[...] = e * pl.reciprocal(s, approx=True)                        # (4, nhw)

    # Value head: per-batch (c,hw)-ordered contraction against the per-channel
    # value_fc1 weight slabs.  Unrolled over the (small) batch; every slice is
    # static and every op is a tiny lane-dense dot.
    # TODO(synk): for large batch replace this unrolled loop with a single
    #             (N, 2*HW) x (2*HW, 64) matmul and a batch grid axis.
    w1a = w1a_ref[...]
    w1b = w1b_ref[...]
    vb1 = vb1_ref[...]
    vw2 = vw2_ref[...]
    vb2 = vb2_ref[...]
    for i in range(n):
        vc0_i = heads[4:5, i * hwsz:(i + 1) * hwsz]                         # (1, HW)
        vc1_i = heads[5:6, i * hwsz:(i + 1) * hwsz]                         # (1, HW)
        hdn_i = (jnp.dot(vc0_i, w1a, preferred_element_type=jnp.float32)
                 + jnp.dot(vc1_i, w1b, preferred_element_type=jnp.float32)
                 + vb1)
        hdn_i = jnp.maximum(hdn_i, 0.0)                                     # (1, 64)
        v_i = jnp.dot(hdn_i, vw2, preferred_element_type=jnp.float32) + vb2
        val_ref[i:i + 1, :] = jnp.broadcast_to(jnp.tanh(v_i), (1, 128))


# ---------------------------------------------------------------------------
# One-time parameter preparation (PyTorch layouts -> kernel matmul layouts).
# Batch-independent; call ONCE and reuse the result for every forward call.
# ---------------------------------------------------------------------------
def prepare_params(params, board_height, board_width):
    HW = board_height * board_width

    def im2col_w(wt):
        # (Cout, Cin, kh, kw) -> (kh*kw*Cin, Cout), rows ordered (dy, dx, cin)
        co, ci, kh, kw = wt.shape
        return jnp.transpose(wt, (2, 3, 1, 0)).reshape(kh * kw * ci, co)

    head_w = jnp.zeros((8, 128), jnp.float32)
    head_w = head_w.at[0:4, :].set(params['policy_conv_w'].reshape(4, 128))
    head_w = head_w.at[4:6, :].set(params['value_conv_w'].reshape(2, 128))
    head_b = jnp.zeros((8, 1), jnp.float32)
    head_b = head_b.at[0:4, 0].set(params['policy_conv_b'])
    head_b = head_b.at[4:6, 0].set(params['value_conv_b'])

    # value_fc1 acts on a (c, h, w)-ordered flatten; split per value-conv channel.
    w1t = jnp.transpose(params['value_fc1_w'], (1, 0))        # (2*HW, 64), rows (c, hw)

    return dict(
        w1=im2col_w(params['conv1_w']), b1=params['conv1_b'].reshape(1, -1),
        w2=im2col_w(params['conv2_w']), b2=params['conv2_b'].reshape(1, -1),
        w3=im2col_w(params['conv3_w']), b3=params['conv3_b'].reshape(1, -1),
        head_w=head_w, head_b=head_b,
        w1a=w1t[0:HW, :], w1b=w1t[HW:2 * HW, :],
        vb1=params['value_fc1_b'].reshape(1, -1),
        vw2=jnp.transpose(params['value_fc2_w'], (1, 0)),
        vb2=params['value_fc2_b'].reshape(1, -1),
    )


def policy_value_net_forward(kparams, state_input_nchw, *, board_height, board_width):
    """Reproduces PolicyValueNet.forward.  Input is NCHW like PyTorch.

    `kparams` must come from `prepare_params` (computed once, reused)."""
    N = state_input_nchw.shape[0]
    H, W = board_height, board_width
    HW = H * W
    nhw = N * HW

    # Tiny per-call layout ops on the ~2 KiB input: NCHW->NHWC + conv1 im2col.
    x_nhwc = jnp.transpose(state_input_nchw, (0, 2, 3, 1))
    xp = jnp.pad(x_nhwc, ((0, 0), (1, 1), (1, 1), (0, 0)))
    col1 = jnp.concatenate(
        [xp[:, dy:dy + H, dx:dx + W, :].reshape(nhw, 4)
         for dy in range(3) for dx in range(3)], axis=1)                    # (nhw, 36)

    kern = functools.partial(_fused_forward_kernel, n=N, h=H, w=W)
    pol_t, val_b = pl.pallas_call(
        kern,
        out_shape=(jax.ShapeDtypeStruct((4, nhw), jnp.float32),
                   jax.ShapeDtypeStruct((N, 128), jnp.float32)),
        in_specs=[_vmem() for _ in range(14)],
        out_specs=(_vmem(), _vmem()),
        scratch_shapes=[
            pltpu.VMEM((N, H + 2, W + 2, 32), jnp.float32),   # conv2 halo
            pltpu.VMEM((N, H + 2, W + 2, 64), jnp.float32),   # conv3 halo
        ],
    )(col1, kparams['w1'], kparams['b1'], kparams['w2'], kparams['b2'],
      kparams['w3'], kparams['b3'], kparams['head_w'], kparams['head_b'],
      kparams['w1a'], kparams['w1b'], kparams['vb1'],
      kparams['vw2'], kparams['vb2'])

    # (c, (n,h,w)) columns -> PyTorch's (n, (c,h,w)) flatten order (2 KiB
    # fix-up; the in-kernel global softmax is order-invariant so it commutes).
    policy = pol_t.reshape(4, N, HW).transpose(1, 0, 2).reshape(N, 4 * HW)
    value = val_b[:, 0:1]                                     # (N, 1)
    return policy, value[0]          # matches `return (softmax(policy), value[0])`


# ---------------------------------------------------------------------------
# Deterministic synthetic parameters (PyTorch layouts, shapes from __init__)
# ---------------------------------------------------------------------------
def init_params(board_width, board_height, key):
    ks = jax.random.split(key, 16)
    hw = board_width * board_height

    def w(k, shape, scale=0.05):
        return (scale * jax.random.normal(k, shape)).astype(jnp.float32)

    return {
        'conv1_w': w(ks[0], (32, 4, 3, 3)),        'conv1_b': w(ks[1], (32,)),
        'conv2_w': w(ks[2], (64, 32, 3, 3)),       'conv2_b': w(ks[3], (64,)),
        'conv3_w': w(ks[4], (128, 64, 3, 3)),      'conv3_b': w(ks[5], (128,)),
        'policy_conv_w': w(ks[6], (4, 128, 1, 1)), 'policy_conv_b': w(ks[7], (4,)),
        'value_conv_w': w(ks[8], (2, 128, 1, 1)),  'value_conv_b': w(ks[9], (2,)),
        'value_fc1_w': w(ks[10], (64, hw * 2)),    'value_fc1_b': w(ks[11], (64,)),
        'value_fc2_w': w(ks[12], (1, 64)),         'value_fc2_b': w(ks[13], (1,)),
        # policy_fc1 is defined in __init__ but never used in forward()
        'policy_fc1_w': w(ks[14], (hw, hw)),       'policy_fc1_b': w(ks[15], (hw,)),
    }


# ---------------------------------------------------------------------------
# Pure-JAX reference directly on the PyTorch-layout parameters
# ---------------------------------------------------------------------------
def reference_forward(params, x_nchw):
    def conv(x, wt, b, pad):
        y = jax.lax.conv_general_dilated(
            x, wt, (1, 1), [(pad, pad), (pad, pad)],
            dimension_numbers=('NCHW', 'OIHW', 'NCHW'))
        return jnp.maximum(y + b.reshape(1, -1, 1, 1), 0.0)

    x = conv(x_nchw, params['conv1_w'], params['conv1_b'], 1)
    x = conv(x, params['conv2_w'], params['conv2_b'], 1)
    x = conv(x, params['conv3_w'], params['conv3_b'], 1)

    pol = conv(x, params['policy_conv_w'], params['policy_conv_b'], 0)
    pol_flat = pol.reshape(pol.shape[0], -1)          # NCHW flatten = (c,h,w) order
    e = jnp.exp(pol_flat - jnp.max(pol_flat))
    policy = e / jnp.sum(e)

    val = conv(x, params['value_conv_w'], params['value_conv_b'], 0)
    vflat = val.reshape(val.shape[0], -1)
    hdn = jnp.maximum(vflat @ params['value_fc1_w'].T + params['value_fc1_b'], 0.0)
    value = jnp.tanh(hdn @ params['value_fc2_w'].T + params['value_fc2_b'])
    return policy, value[0]


# ---------------------------------------------------------------------------
if __name__ == "__main__":
    board_width = board_height = 8
    batch = 2

    key = jax.random.PRNGKey(0)
    k_par, k_in = jax.random.split(key)
    params = init_params(board_width, board_height, k_par)

    # PyTorch-style NCHW input: (batch, 4 planes, H, W)
    x = jax.random.normal(
        k_in, (batch, 4, board_height, board_width), dtype=jnp.float32)

    # Weight re-layout runs ONCE here and is reused for every forward call.
    kparams = prepare_params(params, board_height, board_width)
    kparams = jax.tree_util.tree_map(jnp.asarray, kparams)

    fwd = jax.jit(functools.partial(policy_value_net_forward,
                                    board_height=board_height,
                                    board_width=board_width))
    policy, value = fwd(kparams, x)
    policy = jax.block_until_ready(policy)
    value = jax.block_until_ready(value)

    # numerical sanity check against a pure-JAX reference
    policy_ref, value_ref = reference_forward(params, x)
    assert policy.shape == (batch, 4 * board_width * board_height)
    assert value.shape == (1,)
    assert jnp.allclose(policy, policy_ref, atol=1e-4, rtol=1e-4), \
        float(jnp.max(jnp.abs(policy - policy_ref)))
    assert jnp.allclose(value, value_ref, atol=1e-4, rtol=1e-4), \
        float(jnp.max(jnp.abs(value - value_ref)))

    print("KERNEL_OK")
</pallas_src>

<mosaic_0001>
module attributes {stable_mosaic.version = 11 : i64} {
  func.func @_fused_forward_kernel(%arg0: memref<128x36xf32, #tpu.memory_space<vmem>>, %arg1: memref<36x32xf32, #tpu.memory_space<vmem>>, %arg2: memref<1x32xf32, #tpu.memory_space<vmem>>, %arg3: memref<288x64xf32, #tpu.memory_space<vmem>>, %arg4: memref<1x64xf32, #tpu.memory_space<vmem>>, %arg5: memref<576x128xf32, #tpu.memory_space<vmem>>, %arg6: memref<1x128xf32, #tpu.memory_space<vmem>>, %arg7: memref<8x128xf32, #tpu.memory_space<vmem>>, %arg8: memref<8x1xf32, #tpu.memory_space<vmem>>, %arg9: memref<64x64xf32, #tpu.memory_space<vmem>>, %arg10: memref<64x64xf32, #tpu.memory_space<vmem>>, %arg11: memref<1x64xf32, #tpu.memory_space<vmem>>, %arg12: memref<64x1xf32, #tpu.memory_space<vmem>>, %arg13: memref<1x1xf32, #tpu.memory_space<vmem>>, %arg14: memref<4x128xf32, #tpu.memory_space<vmem>>, %arg15: memref<2x128xf32, #tpu.memory_space<vmem>>, %arg16: memref<2x10x10x32xf32, #tpu.memory_space<vmem>>, %arg17: memref<2x10x10x64xf32, #tpu.memory_space<vmem>>) attributes {dimension_semantics = [], scalar_prefetch = 0 : i64, scratch_operands = 2 : i64, tpu.core_type = #tpu.core_type<tc>} {
    %c0 = arith.constant 0 : index
    %c0_0 = arith.constant 0 : index
    %0 = vector.load %arg0[%c0, %c0_0] : memref<128x36xf32, #tpu.memory_space<vmem>>, vector<128x36xf32>
    %c0_1 = arith.constant 0 : index
    %c0_2 = arith.constant 0 : index
    %1 = vector.load %arg1[%c0_1, %c0_2] : memref<36x32xf32, #tpu.memory_space<vmem>>, vector<36x32xf32>
    %cst = arith.constant dense<0.000000e+00> : vector<128x32xf32>
    %2 = tpu.matmul %0, %1, %cst {dimension_numbers = #tpu.dot_dimension_numbers<[1], [0], [0], [1], [0, 0, 1, 1], [], []>} : vector<128x36xf32>, vector<36x32xf32>, vector<128x32xf32> -> vector<128x32xf32>
    %c0_3 = arith.constant 0 : index
    %c0_4 = arith.constant 0 : index
    %3 = vector.load %arg2[%c0_3, %c0_4] : memref<1x32xf32, #tpu.memory_space<vmem>>, vector<1x32xf32>
    %4 = vector.broadcast %3 : vector<1x32xf32> to vector<128x32xf32>
    %5 = arith.addf %2, %4 : vector<128x32xf32>
    %cst_5 = arith.constant 0.000000e+00 : f32
    %6 = vector.broadcast %cst_5 : f32 to vector<128x32xf32>
    %7 = arith.maximumf %5, %6 : vector<128x32xf32>
    %8 = vector.shape_cast %7 : vector<128x32xf32> to vector<2x8x8x32xf32>
    %cst_6 = arith.constant 0.000000e+00 : f32
    %9 = vector.broadcast %cst_6 : f32 to vector<2x1x10x32xf32>
    %c0_7 = arith.constant 0 : index
    %c0_8 = arith.constant 0 : index
    %c0_9 = arith.constant 0 : index
    %c0_10 = arith.constant 0 : index
    %10 = vector.load %arg16[%c0_7, %c0_8, %c0_9, %c0_10] : memref<2x10x10x32xf32, #tpu.memory_space<vmem>>, vector<2x1x10x32xf32>
    tpu.vector_store %arg16[%c0_7, %c0_8, %c0_9, %c0_10], %9 {strides = array<i32>} : memref<2x10x10x32xf32, #tpu.memory_space<vmem>>, vector<2x1x10x32xf32>,
    %cst_11 = arith.constant 0.000000e+00 : f32
    %11 = vector.broadcast %cst_11 : f32 to vector<2x1x10x32xf32>
    %c0_12 = arith.constant 0 : index
    %c9 = arith.constant 9 : index
    %c0_13 = arith.constant 0 : index
    %c0_14 = arith.constant 0 : index
    %12 = vector.load %arg16[%c0_12, %c9, %c0_13, %c0_14] : memref<2x10x10x32xf32, #tpu.memory_space<vmem>>, vector<2x1x10x32xf32>
    tpu.vector_store %arg16[%c0_12, %c9, %c0_13, %c0_14], %11 {strides = array<i32>} : memref<2x10x10x32xf32, #tpu.memory_space<vmem>>, vector<2x1x10x32xf32>,
    %cst_15 = arith.constant 0.000000e+00 : f32
    %13 = vector.broadcast %cst_15 : f32 to vector<2x8x1x32xf32>
    %c0_16 = arith.constant 0 : index
    %c1 = arith.constant 1 : index
    %c0_17 = arith.constant 0 : index
    %c0_18 = arith.constant 0 : index
    %14 = vector.load %arg16[%c0_16, %c1, %c0_17, %c0_18] : memref<2x10x10x32xf32, #tpu.memory_space<vmem>>, vector<2x8x1x32xf32>
    tpu.vector_store %arg16[%c0_16, %c1, %c0_17, %c0_18], %13 {strides = array<i32>} : memref<2x10x10x32xf32, #tpu.memory_space<vmem>>, vector<2x8x1x32xf32>,
    %cst_19 = arith.constant 0.000000e+00 : f32
    %15 = vector.broadcast %cst_19 : f32 to vector<2x8x1x32xf32>
    %c0_20 = arith.constant 0 : index
    %c1_21 = arith.constant 1 : index
    %c9_22 = arith.constant 9 : index
    %c0_23 = arith.constant 0 : index
    %16 = vector.load %arg16[%c0_20, %c1_21, %c9_22, %c0_23] : memref<2x10x10x32xf32, #tpu.memory_space<vmem>>, vector<2x8x1x32xf32>
    tpu.vector_store %arg16[%c0_20, %c1_21, %c9_22, %c0_23], %15 {strides = array<i32>} : memref<2x10x10x32xf32, #tpu.memory_space<vmem>>, vector<2x8x1x32xf32>,
    %c0_24 = arith.constant 0 : index
    %c1_25 = arith.constant 1 : index
    %c1_26 = arith.constant 1 : index
    %c0_27 = arith.constant 0 : index
    %17 = vector.load %arg16[%c0_24, %c1_25, %c1_26, %c0_27] : memref<2x10x10x32xf32, #tpu.memory_space<vmem>>, vector<2x8x8x32xf32>
    tpu.vector_store %arg16[%c0_24, %c1_25, %c1_26, %c0_27], %8 {strides = array<i32>} : memref<2x10x10x32xf32, #tpu.memory_space<vmem>>, vector<2x8x8x32xf32>,
    %c0_28 = arith.constant 0 : index
    %c0_29 = arith.constant 0 : index
    %c0_30 = arith.constant 0 : index
    %c0_31 = arith.constant 0 : index
    %18 = vector.load %arg16[%c0_28, %c0_29, %c0_30, %c0_31] : memref<2x10x10x32xf32, #tpu.memory_space<vmem>>, vector<2x8x8x32xf32>
    %19 = vector.shape_cast %18 : vector<2x8x8x32xf32> to vector<128x32xf32>
    %c0_32 = arith.constant 0 : index
    %c0_33 = arith.constant 0 : index
    %20 = vector.load %arg3[%c0_32, %c0_33] : memref<288x64xf32, #tpu.memory_space<vmem>>, vector<32x64xf32>
    %cst_34 = arith.constant dense<0.000000e+00> : vector<128x64xf32>
    %21 = tpu.matmul %19, %20, %cst_34 {dimension_numbers = #tpu.dot_dimension_numbers<[1], [0], [0], [1], [0, 0, 1, 1], [], []>} : vector<128x32xf32>, vector<32x64xf32>, vector<128x64xf32> -> vector<128x64xf32>
    %c0_35 = arith.constant 0 : index
    %c0_36 = arith.constant 0 : index
    %c1_37 = arith.constant 1 : index
    %c0_38 = arith.constant 0 : index
    %22 = vector.load %arg16[%c0_35, %c0_36, %c1_37, %c0_38] : memref<2x10x10x32xf32, #tpu.memory_space<vmem>>, vector<2x8x8x32xf32>
    %23 = vector.shape_cast %22 : vector<2x8x8x32xf32> to vector<128x32xf32>
    %c32 = arith.constant 32 : index
    %c0_39 = arith.constant 0 : index
    %24 = vector.load %arg3[%c32, %c0_39] : memref<288x64xf32, #tpu.memory_space<vmem>>, vector<32x64xf32>
    %cst_40 = arith.constant dense<0.000000e+00> : vector<128x64xf32>
    %25 = tpu.matmul %23, %24, %cst_40 {dimension_numbers = #tpu.dot_dimension_numbers<[1], [0], [0], [1], [0, 0, 1, 1], [], []>} : vector<128x32xf32>, vector<32x64xf32>, vector<128x64xf32> -> vector<128x64xf32>
    %26 = arith.addf %21, %25 : vector<128x64xf32>
    %c0_41 = arith.constant 0 : index
    %c0_42 = arith.constant 0 : index
    %c2 = arith.constant 2 : index
    %c0_43 = arith.constant 0 : index
    %27 = vector.load %arg16[%c0_41, %c0_42, %c2, %c0_43] : memref<2x10x10x32xf32, #tpu.memory_space<vmem>>, vector<2x8x8x32xf32>
    %28 = vector.shape_cast %27 : vector<2x8x8x32xf32> to vector<128x32xf32>
    %c64 = arith.constant 64 : index
    %c0_44 = arith.constant 0 : index
    %29 = vector.load %arg3[%c64, %c0_44] : memref<288x64xf32, #tpu.memory_space<vmem>>, vector<32x64xf32>
    %cst_45 = arith.constant dense<0.000000e+00> : vector<128x64xf32>
    %30 = tpu.matmul %28, %29, %cst_45 {dimension_numbers = #tpu.dot_dimension_numbers<[1], [0], [0], [1], [0, 0, 1, 1], [], []>} : vector<128x32xf32>, vector<32x64xf32>, vector<128x64xf32> -> vector<128x64xf32>
    %31 = arith.addf %26, %30 : vector<128x64xf32>
    %c0_46 = arith.constant 0 : index
    %c1_47 = arith.constant 1 : index
    %c0_48 = arith.constant 0 : index
    %c0_49 = arith.constant 0 : index
    %32 = vector.load %arg16[%c0_46, %c1_47, %c0_48, %c0_49] : memref<2x10x10x32xf32, #tpu.memory_space<vmem>>, vector<2x8x8x32xf32>
    %33 = vector.shape_cast %32 : vector<2x8x8x32xf32> to vector<128x32xf32>
    %c96 = arith.constant 96 : index
    %c0_50 = arith.constant 0 : index
    %34 = vector.load %arg3[%c96, %c0_50] : memref<288x64xf32, #tpu.memory_space<vmem>>, vector<32x64xf32>
    %cst_51 = arith.constant dense<0.000000e+00> : vector<128x64xf32>
    %35 = tpu.matmul %33, %34, %cst_51 {dimension_numbers = #tpu.dot_dimension_numbers<[1], [0], [0], [1], [0, 0, 1, 1], [], []>} : vector<128x32xf32>, vector<32x64xf32>, vector<128x64xf32> -> vector<128x64xf32>
    %36 = arith.addf %31, %35 : vector<128x64xf32>
    %c0_52 = arith.constant 0 : index
    %c1_53 = arith.constant 1 : index
    %c1_54 = arith.constant 1 : index
    %c0_55 = arith.constant 0 : index
    %37 = vector.load %arg16[%c0_52, %c1_53, %c1_54, %c0_55] : memref<2x10x10x32xf32, #tpu.memory_space<vmem>>, vector<2x8x8x32xf32>
    %38 = vector.shape_cast %37 : vector<2x8x8x32xf32> to vector<128x32xf32>
    %c128 = arith.constant 128 : index
    %c0_56 = arith.constant 0 : index
    %39 = vector.load %arg3[%c128, %c0_56] : memref<288x64xf32, #tpu.memory_space<vmem>>, vector<32x64xf32>
    %cst_57 = arith.constant dense<0.000000e+00> : vector<128x64xf32>
    %40 = tpu.matmul %38, %39, %cst_57 {dimension_numbers = #tpu.dot_dimension_numbers<[1], [0], [0], [1], [0, 0, 1, 1], [], []>} : vector<128x32xf32>, vector<32x64xf32>, vector<128x64xf32> -> vector<128x64xf32>
    %41 = arith.addf %36, %40 : vector<128x64xf32>
    %c0_58 = arith.constant 0 : index
    %c1_59 = arith.constant 1 : index
    %c2_60 = arith.constant 2 : index
    %c0_61 = arith.constant 0 : index
    %42 = vector.load %arg16[%c0_58, %c1_59, %c2_60, %c0_61] : memref<2x10x10x32xf32, #tpu.memory_space<vmem>>, vector<2x8x8x32xf32>
    %43 = vector.shape_cast %42 : vector<2x8x8x32xf32> to vector<128x32xf32>
    %c160 = arith.constant 160 : index
    %c0_62 = arith.constant 0 : index
    %44 = vector.load %arg3[%c160, %c0_62] : memref<288x64xf32, #tpu.memory_space<vmem>>, vector<32x64xf32>
    %cst_63 = arith.constant dense<0.000000e+00> : vector<128x64xf32>
    %45 = tpu.matmul %43, %44, %cst_63 {dimension_numbers = #tpu.dot_dimension_numbers<[1], [0], [0], [1], [0, 0, 1, 1], [], []>} : vector<128x32xf32>, vector<32x64xf32>, vector<128x64xf32> -> vector<128x64xf32>
    %46 = arith.addf %41, %45 : vector<128x64xf32>
    %c0_64 = arith.constant 0 : index
    %c2_65 = arith.constant 2 : index
    %c0_66 = arith.constant 0 : index
    %c0_67 = arith.constant 0 : index
    %47 = vector.load %arg16[%c0_64, %c2_65, %c0_66, %c0_67] : memref<2x10x10x32xf32, #tpu.memory_space<vmem>>, vector<2x8x8x32xf32>
    %48 = vector.shape_cast %47 : vector<2x8x8x32xf32> to vector<128x32xf32>
    %c192 = arith.constant 192 : index
    %c0_68 = arith.constant 0 : index
    %49 = vector.load %arg3[%c192, %c0_68] : memref<288x64xf32, #tpu.memory_space<vmem>>, vector<32x64xf32>
    %cst_69 = arith.constant dense<0.000000e+00> : vector<128x64xf32>
    %50 = tpu.matmul %48, %49, %cst_69 {dimension_numbers = #tpu.dot_dimension_numbers<[1], [0], [0], [1], [0, 0, 1, 1], [], []>} : vector<128x32xf32>, vector<32x64xf32>, vector<128x64xf32> -> vector<128x64xf32>
    %51 = arith.addf %46, %50 : vector<128x64xf32>
    %c0_70 = arith.constant 0 : index
    %c2_71 = arith.constant 2 : index
    %c1_72 = arith.constant 1 : index
    %c0_73 = arith.constant 0 : index
    %52 = vector.load %arg16[%c0_70, %c2_71, %c1_72, %c0_73] : memref<2x10x10x32xf32, #tpu.memory_space<vmem>>, vector<2x8x8x32xf32>
    %53 = vector.shape_cast %52 : vector<2x8x8x32xf32> to vector<128x32xf32>
    %c224 = arith.constant 224 : index
    %c0_74 = arith.constant 0 : index
    %54 = vector.load %arg3[%c224, %c0_74] : memref<288x64xf32, #tpu.memory_space<vmem>>, vector<32x64xf32>
    %cst_75 = arith.constant dense<0.000000e+00> : vector<128x64xf32>
    %55 = tpu.matmul %53, %54, %cst_75 {dimension_numbers = #tpu.dot_dimension_numbers<[1], [0], [0], [1], [0, 0, 1, 1], [], []>} : vector<128x32xf32>, vector<32x64xf32>, vector<128x64xf32> -> vector<128x64xf32>
    %56 = arith.addf %51, %55 : vector<128x64xf32>
    %c0_76 = arith.constant 0 : index
    %c2_77 = arith.constant 2 : index
    %c2_78 = arith.constant 2 : index
    %c0_79 = arith.constant 0 : index
    %57 = vector.load %arg16[%c0_76, %c2_77, %c2_78, %c0_79] : memref<2x10x10x32xf32, #tpu.memory_space<vmem>>, vector<2x8x8x32xf32>
    %58 = vector.shape_cast %57 : vector<2x8x8x32xf32> to vector<128x32xf32>
    %c256 = arith.constant 256 : index
    %c0_80 = arith.constant 0 : index
    %59 = vector.load %arg3[%c256, %c0_80] : memref<288x64xf32, #tpu.memory_space<vmem>>, vector<32x64xf32>
    %cst_81 = arith.constant dense<0.000000e+00> : vector<128x64xf32>
    %60 = tpu.matmul %58, %59, %cst_81 {dimension_numbers = #tpu.dot_dimension_numbers<[1], [0], [0], [1], [0, 0, 1, 1], [], []>} : vector<128x32xf32>, vector<32x64xf32>, vector<128x64xf32> -> vector<128x64xf32>
    %61 = arith.addf %56, %60 : vector<128x64xf32>
    %c0_82 = arith.constant 0 : index
    %c0_83 = arith.constant 0 : index
    %62 = vector.load %arg4[%c0_82, %c0_83] : memref<1x64xf32, #tpu.memory_space<vmem>>, vector<1x64xf32>
    %63 = vector.broadcast %62 : vector<1x64xf32> to vector<128x64xf32>
    %64 = arith.addf %61, %63 : vector<128x64xf32>
    %cst_84 = arith.constant 0.000000e+00 : f32
    %65 = vector.broadcast %cst_84 : f32 to vector<128x64xf32>
    %66 = arith.maximumf %64, %65 : vector<128x64xf32>
    %67 = vector.shape_cast %66 : vector<128x64xf32> to vector<2x8x8x64xf32>
    %cst_85 = arith.constant 0.000000e+00 : f32
    %68 = vector.broadcast %cst_85 : f32 to vector<2x1x10x64xf32>
    %c0_86 = arith.constant 0 : index
    %c0_87 = arith.constant 0 : index
    %c0_88 = arith.constant 0 : index
    %c0_89 = arith.constant 0 : index
    %69 = vector.load %arg17[%c0_86, %c0_87, %c0_88, %c0_89] : memref<2x10x10x64xf32, #tpu.memory_space<vmem>>, vector<2x1x10x64xf32>
    tpu.vector_store %arg17[%c0_86, %c0_87, %c0_88, %c0_89], %68 {strides = array<i32>} : memref<2x10x10x64xf32, #tpu.memory_space<vmem>>, vector<2x1x10x64xf32>,
    %cst_90 = arith.constant 0.000000e+00 : f32
    %70 = vector.broadcast %cst_90 : f32 to vector<2x1x10x64xf32>
    %c0_91 = arith.constant 0 : index
    %c9_92 = arith.constant 9 : index
    %c0_93 = arith.constant 0 : index
    %c0_94 = arith.constant 0 : index
    %71 = vector.load %arg17[%c0_91, %c9_92, %c0_93, %c0_94] : memref<2x10x10x64xf32, #tpu.memory_space<vmem>>, vector<2x1x10x64xf32>
    tpu.vector_store %arg17[%c0_91, %c9_92, %c0_93, %c0_94], %70 {strides = array<i32>} : memref<2x10x10x64xf32, #tpu.memory_space<vmem>>, vector<2x1x10x64xf32>,
    %cst_95 = arith.constant 0.000000e+00 : f32
    %72 = vector.broadcast %cst_95 : f32 to vector<2x8x1x64xf32>
    %c0_96 = arith.constant 0 : index
    %c1_97 = arith.constant 1 : index
    %c0_98 = arith.constant 0 : index
    %c0_99 = arith.constant 0 : index
    %73 = vector.load %arg17[%c0_96, %c1_97, %c0_98, %c0_99] : memref<2x10x10x64xf32, #tpu.memory_space<vmem>>, vector<2x8x1x64xf32>
    tpu.vector_store %arg17[%c0_96, %c1_97, %c0_98, %c0_99], %72 {strides = array<i32>} : memref<2x10x10x64xf32, #tpu.memory_space<vmem>>, vector<2x8x1x64xf32>,
    %cst_100 = arith.constant 0.000000e+00 : f32
    %74 = vector.broadcast %cst_100 : f32 to vector<2x8x1x64xf32>
    %c0_101 = arith.constant 0 : index
    %c1_102 = arith.constant 1 : index
    %c9_103 = arith.constant 9 : index
    %c0_104 = arith.constant 0 : index
    %75 = vector.load %arg17[%c0_101, %c1_102, %c9_103, %c0_104] : memref<2x10x10x64xf32, #tpu.memory_space<vmem>>, vector<2x8x1x64xf32>
    tpu.vector_store %arg17[%c0_101, %c1_102, %c9_103, %c0_104], %74 {strides = array<i32>} : memref<2x10x10x64xf32, #tpu.memory_space<vmem>>, vector<2x8x1x64xf32>,
    %c0_105 = arith.constant 0 : index
    %c1_106 = arith.constant 1 : index
    %c1_107 = arith.constant 1 : index
    %c0_108 = arith.constant 0 : index
    %76 = vector.load %arg17[%c0_105, %c1_106, %c1_107, %c0_108] : memref<2x10x10x64xf32, #tpu.memory_space<vmem>>, vector<2x8x8x64xf32>
    tpu.vector_store %arg17[%c0_105, %c1_106, %c1_107, %c0_108], %67 {strides = array<i32>} : memref<2x10x10x64xf32, #tpu.memory_space<vmem>>, vector<2x8x8x64xf32>,
    %c0_109 = arith.constant 0 : index
    %c0_110 = arith.constant 0 : index
    %c0_111 = arith.constant 0 : index
    %c0_112 = arith.constant 0 : index
    %77 = vector.load %arg17[%c0_109, %c0_110, %c0_111, %c0_112] : memref<2x10x10x64xf32, #tpu.memory_space<vmem>>, vector<2x8x8x64xf32>
    %78 = vector.shape_cast %77 : vector<2x8x8x64xf32> to vector<128x64xf32>
    %c0_113 = arith.constant 0 : index
    %c0_114 = arith.constant 0 : index
    %79 = vector.load %arg5[%c0_113, %c0_114] : memref<576x128xf32, #tpu.memory_space<vmem>>, vector<64x128xf32>
    %cst_115 = arith.constant dense<0.000000e+00> : vector<128x128xf32>
    %80 = tpu.matmul %78, %79, %cst_115 {dimension_numbers = #tpu.dot_dimension_numbers<[1], [0], [0], [1], [0, 0, 1, 1], [], []>} : vector<128x64xf32>, vector<64x128xf32>, vector<128x128xf32> -> vector<128x128xf32>
    %c0_116 = arith.constant 0 : index
    %c0_117 = arith.constant 0 : index
    %c1_118 = arith.constant 1 : index
    %c0_119 = arith.constant 0 : index
    %81 = vector.load %arg17[%c0_116, %c0_117, %c1_118, %c0_119] : memref<2x10x10x64xf32, #tpu.memory_space<vmem>>, vector<2x8x8x64xf32>
    %82 = vector.shape_cast %81 : vector<2x8x8x64xf32> to vector<128x64xf32>
    %c64_120 = arith.constant 64 : index
    %c0_121 = arith.constant 0 : index
    %83 = vector.load %arg5[%c64_120, %c0_121] : memref<576x128xf32, #tpu.memory_space<vmem>>, vector<64x128xf32>
    %cst_122 = arith.constant dense<0.000000e+00> : vector<128x128xf32>
    %84 = tpu.matmul %82, %83, %cst_122 {dimension_numbers = #tpu.dot_dimension_numbers<[1], [0], [0], [1], [0, 0, 1, 1], [], []>} : vector<128x64xf32>, vector<64x128xf32>, vector<128x128xf32> -> vector<128x128xf32>
    %85 = arith.addf %80, %84 : vector<128x128xf32>
    %c0_123 = arith.constant 0 : index
    %c0_124 = arith.constant 0 : index
    %c2_125 = arith.constant 2 : index
    %c0_126 = arith.constant 0 : index
    %86 = vector.load %arg17[%c0_123, %c0_124, %c2_125, %c0_126] : memref<2x10x10x64xf32, #tpu.memory_space<vmem>>, vector<2x8x8x64xf32>
    %87 = vector.shape_cast %86 : vector<2x8x8x64xf32> to vector<128x64xf32>
    %c128_127 = arith.constant 128 : index
    %c0_128 = arith.constant 0 : index
    %88 = vector.load %arg5[%c128_127, %c0_128] : memref<576x128xf32, #tpu.memory_space<vmem>>, vector<64x128xf32>
    %cst_129 = arith.constant dense<0.000000e+00> : vector<128x128xf32>
    %89 = tpu.matmul %87, %88, %cst_129 {dimension_numbers = #tpu.dot_dimension_numbers<[1], [0], [0], [1], [0, 0, 1, 1], [], []>} : vector<128x64xf32>, vector<64x128xf32>, vector<128x128xf32> -> vector<128x128xf32>
    %90 = arith.addf %85, %89 : vector<128x128xf32>
    %c0_130 = arith.constant 0 : index
    %c1_131 = arith.constant 1 : index
    %c0_132 = arith.constant 0 : index
    %c0_133 = arith.constant 0 : index
    %91 = vector.load %arg17[%c0_130, %c1_131, %c0_132, %c0_133] : memref<2x10x10x64xf32, #tpu.memory_space<vmem>>, vector<2x8x8x64xf32>
    %92 = vector.shape_cast %91 : vector<2x8x8x64xf32> to vector<128x64xf32>
    %c192_134 = arith.constant 192 : index
    %c0_135 = arith.constant 0 : index
    %93 = vector.load %arg5[%c192_134, %c0_135] : memref<576x128xf32, #tpu.memory_space<vmem>>, vector<64x128xf32>
    %cst_136 = arith.constant dense<0.000000e+00> : vector<128x128xf32>
    %94 = tpu.matmul %92, %93, %cst_136 {dimension_numbers = #tpu.dot_dimension_numbers<[1], [0], [0], [1], [0, 0, 1, 1], [], []>} : vector<128x64xf32>, vector<64x128xf32>, vector<128x128xf32> -> vector<128x128xf32>
    %95 = arith.addf %90, %94 : vector<128x128xf32>
    %c0_137 = arith.constant 0 : index
    %c1_138 = arith.constant 1 : index
    %c1_139 = arith.constant 1 : index
    %c0_140 = arith.constant 0 : index
    %96 = vector.load %arg17[%c0_137, %c1_138, %c1_139, %c0_140] : memref<2x10x10x64xf32, #tpu.memory_space<vmem>>, vector<2x8x8x64xf32>
    %97 = vector.shape_cast %96 : vector<2x8x8x64xf32> to vector<128x64xf32>
    %c256_141 = arith.constant 256 : index
    %c0_142 = arith.constant 0 : index
    %98 = vector.load %arg5[%c256_141, %c0_142] : memref<576x128xf32, #tpu.memory_space<vmem>>, vector<64x128xf32>
    %cst_143 = arith.constant dense<0.000000e+00> : vector<128x128xf32>
    %99 = tpu.matmul %97, %98, %cst_143 {dimension_numbers = #tpu.dot_dimension_numbers<[1], [0], [0], [1], [0, 0, 1, 1], [], []>} : vector<128x64xf32>, vector<64x128xf32>, vector<128x128xf32> -> vector<128x128xf32>
    %100 = arith.addf %95, %99 : vector<128x128xf32>
    %c0_144 = arith.constant 0 : index
    %c1_145 = arith.constant 1 : index
    %c2_146 = arith.constant 2 : index
    %c0_147 = arith.constant 0 : index
    %101 = vector.load %arg17[%c0_144, %c1_145, %c2_146, %c0_147] : memref<2x10x10x64xf32, #tpu.memory_space<vmem>>, vector<2x8x8x64xf32>
    %102 = vector.shape_cast %101 : vector<2x8x8x64xf32> to vector<128x64xf32>
    %c320 = arith.constant 320 : index
    %c0_148 = arith.constant 0 : index
    %103 = vector.load %arg5[%c320, %c0_148] : memref<576x128xf32, #tpu.memory_space<vmem>>, vector<64x128xf32>
    %cst_149 = arith.constant dense<0.000000e+00> : vector<128x128xf32>
    %104 = tpu.matmul %102, %103, %cst_149 {dimension_numbers = #tpu.dot_dimension_numbers<[1], [0], [0], [1], [0, 0, 1, 1], [], []>} : vector<128x64xf32>, vector<64x128xf32>, vector<128x128xf32> -> vector<128x128xf32>
    %105 = arith.addf %100, %104 : vector<128x128xf32>
    %c0_150 = arith.constant 0 : index
    %c2_151 = arith.constant 2 : index
    %c0_152 = arith.constant 0 : index
    %c0_153 = arith.constant 0 : index
    %106 = vector.load %arg17[%c0_150, %c2_151, %c0_152, %c0_153] : memref<2x10x10x64xf32, #tpu.memory_space<vmem>>, vector<2x8x8x64xf32>
    %107 = vector.shape_cast %106 : vector<2x8x8x64xf32> to vector<128x64xf32>
    %c384 = arith.constant 384 : index
    %c0_154 = arith.constant 0 : index
    %108 = vector.load %arg5[%c384, %c0_154] : memref<576x128xf32, #tpu.memory_space<vmem>>, vector<64x128xf32>
    %cst_155 = arith.constant dense<0.000000e+00> : vector<128x128xf32>
    %109 = tpu.matmul %107, %108, %cst_155 {dimension_numbers = #tpu.dot_dimension_numbers<[1], [0], [0], [1], [0, 0, 1, 1], [], []>} : vector<128x64xf32>, vector<64x128xf32>, vector<128x128xf32> -> vector<128x128xf32>
    %110 = arith.addf %105, %109 : vector<128x128xf32>
    %c0_156 = arith.constant 0 : index
    %c2_157 = arith.constant 2 : index
    %c1_158 = arith.constant 1 : index
    %c0_159 = arith.constant 0 : index
    %111 = vector.load %arg17[%c0_156, %c2_157, %c1_158, %c0_159] : memref<2x10x10x64xf32, #tpu.memory_space<vmem>>, vector<2x8x8x64xf32>
    %112 = vector.shape_cast %111 : vector<2x8x8x64xf32> to vector<128x64xf32>
    %c448 = arith.constant 448 : index
    %c0_160 = arith.constant 0 : index
    %113 = vector.load %arg5[%c448, %c0_160] : memref<576x128xf32, #tpu.memory_space<vmem>>, vector<64x128xf32>
    %cst_161 = arith.constant dense<0.000000e+00> : vector<128x128xf32>
    %114 = tpu.matmul %112, %113, %cst_161 {dimension_numbers = #tpu.dot_dimension_numbers<[1], [0], [0], [1], [0, 0, 1, 1], [], []>} : vector<128x64xf32>, vector<64x128xf32>, vector<128x128xf32> -> vector<128x128xf32>
    %115 = arith.addf %110, %114 : vector<128x128xf32>
    %c0_162 = arith.constant 0 : index
    %c2_163 = arith.constant 2 : index
    %c2_164 = arith.constant 2 : index
    %c0_165 = arith.constant 0 : index
    %116 = vector.load %arg17[%c0_162, %c2_163, %c2_164, %c0_165] : memref<2x10x10x64xf32, #tpu.memory_space<vmem>>, vector<2x8x8x64xf32>
    %117 = vector.shape_cast %116 : vector<2x8x8x64xf32> to vector<128x64xf32>
    %c512 = arith.constant 512 : index
    %c0_166 = arith.constant 0 : index
    %118 = vector.load %arg5[%c512, %c0_166] : memref<576x128xf32, #tpu.memory_space<vmem>>, vector<64x128xf32>
    %cst_167 = arith.constant dense<0.000000e+00> : vector<128x128xf32>
    %119 = tpu.matmul %117, %118, %cst_167 {dimension_numbers = #tpu.dot_dimension_numbers<[1], [0], [0], [1], [0, 0, 1, 1], [], []>} : vector<128x64xf32>, vector<64x128xf32>, vector<128x128xf32> -> vector<128x128xf32>
    %120 = arith.addf %115, %119 : vector<128x128xf32>
    %c0_168 = arith.constant 0 : index
    %c0_169 = arith.constant 0 : index
    %121 = vector.load %arg6[%c0_168, %c0_169] : memref<1x128xf32, #tpu.memory_space<vmem>>, vector<1x128xf32>
    %122 = vector.broadcast %121 : vector<1x128xf32> to vector<128x128xf32>
    %123 = arith.addf %120, %122 : vector<128x128xf32>
    %cst_170 = arith.constant 0.000000e+00 : f32
    %124 = vector.broadcast %cst_170 : f32 to vector<128x128xf32>
    %125 = arith.maximumf %123, %124 : vector<128x128xf32>
    %126 = tpu.transpose %125, [1, 0] : vector<128x128xf32> -> vector<128x128xf32>
    %c0_171 = arith.constant 0 : index
    %c0_172 = arith.constant 0 : index
    %127 = vector.load %arg7[%c0_171, %c0_172] : memref<8x128xf32, #tpu.memory_space<vmem>>, vector<8x128xf32>
    %cst_173 = arith.constant dense<0.000000e+00> : vector<8x128xf32>
    %128 = tpu.matmul %127, %126, %cst_173 {dimension_numbers = #tpu.dot_dimension_numbers<[1], [0], [0], [1], [0, 0, 1, 1], [], []>} : vector<8x128xf32>, vector<128x128xf32>, vector<8x128xf32> -> vector<8x128xf32>
    %c0_174 = arith.constant 0 : index
    %c0_175 = arith.constant 0 : index
    %129 = vector.load %arg8[%c0_174, %c0_175] : memref<8x1xf32, #tpu.memory_space<vmem>>, vector<8x1xf32>
    %130 = vector.broadcast %129 : vector<8x1xf32> to vector<8x128xf32>
    %131 = arith.addf %128, %130 : vector<8x128xf32>
    %cst_176 = arith.constant 0.000000e+00 : f32
    %132 = vector.broadcast %cst_176 : f32 to vector<8x128xf32>
    %133 = arith.maximumf %131, %132 : vector<8x128xf32>
    %134 = vector.extract_strided_slice %133 {offsets = [0, 0], sizes = [4, 128], strides = [1, 1]} : vector<8x128xf32> to vector<4x128xf32>
    %135 = vector.shape_cast %134 : vector<4x128xf32> to vector<1x4x128xf32>
    %cst_177 = arith.constant dense<0xFF800000> : vector<1xf32>
    %136 = vector.multi_reduction <maximumf>, %135, %cst_177 [1, 2] : vector<1x4x128xf32> to vector<1xf32>
    %137 = vector.shape_cast %136 : vector<1xf32> to vector<1x1x1xf32>
    %138 = vector.extract %137[0, 0, 0] : f32 from vector<1x1x1xf32>
    %139 = vector.broadcast %138 : f32 to vector<1x1xf32>
    %140 = vector.broadcast %139 : vector<1x1xf32> to vector<4x128xf32>
    %141 = arith.subf %134, %140 : vector<4x128xf32>
    %142 = math.exp %141 : vector<4x128xf32>
    %143 = vector.shape_cast %142 : vector<4x128xf32> to vector<1x4x128xf32>
    %cst_178 = arith.constant dense<0.000000e+00> : vector<1xf32>
    %144 = vector.multi_reduction <add>, %143, %cst_178 [1, 2] : vector<1x4x128xf32> to vector<1xf32>
    %145 = vector.shape_cast %144 : vector<1xf32> to vector<1x1x1xf32>
    %146 = vector.extract %145[0, 0, 0] : f32 from vector<1x1x1xf32>
    %147 = vector.broadcast %146 : f32 to vector<1x1xf32>
    %148 = tpu.reciprocal %147 {approx = true} : vector<1x1xf32> -> vector<1x1xf32>
    %149 = vector.broadcast %148 : vector<1x1xf32> to vector<4x128xf32>
    %150 = arith.mulf %142, %149 : vector<4x128xf32>
    %c0_179 = arith.constant 0 : index
    %c0_180 = arith.constant 0 : index
    %151 = vector.load %arg14[%c0_179, %c0_180] : memref<4x128xf32, #tpu.memory_space<vmem>>, vector<4x128xf32>
    tpu.vector_store %arg14[%c0_179, %c0_180], %150 {strides = array<i32>} : memref<4x128xf32, #tpu.memory_space<vmem>>, vector<4x128xf32>,
    %c0_181 = arith.constant 0 : index
    %c0_182 = arith.constant 0 : index
    %152 = vector.load %arg9[%c0_181, %c0_182] : memref<64x64xf32, #tpu.memory_space<vmem>>, vector<64x64xf32>
    %c0_183 = arith.constant 0 : index
    %c0_184 = arith.constant 0 : index
    %153 = vector.load %arg10[%c0_183, %c0_184] : memref<64x64xf32, #tpu.memory_space<vmem>>, vector<64x64xf32>
    %c0_185 = arith.constant 0 : index
    %c0_186 = arith.constant 0 : index
    %154 = vector.load %arg11[%c0_185, %c0_186] : memref<1x64xf32, #tpu.memory_space<vmem>>, vector<1x64xf32>
    %c0_187 = arith.constant 0 : index
    %c0_188 = arith.constant 0 : index
    %155 = vector.load %arg12[%c0_187, %c0_188] : memref<64x1xf32, #tpu.memory_space<vmem>>, vector<64x1xf32>
    %c0_189 = arith.constant 0 : index
    %c0_190 = arith.constant 0 : index
    %156 = vector.load %arg13[%c0_189, %c0_190] : memref<1x1xf32, #tpu.memory_space<vmem>>, vector<1x1xf32>
    %157 = vector.extract_strided_slice %133 {offsets = [4, 0], sizes = [1, 64], strides = [1, 1]} : vector<8x128xf32> to vector<1x64xf32>
    %158 = vector.extract_strided_slice %133 {offsets = [5, 0], sizes = [1, 64], strides = [1, 1]} : vector<8x128xf32> to vector<1x64xf32>
    %cst_191 = arith.constant dense<0.000000e+00> : vector<1x64xf32>
    %159 = tpu.matmul %157, %152, %cst_191 {dimension_numbers = #tpu.dot_dimension_numbers<[1], [0], [0], [1], [0, 0, 1, 1], [], []>} : vector<1x64xf32>, vector<64x64xf32>, vector<1x64xf32> -> vector<1x64xf32>
    %cst_192 = arith.constant dense<0.000000e+00> : vector<1x64xf32>
    %160 = tpu.matmul %158, %153, %cst_192 {dimension_numbers = #tpu.dot_dimension_numbers<[1], [0], [0], [1], [0, 0, 1, 1], [], []>} : vector<1x64xf32>, vector<64x64xf32>, vector<1x64xf32> -> vector<1x64xf32>
    %161 = arith.addf %159, %160 : vector<1x64xf32>
    %162 = arith.addf %161, %154 : vector<1x64xf32>
    %cst_193 = arith.constant 0.000000e+00 : f32
    %163 = vector.broadcast %cst_193 : f32 to vector<1x64xf32>
    %164 = arith.maximumf %162, %163 : vector<1x64xf32>
    %cst_194 = arith.constant dense<0.000000e+00> : vector<1x1xf32>
    %165 = tpu.matmul %164, %155, %cst_194 {dimension_numbers = #tpu.dot_dimension_numbers<[1], [0], [0], [1], [0, 0, 1, 1], [], []>} : vector<1x64xf32>, vector<64x1xf32>, vector<1x1xf32> -> vector<1x1xf32>
    %166 = arith.addf %165, %156 : vector<1x1xf32>
    %167 = math.tanh %166 : vector<1x1xf32>
    %168 = vector.shape_cast %167 : vector<1x1xf32> to vector<1x1xf32>
    %169 = vector.broadcast %168 : vector<1x1xf32> to vector<1x128xf32>
    %c0_195 = arith.constant 0 : index
    %c0_196 = arith.constant 0 : index
    %170 = vector.load %arg15[%c0_195, %c0_196] : memref<2x128xf32, #tpu.memory_space<vmem>>, vector<1x128xf32>
    tpu.vector_store %arg15[%c0_195, %c0_196], %169 {strides = array<i32>} : memref<2x128xf32, #tpu.memory_space<vmem>>, vector<1x128xf32>,
    %171 = vector.extract_strided_slice %133 {offsets = [4, 64], sizes = [1, 64], strides = [1, 1]} : vector<8x128xf32> to vector<1x64xf32>
    %172 = vector.extract_strided_slice %133 {offsets = [5, 64], sizes = [1, 64], strides = [1, 1]} : vector<8x128xf32> to vector<1x64xf32>
    %cst_197 = arith.constant dense<0.000000e+00> : vector<1x64xf32>
    %173 = tpu.matmul %171, %152, %cst_197 {dimension_numbers = #tpu.dot_dimension_numbers<[1], [0], [0], [1], [0, 0, 1, 1], [], []>} : vector<1x64xf32>, vector<64x64xf32>, vector<1x64xf32> -> vector<1x64xf32>
    %cst_198 = arith.constant dense<0.000000e+00> : vector<1x64xf32>
    %174 = tpu.matmul %172, %153, %cst_198 {dimension_numbers = #tpu.dot_dimension_numbers<[1], [0], [0], [1], [0, 0, 1, 1], [], []>} : vector<1x64xf32>, vector<64x64xf32>, vector<1x64xf32> -> vector<1x64xf32>
    %175 = arith.addf %173, %174 : vector<1x64xf32>
    %176 = arith.addf %175, %154 : vector<1x64xf32>
    %cst_199 = arith.constant 0.000000e+00 : f32
    %177 = vector.broadcast %cst_199 : f32 to vector<1x64xf32>
    %178 = arith.maximumf %176, %177 : vector<1x64xf32>
    %cst_200 = arith.constant dense<0.000000e+00> : vector<1x1xf32>
    %179 = tpu.matmul %178, %155, %cst_200 {dimension_numbers = #tpu.dot_dimension_numbers<[1], [0], [0], [1], [0, 0, 1, 1], [], []>} : vector<1x64xf32>, vector<64x1xf32>, vector<1x1xf32> -> vector<1x1xf32>
    %180 = arith.addf %179, %156 : vector<1x1xf32>
    %181 = math.tanh %180 : vector<1x1xf32>
    %182 = vector.shape_cast %181 : vector<1x1xf32> to vector<1x1xf32>
    %183 = vector.broadcast %182 : vector<1x1xf32> to vector<1x128xf32>
    %c1_201 = arith.constant 1 : index
    %c0_202 = arith.constant 0 : index
    %184 = vector.load %arg15[%c1_201, %c0_202] : memref<2x128xf32, #tpu.memory_space<vmem>>, vector<1x128xf32>
    tpu.vector_store %arg15[%c1_201, %c0_202], %183 {strides = array<i32>} : memref<2x128xf32, #tpu.memory_space<vmem>>, vector<1x128xf32>,
    return
  }
}

</mosaic_0001>

<llo_original>
// kernel: policy_value_net_forward.1
$region0: #{policy_value_net_forward.1}
  #allocation0 [shape = 'u32[]', space=smem, size = 0x4, offset = 0x4, fixed_abs, tag = 'smem constant byte address 0x4 - core index']
  #allocation1 [shape = 'u32[144,128]{1,0:T(1,128)}', space=vmem, size = 0x12000, scoped, tag = 'internal scratch']
  #allocation2 [shape = 'f32[2,10,10,32]{3,2,1,0:T(8,128)}', space=vmem, size = 0x28000, scoped, tag = 'scratch operand']
  #allocation3 [shape = 'f32[2,10,10,64]{3,2,1,0:T(8,128)}', space=vmem, size = 0x28000, scoped, tag = 'scratch operand']
  #allocation4 [shape = 'f32[1,1]{1,0:T(1,128)S(1)}', space=vmem, size = 0x200, scoped, tag = 'scoped memory for policy_value_net_forward.1']
  %s0 = inlined_call_operand.vmem [shape: f32[128,36], index: 0, kind: input, shape index: {}]
  %s1 = inlined_call_operand.vmem [shape: f32[36,32], index: 1, kind: input, shape index: {}]
  %s2 = inlined_call_operand.vmem [shape: f32[1,32], index: 2, kind: input, shape index: {}]
  %s3 = inlined_call_operand.vmem [shape: f32[288,64], index: 3, kind: input, shape index: {}]
  %s4 = inlined_call_operand.vmem [shape: f32[1,64], index: 4, kind: input, shape index: {}]
  %s5 = inlined_call_operand.vmem [shape: f32[576,128], index: 5, kind: input, shape index: {}]
  %s6 = inlined_call_operand.vmem [shape: f32[1,128], index: 6, kind: input, shape index: {}]
  %s7 = inlined_call_operand.vmem [shape: f32[8,128], index: 7, kind: input, shape index: {}]
  %s8 = inlined_call_operand.vmem [shape: f32[8,1], index: 8, kind: input, shape index: {}]
  %s9 = inlined_call_operand.vmem [shape: f32[64,64], index: 9, kind: input, shape index: {}]
  %s10 = inlined_call_operand.vmem [shape: f32[64,64], index: 10, kind: input, shape index: {}]
  %s11 = inlined_call_operand.vmem [shape: f32[1,64], index: 11, kind: input, shape index: {}]
  %s12 = inlined_call_operand.vmem [shape: f32[64,1], index: 12, kind: input, shape index: {}]
  %s13 = inlined_call_operand.<no memory space> [shape: f32[1,1], index: 13, kind: input, shape index: {}]
  %s14 = inlined_call_operand.vmem [shape: f32[4,128], index: 14, kind: output, shape index: {0}]
  %s15 = inlined_call_operand.vmem [shape: f32[2,128], index: 15, kind: output, shape index: {1}]
  %16 = xla_tuple %s14, %s15
  %s17 = sld [smem:[#allocation0]]
  $region74: #{policy_value_net_forward.1} parent=0
    _
  %s19 = ssub.s32 1, %s17
  %s20 = scalar_select 0, %s19, %s17
  %v21 = vstv %s13
  %22 = vst [vmem:[#allocation4] sm:$0x1] %v21
  // Predicated region
  $region2: #{policy_value_net_forward.1} parent=0 // pred_check
    _
  $region3: #{policy_value_net_forward.1} parent=0 // pred_check_branch
    %24 = sbr.rel (0) target = $region5
  $region4: #{policy_value_net_forward.1} parent=0 // pred_region
    _
  $region5: #{policy_value_net_forward.1} parent=0 // pred_fallthru
    _
  // Predicated region
  $region6: #{policy_value_net_forward.1} parent=0 // pred_check
    _
  $region7: #{policy_value_net_forward.1} parent=0 // pred_check_branch
    %26 = sbr.rel (0) target = $region9
  $region8: #{policy_value_net_forward.1} parent=0 // pred_region
    _
  $region9: #{policy_value_net_forward.1} parent=0 // pred_fallthru
    _
  // Predicated region
  $region10: #{policy_value_net_forward.1} parent=0 // pred_check
    _
  $region11: #{policy_value_net_forward.1} parent=0 // pred_check_branch
    %28 = sbr.rel (0) target = $region13
  $region12: #{policy_value_net_forward.1} parent=0 // pred_region
    _
  $region13: #{policy_value_net_forward.1} parent=0 // pred_fallthru
    _
  // Predicated region
  $region14: #{policy_value_net_forward.1} parent=0 // pred_check
    _
  $region15: #{policy_value_net_forward.1} parent=0 // pred_check_branch
    %30 = sbr.rel (0) target = $region17
  $region16: #{policy_value_net_forward.1} parent=0 // pred_region
    _
  $region17: #{policy_value_net_forward.1} parent=0 // pred_fallthru
    _
  // Predicated region
  $region18: #{policy_value_net_forward.1} parent=0 // pred_check
    _
  $region19: #{policy_value_net_forward.1} parent=0 // pred_check_branch
    %32 = sbr.rel (0) target = $region21
  $region20: #{policy_value_net_forward.1} parent=0 // pred_region
    _
  $region21: #{policy_value_net_forward.1} parent=0 // pred_fallthru
    _
  // Predicated region
  $region22: #{policy_value_net_forward.1} parent=0 // pred_check
    _
  $region23: #{policy_value_net_forward.1} parent=0 // pred_check_branch
    %34 = sbr.rel (0) target = $region25
  $region24: #{policy_value_net_forward.1} parent=0 // pred_region
    _
  $region25: #{policy_value_net_forward.1} parent=0 // pred_fallthru
    _
  // Predicated region
  $region26: #{policy_value_net_forward.1} parent=0 // pred_check
    _
  $region27: #{policy_value_net_forward.1} parent=0 // pred_check_branch
    %36 = sbr.rel (0) target = $region29
  $region28: #{policy_value_net_forward.1} parent=0 // pred_region
    _
  $region29: #{policy_value_net_forward.1} parent=0 // pred_fallthru
    _
  // Predicated region
  $region30: #{policy_value_net_forward.1} parent=0 // pred_check
    _
  $region31: #{policy_value_net_forward.1} parent=0 // pred_check_branch
    %38 = sbr.rel (0) target = $region33
  $region32: #{policy_value_net_forward.1} parent=0 // pred_region
    _
  $region33: #{policy_value_net_forward.1} parent=0 // pred_fallthru
    _
  // Predicated region
  $region34: #{policy_value_net_forward.1} parent=0 // pred_check
    _
  $region35: #{policy_value_net_forward.1} parent=0 // pred_check_branch
    %40 = sbr.rel (0) target = $region37
  $region36: #{policy_value_net_forward.1} parent=0 // pred_region
    _
  $region37: #{policy_value_net_forward.1} parent=0 // pred_fallthru
    _
  // Predicated region
  $region38: #{policy_value_net_forward.1} parent=0 // pred_check
    _
  $region39: #{policy_value_net_forward.1} parent=0 // pred_check_branch
    %42 = sbr.rel (0) target = $region41
  $region40: #{policy_value_net_forward.1} parent=0 // pred_region
    _
  $region41: #{policy_value_net_forward.1} parent=0 // pred_fallthru
    _
  // Predicated region
  $region42: #{policy_value_net_forward.1} parent=0 // pred_check
    _
  $region43: #{policy_value_net_forward.1} parent=0 // pred_check_branch
    %44 = sbr.rel (0) target = $region45
  $region44: #{policy_value_net_forward.1} parent=0 // pred_region
    _
  $region45: #{policy_value_net_forward.1} parent=0 // pred_fallthru
    _
  // Predicated region
  $region46: #{policy_value_net_forward.1} parent=0 // pred_check
    _
  $region47: #{policy_value_net_forward.1} parent=0 // pred_check_branch
    %46 = sbr.rel (0) target = $region49
  $region48: #{policy_value_net_forward.1} parent=0 // pred_region
    _
  $region49: #{policy_value_net_forward.1} parent=0 // pred_fallthru
    _
  // Predicated region
  $region50: #{policy_value_net_forward.1} parent=0 // pred_check
    _
  $region51: #{policy_value_net_forward.1} parent=0 // pred_check_branch
    %48 = sbr.rel (0) target = $region53
  $region52: #{policy_value_net_forward.1} parent=0 // pred_region
    _
  $region53: #{policy_value_net_forward.1} parent=0 // pred_fallthru
    _
  // Predicated region
  $region54: #{policy_value_net_forward.1} parent=0 // pred_check
    _
  $region55: #{policy_value_net_forward.1} parent=0 // pred_check_branch
    %50 = sbr.rel (0) target = $region57
  $region56: #{policy_value_net_forward.1} parent=0 // pred_region
    _
  $region57: #{policy_value_net_forward.1} parent=0 // pred_fallthru
    _
  %v51 = vld [vmem:[%s0] sm:$0xff]
  %v52 = vld [vmem:[%s0 + $0x8] sm:$0xff]
  %v53 = vld [vmem:[%s0 + $0x10] sm:$0xff]
  %v54 = vld [vmem:[%s0 + $0x18] sm:$0xff]
  %v55 = vld [vmem:[%s0 + $0x20] sm:$0xff]
  %v56 = vld [vmem:[%s0 + $0x28] sm:$0xff]
  %v57 = vld [vmem:[%s0 + $0x30] sm:$0xff]
  %v58 = vld [vmem:[%s0 + $0x38] sm:$0xff]
  %v59 = vld [vmem:[%s0 + $0x40] sm:$0xff]
  %v60 = vld [vmem:[%s0 + $0x48] sm:$0xff]
  %v61 = vld [vmem:[%s0 + $0x50] sm:$0xff]
  %v62 = vld [vmem:[%s0 + $0x58] sm:$0xff]
  %v63 = vld [vmem:[%s0 + $0x60] sm:$0xff]
  %v64 = vld [vmem:[%s0 + $0x68] sm:$0xff]
  %v65 = vld [vmem:[%s0 + $0x70] sm:$0xff]
  %v66 = vld [vmem:[%s0 + $0x78] sm:$0xff]
  %v67 = vld [vmem:[%s1] sm:$0xff]
  %v68 = vld [vmem:[%s1 + $0x8] sm:$0xff]
  %v69 = vld [vmem:[%s1 + $0x10] sm:$0xff]
  %v70 = vld [vmem:[%s1 + $0x18] sm:$0xff]
  %v71 = vld [vmem:[%s1 + $0x20] sm:$0xf]
  %v72 = vld [vmem:[%s2] sm:$0x1]
  %v74 = vlaneseq
  %v75 = vshrl.u32 %v74, 7
  %v76 = vsub.s32 0, %v75
  %v77 = vrot.slane %v72, %v76
  %vm79 = vcmask 293888
  %v81 = vsel %vm79, %v51, 0
  %v84 = vsel %vm79, %v52, 0
  %v87 = vsel %vm79, %v53, 0
  %v90 = vsel %vm79, %v54, 0
  %v93 = vsel %vm79, %v55, 0
  %v96 = vsel %vm79, %v56, 0
  %v99 = vsel %vm79, %v57, 0
  %v102 = vsel %vm79, %v58, 0
  %v105 = vsel %vm79, %v59, 0
  %v108 = vsel %vm79, %v60, 0
  %v111 = vsel %vm79, %v61, 0
  %v114 = vsel %vm79, %v62, 0
  %v117 = vsel %vm79, %v63, 0
  %v120 = vsel %vm79, %v64, 0
  %v123 = vsel %vm79, %v65, 0
  %v126 = vsel %vm79, %v66, 0
  %vm128 = vcmask 1043456
  %v130 = vsel %vm128, %v71, 0
  %132 = vmatprep.subr.mxu0 0.0
  %133 = vmatpush1.msra.mxu0 0.0
  %134 = vmatprep.subr.mxu0 0.0
  %135 = vmatpush1.msra.mxu0 0.0
  %136 = vmatprep.subr.mxu0 0.0
  %137 = vmatpush1.msra.mxu0 0.0
  %138 = vmatprep.subr.mxu0 0.0
  %139 = vmatpush1.msra.mxu0 0.0
  %140 = vmatprep.subr.mxu0 0.0
  %141 = vmatpush1.msra.mxu0 0.0
  %142 = vmatprep.subr.mxu0 0.0
  %143 = vmatpush1.msra.mxu0 0.0
  %144 = vmatprep.subr.mxu0 0.0
  %145 = vmatpush1.msra.mxu0 0.0
  %146 = vmatprep.subr.mxu0 0.0
  %147 = vmatpush1.msra.mxu0 0.0
  %148 = vmatprep.subr.mxu0 0.0
  %149 = vmatpush1.msra.mxu0 0.0
  %150 = vmatprep.subr.mxu0 0.0
  %151 = vmatpush1.msra.mxu0 0.0
  %152 = vmatprep.subr.mxu0 0.0
  %153 = vmatpush1.msra.mxu0 0.0
  %154 = vmatprep.subr.mxu0 0.0
  %155 = vmatpush1.msra.mxu0 %v130
  %156 = vmatprep.subr.mxu0 0.0
  %157 = vmatpush1.msra.mxu0 %v70
  %158 = vmatprep.subr.mxu0 0.0
  %159 = vmatpush1.msra.mxu0 %v69
  %160 = vmatprep.subr.mxu0 0.0
  %161 = vmatpush1.msra.mxu0 %v68
  %162 = vmatprep.subr.mxu0 0.0
  %163 = vmatpush1.msra.mxu0 %v67
  %164 = vmatprep.subr.mxu0 0.0
  %165 = vmatpush2.msra.mxu0 0.0
  %166 = vmatprep.subr.mxu0 0.0
  %167 = vmatpush2.msra.mxu0 0.0
  %168 = vmatprep.subr.mxu0 0.0
  %169 = vmatpush2.msra.mxu0 0.0
  %170 = vmatprep.subr.mxu0 0.0
  %171 = vmatpush2.msra.mxu0 0.0
  %172 = vmatprep.subr.mxu0 0.0
  %173 = vmatpush2.msra.mxu0 0.0
  %174 = vmatprep.subr.mxu0 0.0
  %175 = vmatpush2.msra.mxu0 0.0
  %176 = vmatprep.subr.mxu0 0.0
  %177 = vmatpush2.msra.mxu0 0.0
  %178 = vmatprep.subr.mxu0 0.0
  %179 = vmatpush2.msra.mxu0 0.0
  %180 = vmatprep.subr.mxu0 0.0
  %181 = vmatpush2.msra.mxu0 0.0
  %182 = vmatprep.subr.mxu0 0.0
  %183 = vmatpush2.msra.mxu0 0.0
  %184 = vmatprep.subr.mxu0 0.0
  %185 = vmatpush2.msra.mxu0 0.0
  %186 = vmatprep.subr.mxu0 0.0
  %187 = vmatpush2.msra.mxu0 0.0
  %188 = vmatprep.subr.mxu0 0.0
  %189 = vmatpush2.msra.mxu0 0.0
  %190 = vmatprep.subr.mxu0 0.0
  %191 = vmatpush2.msra.mxu0 0.0
  %192 = vmatprep.subr.mxu0 0.0
  %193 = vmatpush2.msra.mxu0 0.0
  %194 = vmatprep.subr.mxu0 0.0
  %195 = vmatpush2.msra.mxu0 0.0
  %196 = vmatprep.mubr.f32.mxu0 0.0
  %197 = vmatmul.mubr.f32.gmra.mxu0 %v81
  %v198 = vpop.f32.mrf.mxu0
  %v199 = vadd.f32 %v77, %v198
  %v200 = vpop.f32.mrf.mxu0
  %201 = vmatprep.mubr.f32.mxu0 0.0
  %202 = vmatmul.mubr.f32.gmra.mxu0 %v84
  %v203 = vpop.f32.mrf.mxu0
  %v204 = vadd.f32 %v77, %v203
  %v205 = vpop.f32.mrf.mxu0
  %206 = vmatprep.mubr.f32.mxu0 0.0
  %207 = vmatmul.mubr.f32.gmra.mxu0 %v87
  %v208 = vpop.f32.mrf.mxu0
  %v209 = vadd.f32 %v77, %v208
  %v210 = vpop.f32.mrf.mxu0
  %211 = vmatprep.mubr.f32.mxu0 0.0
  %212 = vmatmul.mubr.f32.gmra.mxu0 %v90
  %v213 = vpop.f32.mrf.mxu0
  %v214 = vadd.f32 %v77, %v213
  %v215 = vpop.f32.mrf.mxu0
  %216 = vmatprep.mubr.f32.mxu0 0.0
  %217 = vmatmul.mubr.f32.gmra.mxu0 %v93
  %v218 = vpop.f32.mrf.mxu0
  %v219 = vadd.f32 %v77, %v218
  %v220 = vpop.f32.mrf.mxu0
  %221 = vmatprep.mubr.f32.mxu0 0.0
  %222 = vmatmul.mubr.f32.gmra.mxu0 %v96
  %v223 = vpop.f32.mrf.mxu0
  %v224 = vadd.f32 %v77, %v223
  %v225 = vpop.f32.mrf.mxu0
  %226 = vmatprep.mubr.f32.mxu0 0.0
  %227 = vmatmul.mubr.f32.gmra.mxu0 %v99
  %v228 = vpop.f32.mrf.mxu0
  %v229 = vadd.f32 %v77, %v228
  %v230 = vpop.f32.mrf.mxu0
  %231 = vmatprep.mubr.f32.mxu0 0.0
  %232 = vmatmul.mubr.f32.gmra.mxu0 %v102
  %v233 = vpop.f32.mrf.mxu0
  %v234 = vadd.f32 %v77, %v233
  %v235 = vpop.f32.mrf.mxu0
  %236 = vmatprep.mubr.f32.mxu0 0.0
  %237 = vmatmul.mubr.f32.gmra.mxu0 %v105
  %v238 = vpop.f32.mrf.mxu0
  %v239 = vadd.f32 %v77, %v238
  %v240 = vpop.f32.mrf.mxu0
  %241 = vmatprep.mubr.f32.mxu0 0.0
  %242 = vmatmul.mubr.f32.gmra.mxu0 %v108
  %v243 = vpop.f32.mrf.mxu0
  %v244 = vadd.f32 %v77, %v243
  %v245 = vpop.f32.mrf.mxu0
  %246 = vmatprep.mubr.f32.mxu0 0.0
  %247 = vmatmul.mubr.f32.gmra.mxu0 %v111
  %v248 = vpop.f32.mrf.mxu0
  %v249 = vadd.f32 %v77, %v248
  %v250 = vpop.f32.mrf.mxu0
  %251 = vmatprep.mubr.f32.mxu0 0.0
  %252 = vmatmul.mubr.f32.gmra.mxu0 %v114
  %v253 = vpop.f32.mrf.mxu0
  %v254 = vadd.f32 %v77, %v253
  %v255 = vpop.f32.mrf.mxu0
  %256 = vmatprep.mubr.f32.mxu0 0.0
  %257 = vmatmul.mubr.f32.gmra.mxu0 %v117
  %v258 = vpop.f32.mrf.mxu0
  %v259 = vadd.f32 %v77, %v258
  %v260 = vpop.f32.mrf.mxu0
  %261 = vmatprep.mubr.f32.mxu0 0.0
  %262 = vmatmul.mubr.f32.gmra.mxu0 %v120
  %v263 = vpop.f32.mrf.mxu0
  %v264 = vadd.f32 %v77, %v263
  %v265 = vpop.f32.mrf.mxu0
  %266 = vmatprep.mubr.f32.mxu0 0.0
  %267 = vmatmul.mubr.f32.gmra.mxu0 %v123
  %v268 = vpop.f32.mrf.mxu0
  %v269 = vadd.f32 %v77, %v268
  %v270 = vpop.f32.mrf.mxu0
  %271 = vmatprep.mubr.f32.mxu0 0.0
  %272 = vmatmul.mubr.f32.gmra.mxu0 %v126
  %v273 = vpop.f32.mrf.mxu0
  %v274 = vadd.f32 %v77, %v273
  %v275 = vpop.f32.mrf.mxu0
  %276 = vdwg.mxu0
  %v277 = vmax.f32 %v199, 0.0
  %v278 = vmax.f32 %v204, 0.0
  %v279 = vmax.f32 %v209, 0.0
  %v280 = vmax.f32 %v214, 0.0
  %v281 = vmax.f32 %v219, 0.0
  %v282 = vmax.f32 %v224, 0.0
  %v283 = vmax.f32 %v229, 0.0
  %v284 = vmax.f32 %v234, 0.0
  %v285 = vmax.f32 %v239, 0.0
  %v286 = vmax.f32 %v244, 0.0
  %v287 = vmax.f32 %v249, 0.0
  %v288 = vmax.f32 %v254, 0.0
  %v289 = vmax.f32 %v259, 0.0
  %v290 = vmax.f32 %v264, 0.0
  %v291 = vmax.f32 %v269, 0.0
  %v292 = vmax.f32 %v274, 0.0
  %vm293 = vcmask 261120
  %294 = vst.msk [vmem:[#allocation2] sm:$0xff] %vm293, 0.0
  %vm295 = vcmask 254976
  %296 = vst.msk [vmem:[#allocation2 + $0x8] sm:$0x3] %vm295, 0.0
  %297 = vst.msk [vmem:[#allocation2 + $0xa0] sm:$0xff] %vm293, 0.0
  %298 = vst.msk [vmem:[#allocation2 + $0xa8] sm:$0x3] %vm295, 0.0
  %s299 = scalar_lea.vmem [#allocation2], 144
  %300 = vst.msk [vmem:[%s299] sm:$0xff] %vm293, 0.0
  %301 = vst.msk [vmem:[%s299 + $0x8] sm:$0x3] %vm295, 0.0
  %302 = vst.msk [vmem:[%s299 + $0xa0] sm:$0xff] %vm293, 0.0
  %303 = vst.msk [vmem:[%s299 + $0xa8] sm:$0x3] %vm295, 0.0
  %s304 = scalar_lea.vmem [#allocation2], 16
  %vm305 = vcmask 253952
  %306 = vst.msk [vmem:[%s304] sm:$0x1] %vm305, 0.0
  %307 = vst.msk [vmem:[%s304 + $0x10] sm:$0x1] %vm305, 0.0
  %308 = vst.msk [vmem:[%s304 + $0x20] sm:$0x1] %vm305, 0.0
  %309 = vst.msk [vmem:[%s304 + $0x30] sm:$0x1] %vm305, 0.0
  %310 = vst.msk [vmem:[%s304 + $0x40] sm:$0x1] %vm305, 0.0
  %311 = vst.msk [vmem:[%s304 + $0x50] sm:$0x1] %vm305, 0.0
  %312 = vst.msk [vmem:[%s304 + $0x60] sm:$0x1] %vm305, 0.0
  %313 = vst.msk [vmem:[%s304 + $0x70] sm:$0x1] %vm305, 0.0
  %314 = vst.msk [vmem:[%s304 + $0xa0] sm:$0x1] %vm305, 0.0
  %315 = vst.msk [vmem:[%s304 + $0xb0] sm:$0x1] %vm305, 0.0
  %316 = vst.msk [vmem:[%s304 + $0xc0] sm:$0x1] %vm305, 0.0
  %317 = vst.msk [vmem:[%s304 + $0xd0] sm:$0x1] %vm305, 0.0
  %318 = vst.msk [vmem:[%s304 + $0xe0] sm:$0x1] %vm305, 0.0
  %319 = vst.msk [vmem:[%s304 + $0xf0] sm:$0x1] %vm305, 0.0
  %320 = vst.msk [vmem:[%s304 + $0x100] sm:$0x1] %vm305, 0.0
  %321 = vst.msk [vmem:[%s304 + $0x110] sm:$0x1] %vm305, 0.0
  %322 = vst.msk [vmem:[%s304 + $0x9] sm:$0x1] %vm305, 0.0
  %323 = vst.msk [vmem:[%s304 + $0x19] sm:$0x1] %vm305, 0.0
  %324 = vst.msk [vmem:[%s304 + $0x29] sm:$0x1] %vm305, 0.0
  %325 = vst.msk [vmem:[%s304 + $0x39] sm:$0x1] %vm305, 0.0
  %326 = vst.msk [vmem:[%s304 + $0x49] sm:$0x1] %vm305, 0.0
  %327 = vst.msk [vmem:[%s304 + $0x59] sm:$0x1] %vm305, 0.0
  %328 = vst.msk [vmem:[%s304 + $0x69] sm:$0x1] %vm305, 0.0
  %329 = vst.msk [vmem:[%s304 + $0x79] sm:$0x1] %vm305, 0.0
  %330 = vst.msk [vmem:[%s304 + $0xa9] sm:$0x1] %vm305, 0.0
  %331 = vst.msk [vmem:[%s304 + $0xb9] sm:$0x1] %vm305, 0.0
  %332 = vst.msk [vmem:[%s304 + $0xc9] sm:$0x1] %vm305, 0.0
  %333 = vst.msk [vmem:[%s304 + $0xd9] sm:$0x1] %vm305, 0.0
  %334 = vst.msk [vmem:[%s304 + $0xe9] sm:$0x1] %vm305, 0.0
  %335 = vst.msk [vmem:[%s304 + $0xf9] sm:$0x1] %vm305, 0.0
  %336 = vst.msk [vmem:[%s304 + $0x109] sm:$0x1] %vm305, 0.0
  %337 = vst.msk [vmem:[%s304 + $0x119] sm:$0x1] %vm305, 0.0
  %338 = vst.msk [vmem:[%s304 + $0x1] sm:$0xff] %vm293, %v277
  %339 = vst.msk [vmem:[%s304 + $0x11] sm:$0xff] %vm293, %v278
  %340 = vst.msk [vmem:[%s304 + $0x21] sm:$0xff] %vm293, %v279
  %341 = vst.msk [vmem:[%s304 + $0x31] sm:$0xff] %vm293, %v280
  %342 = vst.msk [vmem:[%s304 + $0x41] sm:$0xff] %vm293, %v281
  %343 = vst.msk [vmem:[%s304 + $0x51] sm:$0xff] %vm293, %v282
  %344 = vst.msk [vmem:[%s304 + $0x61] sm:$0xff] %vm293, %v283
  %345 = vst.msk [vmem:[%s304 + $0x71] sm:$0xff] %vm293, %v284
  %346 = vst.msk [vmem:[%s304 + $0xa1] sm:$0xff] %vm293, %v285
  %347 = vst.msk [vmem:[%s304 + $0xb1] sm:$0xff] %vm293, %v286
  %348 = vst.msk [vmem:[%s304 + $0xc1] sm:$0xff] %vm293, %v287
  %349 = vst.msk [vmem:[%s304 + $0xd1] sm:$0xff] %vm293, %v288
  %350 = vst.msk [vmem:[%s304 + $0xe1] sm:$0xff] %vm293, %v289
  %351 = vst.msk [vmem:[%s304 + $0xf1] sm:$0xff] %vm293, %v290
  %352 = vst.msk [vmem:[%s304 + $0x101] sm:$0xff] %vm293, %v291
  %353 = vst.msk [vmem:[%s304 + $0x111] sm:$0xff] %vm293, %v292
  %v354 = vld [vmem:[#allocation2] sm:$0xff]
  %v355 = vld [vmem:[#allocation2 + $0x10] sm:$0xff]
  %v356 = vld [vmem:[#allocation2 + $0x20] sm:$0xff]
  %v357 = vld [vmem:[#allocation2 + $0x30] sm:$0xff]
  %v358 = vld [vmem:[#allocation2 + $0x40] sm:$0xff]
  %v359 = vld [vmem:[#allocation2 + $0x50] sm:$0xff]
  %v360 = vld [vmem:[#allocation2 + $0x60] sm:$0xff]
  %v361 = vld [vmem:[#allocation2 + $0x70] sm:$0xff]
  %v362 = vld [vmem:[#allocation2 + $0xa0] sm:$0xff]
  %v363 = vld [vmem:[#allocation2 + $0xb0] sm:$0xff]
  %v364 = vld [vmem:[#allocation2 + $0xc0] sm:$0xff]
  %v365 = vld [vmem:[#allocation2 + $0xd0] sm:$0xff]
  %v366 = vld [vmem:[#allocation2 + $0xe0] sm:$0xff]
  %v367 = vld [vmem:[#allocation2 + $0xf0] sm:$0xff]
  %v368 = vld [vmem:[#allocation2 + $0x100] sm:$0xff]
  %v369 = vld [vmem:[#allocation2 + $0x110] sm:$0xff]
  %v370 = vld [vmem:[%s3] sm:$0xff]
  %v371 = vld [vmem:[%s3 + $0x8] sm:$0xff]
  %v372 = vld [vmem:[%s3 + $0x10] sm:$0xff]
  %v373 = vld [vmem:[%s3 + $0x18] sm:$0xff]
  %v374 = vld [vmem:[#allocation2 + $0x1] sm:$0xff]
  %v375 = vld [vmem:[#allocation2 + $0x11] sm:$0xff]
  %v376 = vld [vmem:[#allocation2 + $0x21] sm:$0xff]
  %v377 = vld [vmem:[#allocation2 + $0x31] sm:$0xff]
  %v378 = vld [vmem:[#allocation2 + $0x41] sm:$0xff]
  %v379 = vld [vmem:[#allocation2 + $0x51] sm:$0xff]
  %v380 = vld [vmem:[#allocation2 + $0x61] sm:$0xff]
  %v381 = vld [vmem:[#allocation2 + $0x71] sm:$0xff]
  %v382 = vld [vmem:[#allocation2 + $0xa1] sm:$0xff]
  %v383 = vld [vmem:[#allocation2 + $0xb1] sm:$0xff]
  %v384 = vld [vmem:[#allocation2 + $0xc1] sm:$0xff]
  %v385 = vld [vmem:[#allocation2 + $0xd1] sm:$0xff]
  %v386 = vld [vmem:[#allocation2 + $0xe1] sm:$0xff]
  %v387 = vld [vmem:[#allocation2 + $0xf1] sm:$0xff]
  %v388 = vld [vmem:[#allocation2 + $0x101] sm:$0xff]
  %v389 = vld [vmem:[#allocation2 + $0x111] sm:$0xff]
  %v390 = vld [vmem:[%s3 + $0x20] sm:$0xff]
  %v391 = vld [vmem:[%s3 + $0x28] sm:$0xff]
  %v392 = vld [vmem:[%s3 + $0x30] sm:$0xff]
  %v393 = vld [vmem:[%s3 + $0x38] sm:$0xff]
  %v395 = vsel %vm293, %v374, 0
  %v398 = vsel %vm293, %v375, 0
  %v401 = vsel %vm293, %v376, 0
  %v404 = vsel %vm293, %v377, 0
  %v407 = vsel %vm293, %v378, 0
  %v410 = vsel %vm293, %v379, 0
  %v413 = vsel %vm293, %v380, 0
  %v416 = vsel %vm293, %v381, 0
  %v419 = vsel %vm293, %v382, 0
  %v422 = vsel %vm293, %v383, 0
  %v425 = vsel %vm293, %v384, 0
  %v428 = vsel %vm293, %v385, 0
  %v431 = vsel %vm293, %v386, 0
  %v434 = vsel %vm293, %v387, 0
  %v437 = vsel %vm293, %v388, 0
  %v440 = vsel %vm293, %v389, 0
  %442 = vmatprep.subr.mxu0 0.0
  %443 = vmatpush1.msra.mxu0 0.0
  %444 = vmatprep.subr.mxu0 0.0
  %445 = vmatpush1.msra.mxu0 0.0
  %446 = vmatprep.subr.mxu0 0.0
  %447 = vmatpush1.msra.mxu0 0.0
  %448 = vmatprep.subr.mxu0 0.0
  %449 = vmatpush1.msra.mxu0 0.0
  %450 = vmatprep.subr.mxu0 0.0
  %451 = vmatpush1.msra.mxu0 0.0
  %452 = vmatprep.subr.mxu0 0.0
  %453 = vmatpush1.msra.mxu0 0.0
  %454 = vmatprep.subr.mxu0 0.0
  %455 = vmatpush1.msra.mxu0 0.0
  %456 = vmatprep.subr.mxu0 0.0
  %457 = vmatpush1.msra.mxu0 0.0
  %458 = vmatprep.subr.mxu0 0.0
  %459 = vmatpush1.msra.mxu0 0.0
  %460 = vmatprep.subr.mxu0 0.0
  %461 = vmatpush1.msra.mxu0 0.0
  %462 = vmatprep.subr.mxu0 0.0
  %463 = vmatpush1.msra.mxu0 0.0
  %464 = vmatprep.subr.mxu0 0.0
  %465 = vmatpush1.msra.mxu0 0.0
  %466 = vmatprep.subr.mxu0 0.0
  %467 = vmatpush1.msra.mxu0 %v393
  %468 = vmatprep.subr.mxu0 0.0
  %469 = vmatpush1.msra.mxu0 %v392
  %470 = vmatprep.subr.mxu0 0.0
  %471 = vmatpush1.msra.mxu0 %v391
  %472 = vmatprep.subr.mxu0 0.0
  %473 = vmatpush1.msra.mxu0 %v390
  %474 = vmatprep.subr.mxu0 0.0
  %475 = vmatpush2.msra.mxu0 0.0
  %476 = vmatprep.subr.mxu0 0.0
  %477 = vmatpush2.msra.mxu0 0.0
  %478 = vmatprep.subr.mxu0 0.0
  %479 = vmatpush2.msra.mxu0 0.0
  %480 = vmatprep.subr.mxu0 0.0
  %481 = vmatpush2.msra.mxu0 0.0
  %482 = vmatprep.subr.mxu0 0.0
  %483 = vmatpush2.msra.mxu0 0.0
  %484 = vmatprep.subr.mxu0 0.0
  %485 = vmatpush2.msra.mxu0 0.0
  %486 = vmatprep.subr.mxu0 0.0
  %487 = vmatpush2.msra.mxu0 0.0
  %488 = vmatprep.subr.mxu0 0.0
  %489 = vmatpush2.msra.mxu0 0.0
  %490 = vmatprep.subr.mxu0 0.0
  %491 = vmatpush2.msra.mxu0 0.0
  %492 = vmatprep.subr.mxu0 0.0
  %493 = vmatpush2.msra.mxu0 0.0
  %494 = vmatprep.subr.mxu0 0.0
  %495 = vmatpush2.msra.mxu0 0.0
  %496 = vmatprep.subr.mxu0 0.0
  %497 = vmatpush2.msra.mxu0 0.0
  %498 = vmatprep.subr.mxu0 0.0
  %499 = vmatpush2.msra.mxu0 0.0
  %500 = vmatprep.subr.mxu0 0.0
  %501 = vmatpush2.msra.mxu0 0.0
  %502 = vmatprep.subr.mxu0 0.0
  %503 = vmatpush2.msra.mxu0 0.0
  %504 = vmatprep.subr.mxu0 0.0
  %505 = vmatpush2.msra.mxu0 0.0
  %506 = vmatprep.mubr.f32.mxu0 0.0
  %507 = vmatmul.mubr.f32.gmra.mxu0 %v395
  %v508 = vpop.f32.mrf.mxu0
  %v509 = vadd.f32 0.0, %v508
  %v510 = vpop.f32.mrf.mxu0
  %511 = vmatprep.mubr.f32.mxu0 0.0
  %512 = vmatmul.mubr.f32.gmra.mxu0 %v398
  %v513 = vpop.f32.mrf.mxu0
  %v514 = vadd.f32 0.0, %v513
  %v515 = vpop.f32.mrf.mxu0
  %516 = vmatprep.mubr.f32.mxu0 0.0
  %517 = vmatmul.mubr.f32.gmra.mxu0 %v401
  %v518 = vpop.f32.mrf.mxu0
  %v519 = vadd.f32 0.0, %v518
  %v520 = vpop.f32.mrf.mxu0
  %521 = vmatprep.mubr.f32.mxu0 0.0
  %522 = vmatmul.mubr.f32.gmra.mxu0 %v404
  %v523 = vpop.f32.mrf.mxu0
  %v524 = vadd.f32 0.0, %v523
  %v525 = vpop.f32.mrf.mxu0
  %526 = vmatprep.mubr.f32.mxu0 0.0
  %527 = vmatmul.mubr.f32.gmra.mxu0 %v407
  %v528 = vpop.f32.mrf.mxu0
  %v529 = vadd.f32 0.0, %v528
  %v530 = vpop.f32.mrf.mxu0
  %531 = vmatprep.mubr.f32.mxu0 0.0
  %532 = vmatmul.mubr.f32.gmra.mxu0 %v410
  %v533 = vpop.f32.mrf.mxu0
  %v534 = vadd.f32 0.0, %v533
  %v535 = vpop.f32.mrf.mxu0
  %536 = vmatprep.mubr.f32.mxu0 0.0
  %537 = vmatmul.mubr.f32.gmra.mxu0 %v413
  %v538 = vpop.f32.mrf.mxu0
  %v539 = vadd.f32 0.0, %v538
  %v540 = vpop.f32.mrf.mxu0
  %541 = vmatprep.mubr.f32.mxu0 0.0
  %542 = vmatmul.mubr.f32.gmra.mxu0 %v416
  %v543 = vpop.f32.mrf.mxu0
  %v544 = vadd.f32 0.0, %v543
  %v545 = vpop.f32.mrf.mxu0
  %546 = vmatprep.mubr.f32.mxu0 0.0
  %547 = vmatmul.mubr.f32.gmra.mxu0 %v419
  %v548 = vpop.f32.mrf.mxu0
  %v549 = vadd.f32 0.0, %v548
  %v550 = vpop.f32.mrf.mxu0
  %551 = vmatprep.mubr.f32.mxu0 0.0
  %552 = vmatmul.mubr.f32.gmra.mxu0 %v422
  %v553 = vpop.f32.mrf.mxu0
  %v554 = vadd.f32 0.0, %v553
  %v555 = vpop.f32.mrf.mxu0
  %556 = vmatprep.mubr.f32.mxu0 0.0
  %557 = vmatmul.mubr.f32.gmra.mxu0 %v425
  %v558 = vpop.f32.mrf.mxu0
  %v559 = vadd.f32 0.0, %v558
  %v560 = vpop.f32.mrf.mxu0
  %561 = vmatprep.mubr.f32.mxu0 0.0
  %562 = vmatmul.mubr.f32.gmra.mxu0 %v428
  %v563 = vpop.f32.mrf.mxu0
  %v564 = vadd.f32 0.0, %v563
  %v565 = vpop.f32.mrf.mxu0
  %566 = vmatprep.mubr.f32.mxu0 0.0
  %567 = vmatmul.mubr.f32.gmra.mxu0 %v431
  %v568 = vpop.f32.mrf.mxu0
  %v569 = vadd.f32 0.0, %v568
  %v570 = vpop.f32.mrf.mxu0
  %571 = vmatprep.mubr.f32.mxu0 0.0
  %572 = vmatmul.mubr.f32.gmra.mxu0 %v434
  %v573 = vpop.f32.mrf.mxu0
  %v574 = vadd.f32 0.0, %v573
  %v575 = vpop.f32.mrf.mxu0
  %576 = vmatprep.mubr.f32.mxu0 0.0
  %577 = vmatmul.mubr.f32.gmra.mxu0 %v437
  %v578 = vpop.f32.mrf.mxu0
  %v579 = vadd.f32 0.0, %v578
  %v580 = vpop.f32.mrf.mxu0
  %581 = vmatprep.mubr.f32.mxu0 0.0
  %582 = vmatmul.mubr.f32.gmra.mxu0 %v440
  %v583 = vpop.f32.mrf.mxu0
  %v584 = vadd.f32 0.0, %v583
  %v585 = vpop.f32.mrf.mxu0
  %586 = vdwg.mxu0
  %v588 = vsel %vm293, %v354, 0
  %v591 = vsel %vm293, %v355, 0
  %v594 = vsel %vm293, %v356, 0
  %v597 = vsel %vm293, %v357, 0
  %v600 = vsel %vm293, %v358, 0
  %v603 = vsel %vm293, %v359, 0
  %v606 = vsel %vm293, %v360, 0
  %v609 = vsel %vm293, %v361, 0
  %v612 = vsel %vm293, %v362, 0
  %v615 = vsel %vm293, %v363, 0
  %v618 = vsel %vm293, %v364, 0
  %v621 = vsel %vm293, %v365, 0
  %v624 = vsel %vm293, %v366, 0
  %v627 = vsel %vm293, %v367, 0
  %v630 = vsel %vm293, %v368, 0
  %v633 = vsel %vm293, %v369, 0
  %635 = vmatprep.subr.mxu0 0.0
  %636 = vmatpush1.msra.mxu0 0.0
  %637 = vmatprep.subr.mxu0 0.0
  %638 = vmatpush1.msra.mxu0 0.0
  %639 = vmatprep.subr.mxu0 0.0
  %640 = vmatpush1.msra.mxu0 0.0
  %641 = vmatprep.subr.mxu0 0.0
  %642 = vmatpush1.msra.mxu0 0.0
  %643 = vmatprep.subr.mxu0 0.0
  %644 = vmatpush1.msra.mxu0 0.0
  %645 = vmatprep.subr.mxu0 0.0
  %646 = vmatpush1.msra.mxu0 0.0
  %647 = vmatprep.subr.mxu0 0.0
  %648 = vmatpush1.msra.mxu0 0.0
  %649 = vmatprep.subr.mxu0 0.0
  %650 = vmatpush1.msra.mxu0 0.0
  %651 = vmatprep.subr.mxu0 0.0
  %652 = vmatpush1.msra.mxu0 0.0
  %653 = vmatprep.subr.mxu0 0.0
  %654 = vmatpush1.msra.mxu0 0.0
  %655 = vmatprep.subr.mxu0 0.0
  %656 = vmatpush1.msra.mxu0 0.0
  %657 = vmatprep.subr.mxu0 0.0
  %658 = vmatpush1.msra.mxu0 0.0
  %659 = vmatprep.subr.mxu0 0.0
  %660 = vmatpush1.msra.mxu0 %v373
  %661 = vmatprep.subr.mxu0 0.0
  %662 = vmatpush1.msra.mxu0 %v372
  %663 = vmatprep.subr.mxu0 0.0
  %664 = vmatpush1.msra.mxu0 %v371
  %665 = vmatprep.subr.mxu0 0.0
  %666 = vmatpush1.msra.mxu0 %v370
  %667 = vmatprep.subr.mxu0 0.0
  %668 = vmatpush2.msra.mxu0 0.0
  %669 = vmatprep.subr.mxu0 0.0
  %670 = vmatpush2.msra.mxu0 0.0
  %671 = vmatprep.subr.mxu0 0.0
  %672 = vmatpush2.msra.mxu0 0.0
  %673 = vmatprep.subr.mxu0 0.0
  %674 = vmatpush2.msra.mxu0 0.0
  %675 = vmatprep.subr.mxu0 0.0
  %676 = vmatpush2.msra.mxu0 0.0
  %677 = vmatprep.subr.mxu0 0.0
  %678 = vmatpush2.msra.mxu0 0.0
  %679 = vmatprep.subr.mxu0 0.0
  %680 = vmatpush2.msra.mxu0 0.0
  %681 = vmatprep.subr.mxu0 0.0
  %682 = vmatpush2.msra.mxu0 0.0
  %683 = vmatprep.subr.mxu0 0.0
  %684 = vmatpush2.msra.mxu0 0.0
  %685 = vmatprep.subr.mxu0 0.0
  %686 = vmatpush2.msra.mxu0 0.0
  %687 = vmatprep.subr.mxu0 0.0
  %688 = vmatpush2.msra.mxu0 0.0
  %689 = vmatprep.subr.mxu0 0.0
  %690 = vmatpush2.msra.mxu0 0.0
  %691 = vmatprep.subr.mxu0 0.0
  %692 = vmatpush2.msra.mxu0 0.0
  %693 = vmatprep.subr.mxu0 0.0
  %694 = vmatpush2.msra.mxu0 0.0
  %695 = vmatprep.subr.mxu0 0.0
  %696 = vmatpush2.msra.mxu0 0.0
  %697 = vmatprep.subr.mxu0 0.0
  %698 = vmatpush2.msra.mxu0 0.0
  %699 = vmatprep.mubr.f32.mxu0 0.0
  %700 = vmatmul.mubr.f32.gmra.mxu0 %v588
  %v701 = vpop.f32.mrf.mxu0
  %v702 = vadd.f32 %v509, %v701
  %v703 = vpop.f32.mrf.mxu0
  %704 = vmatprep.mubr.f32.mxu0 0.0
  %705 = vmatmul.mubr.f32.gmra.mxu0 %v591
  %v706 = vpop.f32.mrf.mxu0
  %v707 = vadd.f32 %v514, %v706
  %v708 = vpop.f32.mrf.mxu0
  %709 = vmatprep.mubr.f32.mxu0 0.0
  %710 = vmatmul.mubr.f32.gmra.mxu0 %v594
  %v711 = vpop.f32.mrf.mxu0
  %v712 = vadd.f32 %v519, %v711
  %v713 = vpop.f32.mrf.mxu0
  %714 = vmatprep.mubr.f32.mxu0 0.0
  %715 = vmatmul.mubr.f32.gmra.mxu0 %v597
  %v716 = vpop.f32.mrf.mxu0
  %v717 = vadd.f32 %v524, %v716
  %v718 = vpop.f32.mrf.mxu0
  %719 = vmatprep.mubr.f32.mxu0 0.0
  %720 = vmatmul.mubr.f32.gmra.mxu0 %v600
  %v721 = vpop.f32.mrf.mxu0
  %v722 = vadd.f32 %v529, %v721
  %v723 = vpop.f32.mrf.mxu0
  %724 = vmatprep.mubr.f32.mxu0 0.0
  %725 = vmatmul.mubr.f32.gmra.mxu0 %v603
  %v726 = vpop.f32.mrf.mxu0
  %v727 = vadd.f32 %v534, %v726
  %v728 = vpop.f32.mrf.mxu0
  %729 = vmatprep.mubr.f32.mxu0 0.0
  %730 = vmatmul.mubr.f32.gmra.mxu0 %v606
  %v731 = vpop.f32.mrf.mxu0
  %v732 = vadd.f32 %v539, %v731
  %v733 = vpop.f32.mrf.mxu0
  %734 = vmatprep.mubr.f32.mxu0 0.0
  %735 = vmatmul.mubr.f32.gmra.mxu0 %v609
  %v736 = vpop.f32.mrf.mxu0
  %v737 = vadd.f32 %v544, %v736
  %v738 = vpop.f32.mrf.mxu0
  %739 = vmatprep.mubr.f32.mxu0 0.0
  %740 = vmatmul.mubr.f32.gmra.mxu0 %v612
  %v741 = vpop.f32.mrf.mxu0
  %v742 = vadd.f32 %v549, %v741
  %v743 = vpop.f32.mrf.mxu0
  %744 = vmatprep.mubr.f32.mxu0 0.0
  %745 = vmatmul.mubr.f32.gmra.mxu0 %v615
  %v746 = vpop.f32.mrf.mxu0
  %v747 = vadd.f32 %v554, %v746
  %v748 = vpop.f32.mrf.mxu0
  %749 = vmatprep.mubr.f32.mxu0 0.0
  %750 = vmatmul.mubr.f32.gmra.mxu0 %v618
  %v751 = vpop.f32.mrf.mxu0
  %v752 = vadd.f32 %v559, %v751
  %v753 = vpop.f32.mrf.mxu0
  %754 = vmatprep.mubr.f32.mxu0 0.0
  %755 = vmatmul.mubr.f32.gmra.mxu0 %v621
  %v756 = vpop.f32.mrf.mxu0
  %v757 = vadd.f32 %v564, %v756
  %v758 = vpop.f32.mrf.mxu0
  %759 = vmatprep.mubr.f32.mxu0 0.0
  %760 = vmatmul.mubr.f32.gmra.mxu0 %v624
  %v761 = vpop.f32.mrf.mxu0
  %v762 = vadd.f32 %v569, %v761
  %v763 = vpop.f32.mrf.mxu0
  %764 = vmatprep.mubr.f32.mxu0 0.0
  %765 = vmatmul.mubr.f32.gmra.mxu0 %v627
  %v766 = vpop.f32.mrf.mxu0
  %v767 = vadd.f32 %v574, %v766
  %v768 = vpop.f32.mrf.mxu0
  %769 = vmatprep.mubr.f32.mxu0 0.0
  %770 = vmatmul.mubr.f32.gmra.mxu0 %v630
  %v771 = vpop.f32.mrf.mxu0
  %v772 = vadd.f32 %v579, %v771
  %v773 = vpop.f32.mrf.mxu0
  %774 = vmatprep.mubr.f32.mxu0 0.0
  %775 = vmatmul.mubr.f32.gmra.mxu0 %v633
  %v776 = vpop.f32.mrf.mxu0
  %v777 = vadd.f32 %v584, %v776
  %v778 = vpop.f32.mrf.mxu0
  %779 = vdwg.mxu0
  %v780 = vld [vmem:[#allocation2 + $0x2] sm:$0xff]
  %v781 = vld [vmem:[#allocation2 + $0x12] sm:$0xff]
  %v782 = vld [vmem:[#allocation2 + $0x22] sm:$0xff]
  %v783 = vld [vmem:[#allocation2 + $0x32] sm:$0xff]
  %v784 = vld [vmem:[#allocation2 + $0x42] sm:$0xff]
  %v785 = vld [vmem:[#allocation2 + $0x52] sm:$0xff]
  %v786 = vld [vmem:[#allocation2 + $0x62] sm:$0xff]
  %v787 = vld [vmem:[#allocation2 + $0x72] sm:$0xff]
  %v788 = vld [vmem:[#allocation2 + $0xa2] sm:$0xff]
  %v789 = vld [vmem:[#allocation2 + $0xb2] sm:$0xff]
  %v790 = vld [vmem:[#allocation2 + $0xc2] sm:$0xff]
  %v791 = vld [vmem:[#allocation2 + $0xd2] sm:$0xff]
  %v792 = vld [vmem:[#allocation2 + $0xe2] sm:$0xff]
  %v793 = vld [vmem:[#allocation2 + $0xf2] sm:$0xff]
  %v794 = vld [vmem:[#allocation2 + $0x102] sm:$0xff]
  %v795 = vld [vmem:[#allocation2 + $0x112] sm:$0xff]
  %v796 = vld [vmem:[%s3 + $0x40] sm:$0xff]
  %v797 = vld [vmem:[%s3 + $0x48] sm:$0xff]
  %v798 = vld [vmem:[%s3 + $0x50] sm:$0xff]
  %v799 = vld [vmem:[%s3 + $0x58] sm:$0xff]
  %v801 = vsel %vm293, %v780, 0
  %v804 = vsel %vm293, %v781, 0
  %v807 = vsel %vm293, %v782, 0
  %v810 = vsel %vm293, %v783, 0
  %v813 = vsel %vm293, %v784, 0
  %v816 = vsel %vm293, %v785, 0
  %v819 = vsel %vm293, %v786, 0
  %v822 = vsel %vm293, %v787, 0
  %v825 = vsel %vm293, %v788, 0
  %v828 = vsel %vm293, %v789, 0
  %v831 = vsel %vm293, %v790, 0
  %v834 = vsel %vm293, %v791, 0
  %v837 = vsel %vm293, %v792, 0
  %v840 = vsel %vm293, %v793, 0
  %v843 = vsel %vm293, %v794, 0
  %v846 = vsel %vm293, %v795, 0
  %848 = vmatprep.subr.mxu0 0.0
  %849 = vmatpush1.msra.mxu0 0.0
  %850 = vmatprep.subr.mxu0 0.0
  %851 = vmatpush1.msra.mxu0 0.0
  %852 = vmatprep.subr.mxu0 0.0
  %853 = vmatpush1.msra.mxu0 0.0
  %854 = vmatprep.subr.mxu0 0.0
  %855 = vmatpush1.msra.mxu0 0.0
  %856 = vmatprep.subr.mxu0 0.0
  %857 = vmatpush1.msra.mxu0 0.0
  %858 = vmatprep.subr.mxu0 0.0
  %859 = vmatpush1.msra.mxu0 0.0
  %860 = vmatprep.subr.mxu0 0.0
  %861 = vmatpush1.msra.mxu0 0.0
  %862 = vmatprep.subr.mxu0 0.0
  %863 = vmatpush1.msra.mxu0 0.0
  %864 = vmatprep.subr.mxu0 0.0
  %865 = vmatpush1.msra.mxu0 0.0
  %866 = vmatprep.subr.mxu0 0.0
  %867 = vmatpush1.msra.mxu0 0.0
  %868 = vmatprep.subr.mxu0 0.0
  %869 = vmatpush1.msra.mxu0 0.0
  %870 = vmatprep.subr.mxu0 0.0
  %871 = vmatpush1.msra.mxu0 0.0
  %872 = vmatprep.subr.mxu0 0.0
  %873 = vmatpush1.msra.mxu0 %v799
  %874 = vmatprep.subr.mxu0 0.0
  %875 = vmatpush1.msra.mxu0 %v798
  %876 = vmatprep.subr.mxu0 0.0
  %877 = vmatpush1.msra.mxu0 %v797
  %878 = vmatprep.subr.mxu0 0.0
  %879 = vmatpush1.msra.mxu0 %v796
  %880 = vmatprep.subr.mxu0 0.0
  %881 = vmatpush2.msra.mxu0 0.0
  %882 = vmatprep.subr.mxu0 0.0
  %883 = vmatpush2.msra.mxu0 0.0
  %884 = vmatprep.subr.mxu0 0.0
  %885 = vmatpush2.msra.mxu0 0.0
  %886 = vmatprep.subr.mxu0 0.0
  %887 = vmatpush2.msra.mxu0 0.0
  %888 = vmatprep.subr.mxu0 0.0
  %889 = vmatpush2.msra.mxu0 0.0
  %890 = vmatprep.subr.mxu0 0.0
  %891 = vmatpush2.msra.mxu0 0.0
  %892 = vmatprep.subr.mxu0 0.0
  %893 = vmatpush2.msra.mxu0 0.0
  %894 = vmatprep.subr.mxu0 0.0
  %895 = vmatpush2.msra.mxu0 0.0
  %896 = vmatprep.subr.mxu0 0.0
  %897 = vmatpush2.msra.mxu0 0.0
  %898 = vmatprep.subr.mxu0 0.0
  %899 = vmatpush2.msra.mxu0 0.0
  %900 = vmatprep.subr.mxu0 0.0
  %901 = vmatpush2.msra.mxu0 0.0
  %902 = vmatprep.subr.mxu0 0.0
  %903 = vmatpush2.msra.mxu0 0.0
  %904 = vmatprep.subr.mxu0 0.0
  %905 = vmatpush2.msra.mxu0 0.0
  %906 = vmatprep.subr.mxu0 0.0
  %907 = vmatpush2.msra.mxu0 0.0
  %908 = vmatprep.subr.mxu0 0.0
  %909 = vmatpush2.msra.mxu0 0.0
  %910 = vmatprep.subr.mxu0 0.0
  %911 = vmatpush2.msra.mxu0 0.0
  %912 = vmatprep.mubr.f32.mxu0 0.0
  %913 = vmatmul.mubr.f32.gmra.mxu0 %v801
  %v914 = vpop.f32.mrf.mxu0
  %v915 = vadd.f32 0.0, %v914
  %v916 = vpop.f32.mrf.mxu0
  %917 = vmatprep.mubr.f32.mxu0 0.0
  %918 = vmatmul.mubr.f32.gmra.mxu0 %v804
  %v919 = vpop.f32.mrf.mxu0
  %v920 = vadd.f32 0.0, %v919
  %v921 = vpop.f32.mrf.mxu0
  %922 = vmatprep.mubr.f32.mxu0 0.0
  %923 = vmatmul.mubr.f32.gmra.mxu0 %v807
  %v924 = vpop.f32.mrf.mxu0
  %v925 = vadd.f32 0.0, %v924
  %v926 = vpop.f32.mrf.mxu0
  %927 = vmatprep.mubr.f32.mxu0 0.0
  %928 = vmatmul.mubr.f32.gmra.mxu0 %v810
  %v929 = vpop.f32.mrf.mxu0
  %v930 = vadd.f32 0.0, %v929
  %v931 = vpop.f32.mrf.mxu0
  %932 = vmatprep.mubr.f32.mxu0 0.0
  %933 = vmatmul.mubr.f32.gmra.mxu0 %v813
  %v934 = vpop.f32.mrf.mxu0
  %v935 = vadd.f32 0.0, %v934
  %v936 = vpop.f32.mrf.mxu0
  %937 = vmatprep.mubr.f32.mxu0 0.0
  %938 = vmatmul.mubr.f32.gmra.mxu0 %v816
  %v939 = vpop.f32.mrf.mxu0
  %v940 = vadd.f32 0.0, %v939
  %v941 = vpop.f32.mrf.mxu0
  %942 = vmatprep.mubr.f32.mxu0 0.0
  %943 = vmatmul.mubr.f32.gmra.mxu0 %v819
  %v944 = vpop.f32.mrf.mxu0
  %v945 = vadd.f32 0.0, %v944
  %v946 = vpop.f32.mrf.mxu0
  %947 = vmatprep.mubr.f32.mxu0 0.0
  %948 = vmatmul.mubr.f32.gmra.mxu0 %v822
  %v949 = vpop.f32.mrf.mxu0
  %v950 = vadd.f32 0.0, %v949
  %v951 = vpop.f32.mrf.mxu0
  %952 = vmatprep.mubr.f32.mxu0 0.0
  %953 = vmatmul.mubr.f32.gmra.mxu0 %v825
  %v954 = vpop.f32.mrf.mxu0
  %v955 = vadd.f32 0.0, %v954
  %v956 = vpop.f32.mrf.mxu0
  %957 = vmatprep.mubr.f32.mxu0 0.0
  %958 = vmatmul.mubr.f32.gmra.mxu0 %v828
  %v959 = vpop.f32.mrf.mxu0
  %v960 = vadd.f32 0.0, %v959
  %v961 = vpop.f32.mrf.mxu0
  %962 = vmatprep.mubr.f32.mxu0 0.0
  %963 = vmatmul.mubr.f32.gmra.mxu0 %v831
  %v964 = vpop.f32.mrf.mxu0
  %v965 = vadd.f32 0.0, %v964
  %v966 = vpop.f32.mrf.mxu0
  %967 = vmatprep.mubr.f32.mxu0 0.0
  %968 = vmatmul.mubr.f32.gmra.mxu0 %v834
  %v969 = vpop.f32.mrf.mxu0
  %v970 = vadd.f32 0.0, %v969
  %v971 = vpop.f32.mrf.mxu0
  %972 = vmatprep.mubr.f32.mxu0 0.0
  %973 = vmatmul.mubr.f32.gmra.mxu0 %v837
  %v974 = vpop.f32.mrf.mxu0
  %v975 = vadd.f32 0.0, %v974
  %v976 = vpop.f32.mrf.mxu0
  %977 = vmatprep.mubr.f32.mxu0 0.0
  %978 = vmatmul.mubr.f32.gmra.mxu0 %v840
  %v979 = vpop.f32.mrf.mxu0
  %v980 = vadd.f32 0.0, %v979
  %v981 = vpop.f32.mrf.mxu0
  %982 = vmatprep.mubr.f32.mxu0 0.0
  %983 = vmatmul.mubr.f32.gmra.mxu0 %v843
  %v984 = vpop.f32.mrf.mxu0
  %v985 = vadd.f32 0.0, %v984
  %v986 = vpop.f32.mrf.mxu0
  %987 = vmatprep.mubr.f32.mxu0 0.0
  %988 = vmatmul.mubr.f32.gmra.mxu0 %v846
  %v989 = vpop.f32.mrf.mxu0
  %v990 = vadd.f32 0.0, %v989
  %v991 = vpop.f32.mrf.mxu0
  %992 = vdwg.mxu0
  %v993 = vadd.f32 %v702, %v915
  %v994 = vadd.f32 %v707, %v920
  %v995 = vadd.f32 %v712, %v925
  %v996 = vadd.f32 %v717, %v930
  %v997 = vadd.f32 %v722, %v935
  %v998 = vadd.f32 %v727, %v940
  %v999 = vadd.f32 %v732, %v945
  %v1000 = vadd.f32 %v737, %v950
  %v1001 = vadd.f32 %v742, %v955
  %v1002 = vadd.f32 %v747, %v960
  %v1003 = vadd.f32 %v752, %v965
  %v1004 = vadd.f32 %v757, %v970
  %v1005 = vadd.f32 %v762, %v975
  %v1006 = vadd.f32 %v767, %v980
  %v1007 = vadd.f32 %v772, %v985
  %v1008 = vadd.f32 %v777, %v990
  %v1009 = vld [vmem:[%s304] sm:$0xff]
  %v1010 = vld [vmem:[%s304 + $0x10] sm:$0xff]
  %v1011 = vld [vmem:[%s304 + $0x20] sm:$0xff]
  %v1012 = vld [vmem:[%s304 + $0x30] sm:$0xff]
  %v1013 = vld [vmem:[%s304 + $0x40] sm:$0xff]
  %v1014 = vld [vmem:[%s304 + $0x50] sm:$0xff]
  %v1015 = vld [vmem:[%s304 + $0x60] sm:$0xff]
  %v1016 = vld [vmem:[%s304 + $0x70] sm:$0xff]
  %v1017 = vld [vmem:[%s304 + $0xa0] sm:$0xff]
  %v1018 = vld [vmem:[%s304 + $0xb0] sm:$0xff]
  %v1019 = vld [vmem:[%s304 + $0xc0] sm:$0xff]
  %v1020 = vld [vmem:[%s304 + $0xd0] sm:$0xff]
  %v1021 = vld [vmem:[%s304 + $0xe0] sm:$0xff]
  %v1022 = vld [vmem:[%s304 + $0xf0] sm:$0xff]
  %v1023 = vld [vmem:[%s304 + $0x100] sm:$0xff]
  %v1024 = vld [vmem:[%s304 + $0x110] sm:$0xff]
  %v1025 = vld [vmem:[%s3 + $0x60] sm:$0xff]
  %v1026 = vld [vmem:[%s3 + $0x68] sm:$0xff]
  %v1027 = vld [vmem:[%s3 + $0x70] sm:$0xff]
  %v1028 = vld [vmem:[%s3 + $0x78] sm:$0xff]
  %v1030 = vsel %vm293, %v1009, 0
  %v1033 = vsel %vm293, %v1010, 0
  %v1036 = vsel %vm293, %v1011, 0
  %v1039 = vsel %vm293, %v1012, 0
  %v1042 = vsel %vm293, %v1013, 0
  %v1045 = vsel %vm293, %v1014, 0
  %v1048 = vsel %vm293, %v1015, 0
  %v1051 = vsel %vm293, %v1016, 0
  %v1054 = vsel %vm293, %v1017, 0
  %v1057 = vsel %vm293, %v1018, 0
  %v1060 = vsel %vm293, %v1019, 0
  %v1063 = vsel %vm293, %v1020, 0
  %v1066 = vsel %vm293, %v1021, 0
  %v1069 = vsel %vm293, %v1022, 0
  %v1072 = vsel %vm293, %v1023, 0
  %v1075 = vsel %vm293, %v1024, 0
  %1077 = vmatprep.subr.mxu0 0.0
  %1078 = vmatpush1.msra.mxu0 0.0
  %1079 = vmatprep.subr.mxu0 0.0
  %1080 = vmatpush1.msra.mxu0 0.0
  %1081 = vmatprep.subr.mxu0 0.0
  %1082 = vmatpush1.msra.mxu0 0.0
  %1083 = vmatprep.subr.mxu0 0.0
  %1084 = vmatpush1.msra.mxu0 0.0
  %1085 = vmatprep.subr.mxu0 0.0
  %1086 = vmatpush1.msra.mxu0 0.0
  %1087 = vmatprep.subr.mxu0 0.0
  %1088 = vmatpush1.msra.mxu0 0.0
  %1089 = vmatprep.subr.mxu0 0.0
  %1090 = vmatpush1.msra.mxu0 0.0
  %1091 = vmatprep.subr.mxu0 0.0
  %1092 = vmatpush1.msra.mxu0 0.0
  %1093 = vmatprep.subr.mxu0 0.0
  %1094 = vmatpush1.msra.mxu0 0.0
  %1095 = vmatprep.subr.mxu0 0.0
  %1096 = vmatpush1.msra.mxu0 0.0
  %1097 = vmatprep.subr.mxu0 0.0
  %1098 = vmatpush1.msra.mxu0 0.0
  %1099 = vmatprep.subr.mxu0 0.0
  %1100 = vmatpush1.msra.mxu0 0.0
  %1101 = vmatprep.subr.mxu0 0.0
  %1102 = vmatpush1.msra.mxu0 %v1028
  %1103 = vmatprep.subr.mxu0 0.0
  %1104 = vmatpush1.msra.mxu0 %v1027
  %1105 = vmatprep.subr.mxu0 0.0
  %1106 = vmatpush1.msra.mxu0 %v1026
  %1107 = vmatprep.subr.mxu0 0.0
  %1108 = vmatpush1.msra.mxu0 %v1025
  %1109 = vmatprep.subr.mxu0 0.0
  %1110 = vmatpush2.msra.mxu0 0.0
  %1111 = vmatprep.subr.mxu0 0.0
  %1112 = vmatpush2.msra.mxu0 0.0
  %1113 = vmatprep.subr.mxu0 0.0
  %1114 = vmatpush2.msra.mxu0 0.0
  %1115 = vmatprep.subr.mxu0 0.0
  %1116 = vmatpush2.msra.mxu0 0.0
  %1117 = vmatprep.subr.mxu0 0.0
  %1118 = vmatpush2.msra.mxu0 0.0
  %1119 = vmatprep.subr.mxu0 0.0
  %1120 = vmatpush2.msra.mxu0 0.0
  %1121 = vmatprep.subr.mxu0 0.0
  %1122 = vmatpush2.msra.mxu0 0.0
  %1123 = vmatprep.subr.mxu0 0.0
  %1124 = vmatpush2.msra.mxu0 0.0
  %1125 = vmatprep.subr.mxu0 0.0
  %1126 = vmatpush2.msra.mxu0 0.0
  %1127 = vmatprep.subr.mxu0 0.0
  %1128 = vmatpush2.msra.mxu0 0.0
  %1129 = vmatprep.subr.mxu0 0.0
  %1130 = vmatpush2.msra.mxu0 0.0
  %1131 = vmatprep.subr.mxu0 0.0
  %1132 = vmatpush2.msra.mxu0 0.0
  %1133 = vmatprep.subr.mxu0 0.0
  %1134 = vmatpush2.msra.mxu0 0.0
  %1135 = vmatprep.subr.mxu0 0.0
  %1136 = vmatpush2.msra.mxu0 0.0
  %1137 = vmatprep.subr.mxu0 0.0
  %1138 = vmatpush2.msra.mxu0 0.0
  %1139 = vmatprep.subr.mxu0 0.0
  %1140 = vmatpush2.msra.mxu0 0.0
  %1141 = vmatprep.mubr.f32.mxu0 0.0
  %1142 = vmatmul.mubr.f32.gmra.mxu0 %v1030
  %v1143 = vpop.f32.mrf.mxu0
  %v1144 = vadd.f32 0.0, %v1143
  %v1145 = vpop.f32.mrf.mxu0
  %1146 = vmatprep.mubr.f32.mxu0 0.0
  %1147 = vmatmul.mubr.f32.gmra.mxu0 %v1033
  %v1148 = vpop.f32.mrf.mxu0
  %v1149 = vadd.f32 0.0, %v1148
  %v1150 = vpop.f32.mrf.mxu0
  %1151 = vmatprep.mubr.f32.mxu0 0.0
  %1152 = vmatmul.mubr.f32.gmra.mxu0 %v1036
  %v1153 = vpop.f32.mrf.mxu0
  %v1154 = vadd.f32 0.0, %v1153
  %v1155 = vpop.f32.mrf.mxu0
  %1156 = vmatprep.mubr.f32.mxu0 0.0
  %1157 = vmatmul.mubr.f32.gmra.mxu0 %v1039
  %v1158 = vpop.f32.mrf.mxu0
  %v1159 = vadd.f32 0.0, %v1158
  %v1160 = vpop.f32.mrf.mxu0
  %1161 = vmatprep.mubr.f32.mxu0 0.0
  %1162 = vmatmul.mubr.f32.gmra.mxu0 %v1042
  %v1163 = vpop.f32.mrf.mxu0
  %v1164 = vadd.f32 0.0, %v1163
  %v1165 = vpop.f32.mrf.mxu0
  %1166 = vmatprep.mubr.f32.mxu0 0.0
  %1167 = vmatmul.mubr.f32.gmra.mxu0 %v1045
  %v1168 = vpop.f32.mrf.mxu0
  %v1169 = vadd.f32 0.0, %v1168
  %v1170 = vpop.f32.mrf.mxu0
  %1171 = vmatprep.mubr.f32.mxu0 0.0
  %1172 = vmatmul.mubr.f32.gmra.mxu0 %v1048
  %v1173 = vpop.f32.mrf.mxu0
  %v1174 = vadd.f32 0.0, %v1173
  %v1175 = vpop.f32.mrf.mxu0
  %1176 = vmatprep.mubr.f32.mxu0 0.0
  %1177 = vmatmul.mubr.f32.gmra.mxu0 %v1051
  %v1178 = vpop.f32.mrf.mxu0
  %v1179 = vadd.f32 0.0, %v1178
  %v1180 = vpop.f32.mrf.mxu0
  %1181 = vmatprep.mubr.f32.mxu0 0.0
  %1182 = vmatmul.mubr.f32.gmra.mxu0 %v1054
  %v1183 = vpop.f32.mrf.mxu0
  %v1184 = vadd.f32 0.0, %v1183
  %v1185 = vpop.f32.mrf.mxu0
  %1186 = vmatprep.mubr.f32.mxu0 0.0
  %1187 = vmatmul.mubr.f32.gmra.mxu0 %v1057
  %v1188 = vpop.f32.mrf.mxu0
  %v1189 = vadd.f32 0.0, %v1188
  %v1190 = vpop.f32.mrf.mxu0
  %1191 = vmatprep.mubr.f32.mxu0 0.0
  %1192 = vmatmul.mubr.f32.gmra.mxu0 %v1060
  %v1193 = vpop.f32.mrf.mxu0
  %v1194 = vadd.f32 0.0, %v1193
  %v1195 = vpop.f32.mrf.mxu0
  %1196 = vmatprep.mubr.f32.mxu0 0.0
  %1197 = vmatmul.mubr.f32.gmra.mxu0 %v1063
  %v1198 = vpop.f32.mrf.mxu0
  %v1199 = vadd.f32 0.0, %v1198
  %v1200 = vpop.f32.mrf.mxu0
  %1201 = vmatprep.mubr.f32.mxu0 0.0
  %1202 = vmatmul.mubr.f32.gmra.mxu0 %v1066
  %v1203 = vpop.f32.mrf.mxu0
  %v1204 = vadd.f32 0.0, %v1203
  %v1205 = vpop.f32.mrf.mxu0
  %1206 = vmatprep.mubr.f32.mxu0 0.0
  %1207 = vmatmul.mubr.f32.gmra.mxu0 %v1069
  %v1208 = vpop.f32.mrf.mxu0
  %v1209 = vadd.f32 0.0, %v1208
  %v1210 = vpop.f32.mrf.mxu0
  %1211 = vmatprep.mubr.f32.mxu0 0.0
  %1212 = vmatmul.mubr.f32.gmra.mxu0 %v1072
  %v1213 = vpop.f32.mrf.mxu0
  %v1214 = vadd.f32 0.0, %v1213
  %v1215 = vpop.f32.mrf.mxu0
  %1216 = vmatprep.mubr.f32.mxu0 0.0
  %1217 = vmatmul.mubr.f32.gmra.mxu0 %v1075
  %v1218 = vpop.f32.mrf.mxu0
  %v1219 = vadd.f32 0.0, %v1218
  %v1220 = vpop.f32.mrf.mxu0
  %1221 = vdwg.mxu0
  %v1222 = vadd.f32 %v993, %v1144
  %v1223 = vadd.f32 %v994, %v1149
  %v1224 = vadd.f32 %v995, %v1154
  %v1225 = vadd.f32 %v996, %v1159
  %v1226 = vadd.f32 %v997, %v1164
  %v1227 = vadd.f32 %v998, %v1169
  %v1228 = vadd.f32 %v999, %v1174
  %v1229 = vadd.f32 %v1000, %v1179
  %v1230 = vadd.f32 %v1001, %v1184
  %v1231 = vadd.f32 %v1002, %v1189
  %v1232 = vadd.f32 %v1003, %v1194
  %v1233 = vadd.f32 %v1004, %v1199
  %v1234 = vadd.f32 %v1005, %v1204
  %v1235 = vadd.f32 %v1006, %v1209
  %v1236 = vadd.f32 %v1007, %v1214
  %v1237 = vadd.f32 %v1008, %v1219
  %v1238 = vld [vmem:[%s304 + $0x1] sm:$0xff]
  %v1239 = vld [vmem:[%s304 + $0x11] sm:$0xff]
  %v1240 = vld [vmem:[%s304 + $0x21] sm:$0xff]
  %v1241 = vld [vmem:[%s304 + $0x31] sm:$0xff]
  %v1242 = vld [vmem:[%s304 + $0x41] sm:$0xff]
  %v1243 = vld [vmem:[%s304 + $0x51] sm:$0xff]
  %v1244 = vld [vmem:[%s304 + $0x61] sm:$0xff]
  %v1245 = vld [vmem:[%s304 + $0x71] sm:$0xff]
  %v1246 = vld [vmem:[%s304 + $0xa1] sm:$0xff]
  %v1247 = vld [vmem:[%s304 + $0xb1] sm:$0xff]
  %v1248 = vld [vmem:[%s304 + $0xc1] sm:$0xff]
  %v1249 = vld [vmem:[%s304 + $0xd1] sm:$0xff]
  %v1250 = vld [vmem:[%s304 + $0xe1] sm:$0xff]
  %v1251 = vld [vmem:[%s304 + $0xf1] sm:$0xff]
  %v1252 = vld [vmem:[%s304 + $0x101] sm:$0xff]
  %v1253 = vld [vmem:[%s304 + $0x111] sm:$0xff]
  %v1254 = vld [vmem:[%s3 + $0x80] sm:$0xff]
  %v1255 = vld [vmem:[%s3 + $0x88] sm:$0xff]
  %v1256 = vld [vmem:[%s3 + $0x90] sm:$0xff]
  %v1257 = vld [vmem:[%s3 + $0x98] sm:$0xff]
  %v1259 = vsel %vm293, %v1238, 0
  %v1262 = vsel %vm293, %v1239, 0
  %v1265 = vsel %vm293, %v1240, 0
  %v1268 = vsel %vm293, %v1241, 0
  %v1271 = vsel %vm293, %v1242, 0
  %v1274 = vsel %vm293, %v1243, 0
  %v1277 = vsel %vm293, %v1244, 0
  %v1280 = vsel %vm293, %v1245, 0
  %v1283 = vsel %vm293, %v1246, 0
  %v1286 = vsel %vm293, %v1247, 0
  %v1289 = vsel %vm293, %v1248, 0
  %v1292 = vsel %vm293, %v1249, 0
  %v1295 = vsel %vm293, %v1250, 0
  %v1298 = vsel %vm293, %v1251, 0
  %v1301 = vsel %vm293, %v1252, 0
  %v1304 = vsel %vm293, %v1253, 0
  %1306 = vmatprep.subr.mxu0 0.0
  %1307 = vmatpush1.msra.mxu0 0.0
  %1308 = vmatprep.subr.mxu0 0.0
  %1309 = vmatpush1.msra.mxu0 0.0
  %1310 = vmatprep.subr.mxu0 0.0
  %1311 = vmatpush1.msra.mxu0 0.0
  %1312 = vmatprep.subr.mxu0 0.0
  %1313 = vmatpush1.msra.mxu0 0.0
  %1314 = vmatprep.subr.mxu0 0.0
  %1315 = vmatpush1.msra.mxu0 0.0
  %1316 = vmatprep.subr.mxu0 0.0
  %1317 = vmatpush1.msra.mxu0 0.0
  %1318 = vmatprep.subr.mxu0 0.0
  %1319 = vmatpush1.msra.mxu0 0.0
  %1320 = vmatprep.subr.mxu0 0.0
  %1321 = vmatpush1.msra.mxu0 0.0
  %1322 = vmatprep.subr.mxu0 0.0
  %1323 = vmatpush1.msra.mxu0 0.0
  %1324 = vmatprep.subr.mxu0 0.0
  %1325 = vmatpush1.msra.mxu0 0.0
  %1326 = vmatprep.subr.mxu0 0.0
  %1327 = vmatpush1.msra.mxu0 0.0
  %1328 = vmatprep.subr.mxu0 0.0
  %1329 = vmatpush1.msra.mxu0 0.0
  %1330 = vmatprep.subr.mxu0 0.0
  %1331 = vmatpush1.msra.mxu0 %v1257
  %1332 = vmatprep.subr.mxu0 0.0
  %1333 = vmatpush1.msra.mxu0 %v1256
  %1334 = vmatprep.subr.mxu0 0.0
  %1335 = vmatpush1.msra.mxu0 %v1255
  %1336 = vmatprep.subr.mxu0 0.0
  %1337 = vmatpush1.msra.mxu0 %v1254
  %1338 = vmatprep.subr.mxu0 0.0
  %1339 = vmatpush2.msra.mxu0 0.0
  %1340 = vmatprep.subr.mxu0 0.0
  %1341 = vmatpush2.msra.mxu0 0.0
  %1342 = vmatprep.subr.mxu0 0.0
  %1343 = vmatpush2.msra.mxu0 0.0
  %1344 = vmatprep.subr.mxu0 0.0
  %1345 = vmatpush2.msra.mxu0 0.0
  %1346 = vmatprep.subr.mxu0 0.0
  %1347 = vmatpush2.msra.mxu0 0.0
  %1348 = vmatprep.subr.mxu0 0.0
  %1349 = vmatpush2.msra.mxu0 0.0
  %1350 = vmatprep.subr.mxu0 0.0
  %1351 = vmatpush2.msra.mxu0 0.0
  %1352 = vmatprep.subr.mxu0 0.0
  %1353 = vmatpush2.msra.mxu0 0.0
  %1354 = vmatprep.subr.mxu0 0.0
  %1355 = vmatpush2.msra.mxu0 0.0
  %1356 = vmatprep.subr.mxu0 0.0
  %1357 = vmatpush2.msra.mxu0 0.0
  %1358 = vmatprep.subr.mxu0 0.0
  %1359 = vmatpush2.msra.mxu0 0.0
  %1360 = vmatprep.subr.mxu0 0.0
  %1361 = vmatpush2.msra.mxu0 0.0
  %1362 = vmatprep.subr.mxu0 0.0
  %1363 = vmatpush2.msra.mxu0 0.0
  %1364 = vmatprep.subr.mxu0 0.0
  %1365 = vmatpush2.msra.mxu0 0.0
  %1366 = vmatprep.subr.mxu0 0.0
  %1367 = vmatpush2.msra.mxu0 0.0
  %1368 = vmatprep.subr.mxu0 0.0
  %1369 = vmatpush2.msra.mxu0 0.0
  %1370 = vmatprep.mubr.f32.mxu0 0.0
  %1371 = vmatmul.mubr.f32.gmra.mxu0 %v1259
  %v1372 = vpop.f32.mrf.mxu0
  %v1373 = vadd.f32 0.0, %v1372
  %v1374 = vpop.f32.mrf.mxu0
  %1375 = vmatprep.mubr.f32.mxu0 0.0
  %1376 = vmatmul.mubr.f32.gmra.mxu0 %v1262
  %v1377 = vpop.f32.mrf.mxu0
  %v1378 = vadd.f32 0.0, %v1377
  %v1379 = vpop.f32.mrf.mxu0
  %1380 = vmatprep.mubr.f32.mxu0 0.0
  %1381 = vmatmul.mubr.f32.gmra.mxu0 %v1265
  %v1382 = vpop.f32.mrf.mxu0
  %v1383 = vadd.f32 0.0, %v1382
  %v1384 = vpop.f32.mrf.mxu0
  %1385 = vmatprep.mubr.f32.mxu0 0.0
  %1386 = vmatmul.mubr.f32.gmra.mxu0 %v1268
  %v1387 = vpop.f32.mrf.mxu0
  %v1388 = vadd.f32 0.0, %v1387
  %v1389 = vpop.f32.mrf.mxu0
  %1390 = vmatprep.mubr.f32.mxu0 0.0
  %1391 = vmatmul.mubr.f32.gmra.mxu0 %v1271
  %v1392 = vpop.f32.mrf.mxu0
  %v1393 = vadd.f32 0.0, %v1392
  %v1394 = vpop.f32.mrf.mxu0
  %1395 = vmatprep.mubr.f32.mxu0 0.0
  %1396 = vmatmul.mubr.f32.gmra.mxu0 %v1274
  %v1397 = vpop.f32.mrf.mxu0
  %v1398 = vadd.f32 0.0, %v1397
  %v1399 = vpop.f32.mrf.mxu0
  %1400 = vmatprep.mubr.f32.mxu0 0.0
  %1401 = vmatmul.mubr.f32.gmra.mxu0 %v1277
  %v1402 = vpop.f32.mrf.mxu0
  %v1403 = vadd.f32 0.0, %v1402
  %v1404 = vpop.f32.mrf.mxu0
  %1405 = vmatprep.mubr.f32.mxu0 0.0
  %1406 = vmatmul.mubr.f32.gmra.mxu0 %v1280
  %v1407 = vpop.f32.mrf.mxu0
  %v1408 = vadd.f32 0.0, %v1407
  %v1409 = vpop.f32.mrf.mxu0
  %1410 = vmatprep.mubr.f32.mxu0 0.0
  %1411 = vmatmul.mubr.f32.gmra.mxu0 %v1283
  %v1412 = vpop.f32.mrf.mxu0
  %v1413 = vadd.f32 0.0, %v1412
  %v1414 = vpop.f32.mrf.mxu0
  %1415 = vmatprep.mubr.f32.mxu0 0.0
  %1416 = vmatmul.mubr.f32.gmra.mxu0 %v1286
  %v1417 = vpop.f32.mrf.mxu0
  %v1418 = vadd.f32 0.0, %v1417
  %v1419 = vpop.f32.mrf.mxu0
  %1420 = vmatprep.mubr.f32.mxu0 0.0
  %1421 = vmatmul.mubr.f32.gmra.mxu0 %v1289
  %v1422 = vpop.f32.mrf.mxu0
  %v1423 = vadd.f32 0.0, %v1422
  %v1424 = vpop.f32.mrf.mxu0
  %1425 = vmatprep.mubr.f32.mxu0 0.0
  %1426 = vmatmul.mubr.f32.gmra.mxu0 %v1292
  %v1427 = vpop.f32.mrf.mxu0
  %v1428 = vadd.f32 0.0, %v1427
  %v1429 = vpop.f32.mrf.mxu0
  %1430 = vmatprep.mubr.f32.mxu0 0.0
  %1431 = vmatmul.mubr.f32.gmra.mxu0 %v1295
  %v1432 = vpop.f32.mrf.mxu0
  %v1433 = vadd.f32 0.0, %v1432
  %v1434 = vpop.f32.mrf.mxu0
  %1435 = vmatprep.mubr.f32.mxu0 0.0
  %1436 = vmatmul.mubr.f32.gmra.mxu0 %v1298
  %v1437 = vpop.f32.mrf.mxu0
  %v1438 = vadd.f32 0.0, %v1437
  %v1439 = vpop.f32.mrf.mxu0
  %1440 = vmatprep.mubr.f32.mxu0 0.0
  %1441 = vmatmul.mubr.f32.gmra.mxu0 %v1301
  %v1442 = vpop.f32.mrf.mxu0
  %v1443 = vadd.f32 0.0, %v1442
  %v1444 = vpop.f32.mrf.mxu0
  %1445 = vmatprep.mubr.f32.mxu0 0.0
  %1446 = vmatmul.mubr.f32.gmra.mxu0 %v1304
  %v1447 = vpop.f32.mrf.mxu0
  %v1448 = vadd.f32 0.0, %v1447
  %v1449 = vpop.f32.mrf.mxu0
  %1450 = vdwg.mxu0
  %v1451 = vadd.f32 %v1222, %v1373
  %v1452 = vadd.f32 %v1223, %v1378
  %v1453 = vadd.f32 %v1224, %v1383
  %v1454 = vadd.f32 %v1225, %v1388
  %v1455 = vadd.f32 %v1226, %v1393
  %v1456 = vadd.f32 %v1227, %v1398
  %v1457 = vadd.f32 %v1228, %v1403
  %v1458 = vadd.f32 %v1229, %v1408
  %v1459 = vadd.f32 %v1230, %v1413
  %v1460 = vadd.f32 %v1231, %v1418
  %v1461 = vadd.f32 %v1232, %v1423
  %v1462 = vadd.f32 %v1233, %v1428
  %v1463 = vadd.f32 %v1234, %v1433
  %v1464 = vadd.f32 %v1235, %v1438
  %v1465 = vadd.f32 %v1236, %v1443
  %v1466 = vadd.f32 %v1237, %v1448
  %v1467 = vld [vmem:[%s304 + $0x2] sm:$0xff]
  %v1468 = vld [vmem:[%s304 + $0x12] sm:$0xff]
  %v1469 = vld [vmem:[%s304 + $0x22] sm:$0xff]
  %v1470 = vld [vmem:[%s304 + $0x32] sm:$0xff]
  %v1471 = vld [vmem:[%s304 + $0x42] sm:$0xff]
  %v1472 = vld [vmem:[%s304 + $0x52] sm:$0xff]
  %v1473 = vld [vmem:[%s304 + $0x62] sm:$0xff]
  %v1474 = vld [vmem:[%s304 + $0x72] sm:$0xff]
  %v1475 = vld [vmem:[%s304 + $0xa2] sm:$0xff]
  %v1476 = vld [vmem:[%s304 + $0xb2] sm:$0xff]
  %v1477 = vld [vmem:[%s304 + $0xc2] sm:$0xff]
  %v1478 = vld [vmem:[%s304 + $0xd2] sm:$0xff]
  %v1479 = vld [vmem:[%s304 + $0xe2] sm:$0xff]
  %v1480 = vld [vmem:[%s304 + $0xf2] sm:$0xff]
  %v1481 = vld [vmem:[%s304 + $0x102] sm:$0xff]
  %v1482 = vld [vmem:[%s304 + $0x112] sm:$0xff]
  %v1483 = vld [vmem:[%s3 + $0xa0] sm:$0xff]
  %v1484 = vld [vmem:[%s3 + $0xa8] sm:$0xff]
  %v1485 = vld [vmem:[%s3 + $0xb0] sm:$0xff]
  %v1486 = vld [vmem:[%s3 + $0xb8] sm:$0xff]
  %v1488 = vsel %vm293, %v1467, 0
  %v1491 = vsel %vm293, %v1468, 0
  %v1494 = vsel %vm293, %v1469, 0
  %v1497 = vsel %vm293, %v1470, 0
  %v1500 = vsel %vm293, %v1471, 0
  %v1503 = vsel %vm293, %v1472, 0
  %v1506 = vsel %vm293, %v1473, 0
  %v1509 = vsel %vm293, %v1474, 0
  %v1512 = vsel %vm293, %v1475, 0
  %v1515 = vsel %vm293, %v1476, 0
  %v1518 = vsel %vm293, %v1477, 0
  %v1521 = vsel %vm293, %v1478, 0
  %v1524 = vsel %vm293, %v1479, 0
  %v1527 = vsel %vm293, %v1480, 0
  %v1530 = vsel %vm293, %v1481, 0
  %v1533 = vsel %vm293, %v1482, 0
  %1535 = vmatprep.subr.mxu0 0.0
  %1536 = vmatpush1.msra.mxu0 0.0
  %1537 = vmatprep.subr.mxu0 0.0
  %1538 = vmatpush1.msra.mxu0 0.0
  %1539 = vmatprep.subr.mxu0 0.0
  %1540 = vmatpush1.msra.mxu0 0.0
  %1541 = vmatprep.subr.mxu0 0.0
  %1542 = vmatpush1.msra.mxu0 0.0
  %1543 = vmatprep.subr.mxu0 0.0
  %1544 = vmatpush1.msra.mxu0 0.0
  %1545 = vmatprep.subr.mxu0 0.0
  %1546 = vmatpush1.msra.mxu0 0.0
  %1547 = vmatprep.subr.mxu0 0.0
  %1548 = vmatpush1.msra.mxu0 0.0
  %1549 = vmatprep.subr.mxu0 0.0
  %1550 = vmatpush1.msra.mxu0 0.0
  %1551 = vmatprep.subr.mxu0 0.0
  %1552 = vmatpush1.msra.mxu0 0.0
  %1553 = vmatprep.subr.mxu0 0.0
  %1554 = vmatpush1.msra.mxu0 0.0
  %1555 = vmatprep.subr.mxu0 0.0
  %1556 = vmatpush1.msra.mxu0 0.0
  %1557 = vmatprep.subr.mxu0 0.0
  %1558 = vmatpush1.msra.mxu0 0.0
  %1559 = vmatprep.subr.mxu0 0.0
  %1560 = vmatpush1.msra.mxu0 %v1486
  %1561 = vmatprep.subr.mxu0 0.0
  %1562 = vmatpush1.msra.mxu0 %v1485
  %1563 = vmatprep.subr.mxu0 0.0
  %1564 = vmatpush1.msra.mxu0 %v1484
  %1565 = vmatprep.subr.mxu0 0.0
  %1566 = vmatpush1.msra.mxu0 %v1483
  %1567 = vmatprep.subr.mxu0 0.0
  %1568 = vmatpush2.msra.mxu0 0.0
  %1569 = vmatprep.subr.mxu0 0.0
  %1570 = vmatpush2.msra.mxu0 0.0
  %1571 = vmatprep.subr.mxu0 0.0
  %1572 = vmatpush2.msra.mxu0 0.0
  %1573 = vmatprep.subr.mxu0 0.0
  %1574 = vmatpush2.msra.mxu0 0.0
  %1575 = vmatprep.subr.mxu0 0.0
  %1576 = vmatpush2.msra.mxu0 0.0
  %1577 = vmatprep.subr.mxu0 0.0
  %1578 = vmatpush2.msra.mxu0 0.0
  %1579 = vmatprep.subr.mxu0 0.0
  %1580 = vmatpush2.msra.mxu0 0.0
  %1581 = vmatprep.subr.mxu0 0.0
  %1582 = vmatpush2.msra.mxu0 0.0
  %1583 = vmatprep.subr.mxu0 0.0
  %1584 = vmatpush2.msra.mxu0 0.0
  %1585 = vmatprep.subr.mxu0 0.0
  %1586 = vmatpush2.msra.mxu0 0.0
  %1587 = vmatprep.subr.mxu0 0.0
  %1588 = vmatpush2.msra.mxu0 0.0
  %1589 = vmatprep.subr.mxu0 0.0
  %1590 = vmatpush2.msra.mxu0 0.0
  %1591 = vmatprep.subr.mxu0 0.0
  %1592 = vmatpush2.msra.mxu0 0.0
  %1593 = vmatprep.subr.mxu0 0.0
  %1594 = vmatpush2.msra.mxu0 0.0
  %1595 = vmatprep.subr.mxu0 0.0
  %1596 = vmatpush2.msra.mxu0 0.0
  %1597 = vmatprep.subr.mxu0 0.0
  %1598 = vmatpush2.msra.mxu0 0.0
  %1599 = vmatprep.mubr.f32.mxu0 0.0
  %1600 = vmatmul.mubr.f32.gmra.mxu0 %v1488
  %v1601 = vpop.f32.mrf.mxu0
  %v1602 = vadd.f32 0.0, %v1601
  %v1603 = vpop.f32.mrf.mxu0
  %1604 = vmatprep.mubr.f32.mxu0 0.0
  %1605 = vmatmul.mubr.f32.gmra.mxu0 %v1491
  %v1606 = vpop.f32.mrf.mxu0
  %v1607 = vadd.f32 0.0, %v1606
  %v1608 = vpop.f32.mrf.mxu0
  %1609 = vmatprep.mubr.f32.mxu0 0.0
  %1610 = vmatmul.mubr.f32.gmra.mxu0 %v1494
  %v1611 = vpop.f32.mrf.mxu0
  %v1612 = vadd.f32 0.0, %v1611
  %v1613 = vpop.f32.mrf.mxu0
  %1614 = vmatprep.mubr.f32.mxu0 0.0
  %1615 = vmatmul.mubr.f32.gmra.mxu0 %v1497
  %v1616 = vpop.f32.mrf.mxu0
  %v1617 = vadd.f32 0.0, %v1616
  %v1618 = vpop.f32.mrf.mxu0
  %1619 = vmatprep.mubr.f32.mxu0 0.0
  %1620 = vmatmul.mubr.f32.gmra.mxu0 %v1500
  %v1621 = vpop.f32.mrf.mxu0
  %v1622 = vadd.f32 0.0, %v1621
  %v1623 = vpop.f32.mrf.mxu0
  %1624 = vmatprep.mubr.f32.mxu0 0.0
  %1625 = vmatmul.mubr.f32.gmra.mxu0 %v1503
  %v1626 = vpop.f32.mrf.mxu0
  %v1627 = vadd.f32 0.0, %v1626
  %v1628 = vpop.f32.mrf.mxu0
  %1629 = vmatprep.mubr.f32.mxu0 0.0
  %1630 = vmatmul.mubr.f32.gmra.mxu0 %v1506
  %v1631 = vpop.f32.mrf.mxu0
  %v1632 = vadd.f32 0.0, %v1631
  %v1633 = vpop.f32.mrf.mxu0
  %1634 = vmatprep.mubr.f32.mxu0 0.0
  %1635 = vmatmul.mubr.f32.gmra.mxu0 %v1509
  %v1636 = vpop.f32.mrf.mxu0
  %v1637 = vadd.f32 0.0, %v1636
  %v1638 = vpop.f32.mrf.mxu0
  %1639 = vmatprep.mubr.f32.mxu0 0.0
  %1640 = vmatmul.mubr.f32.gmra.mxu0 %v1512
  %v1641 = vpop.f32.mrf.mxu0
  %v1642 = vadd.f32 0.0, %v1641
  %v1643 = vpop.f32.mrf.mxu0
  %1644 = vmatprep.mubr.f32.mxu0 0.0
  %1645 = vmatmul.mubr.f32.gmra.mxu0 %v1515
  %v1646 = vpop.f32.mrf.mxu0
  %v1647 = vadd.f32 0.0, %v1646
  %v1648 = vpop.f32.mrf.mxu0
  %1649 = vmatprep.mubr.f32.mxu0 0.0
  %1650 = vmatmul.mubr.f32.gmra.mxu0 %v1518
  %v1651 = vpop.f32.mrf.mxu0
  %v1652 = vadd.f32 0.0, %v1651
  %v1653 = vpop.f32.mrf.mxu0
  %1654 = vmatprep.mubr.f32.mxu0 0.0
  %1655 = vmatmul.mubr.f32.gmra.mxu0 %v1521
  %v1656 = vpop.f32.mrf.mxu0
  %v1657 = vadd.f32 0.0, %v1656
  %v1658 = vpop.f32.mrf.mxu0
  %1659 = vmatprep.mubr.f32.mxu0 0.0
  %1660 = vmatmul.mubr.f32.gmra.mxu0 %v1524
  %v1661 = vpop.f32.mrf.mxu0
  %v1662 = vadd.f32 0.0, %v1661
  %v1663 = vpop.f32.mrf.mxu0
  %1664 = vmatprep.mubr.f32.mxu0 0.0
  %1665 = vmatmul.mubr.f32.gmra.mxu0 %v1527
  %v1666 = vpop.f32.mrf.mxu0
  %v1667 = vadd.f32 0.0, %v1666
  %v1668 = vpop.f32.mrf.mxu0
  %1669 = vmatprep.mubr.f32.mxu0 0.0
  %1670 = vmatmul.mubr.f32.gmra.mxu0 %v1530
  %v1671 = vpop.f32.mrf.mxu0
  %v1672 = vadd.f32 0.0, %v1671
  %v1673 = vpop.f32.mrf.mxu0
  %1674 = vmatprep.mubr.f32.mxu0 0.0
  %1675 = vmatmul.mubr.f32.gmra.mxu0 %v1533
  %v1676 = vpop.f32.mrf.mxu0
  %v1677 = vadd.f32 0.0, %v1676
  %v1678 = vpop.f32.mrf.mxu0
  %1679 = vdwg.mxu0
  %v1680 = vadd.f32 %v1451, %v1602
  %v1681 = vadd.f32 %v1452, %v1607
  %v1682 = vadd.f32 %v1453, %v1612
  %v1683 = vadd.f32 %v1454, %v1617
  %v1684 = vadd.f32 %v1455, %v1622
  %v1685 = vadd.f32 %v1456, %v1627
  %v1686 = vadd.f32 %v1457, %v1632
  %v1687 = vadd.f32 %v1458, %v1637
  %v1688 = vadd.f32 %v1459, %v1642
  %v1689 = vadd.f32 %v1460, %v1647
  %v1690 = vadd.f32 %v1461, %v1652
  %v1691 = vadd.f32 %v1462, %v1657
  %v1692 = vadd.f32 %v1463, %v1662
  %v1693 = vadd.f32 %v1464, %v1667
  %v1694 = vadd.f32 %v1465, %v1672
  %v1695 = vadd.f32 %v1466, %v1677
  %s1696 = scalar_lea.vmem [#allocation2], 32
  %v1697 = vld [vmem:[%s1696] sm:$0xff]
  %v1698 = vld [vmem:[%s1696 + $0x10] sm:$0xff]
  %v1699 = vld [vmem:[%s1696 + $0x20] sm:$0xff]
  %v1700 = vld [vmem:[%s1696 + $0x30] sm:$0xff]
  %v1701 = vld [vmem:[%s1696 + $0x40] sm:$0xff]
  %v1702 = vld [vmem:[%s1696 + $0x50] sm:$0xff]
  %v1703 = vld [vmem:[%s1696 + $0x60] sm:$0xff]
  %v1704 = vld [vmem:[%s1696 + $0x70] sm:$0xff]
  %v1705 = vld [vmem:[%s1696 + $0xa0] sm:$0xff]
  %v1706 = vld [vmem:[%s1696 + $0xb0] sm:$0xff]
  %v1707 = vld [vmem:[%s1696 + $0xc0] sm:$0xff]
  %v1708 = vld [vmem:[%s1696 + $0xd0] sm:$0xff]
  %v1709 = vld [vmem:[%s1696 + $0xe0] sm:$0xff]
  %v1710 = vld [vmem:[%s1696 + $0xf0] sm:$0xff]
  %v1711 = vld [vmem:[%s1696 + $0x100] sm:$0xff]
  %v1712 = vld [vmem:[%s1696 + $0x110] sm:$0xff]
  %v1713 = vld [vmem:[%s3 + $0xc0] sm:$0xff]
  %v1714 = vld [vmem:[%s3 + $0xc8] sm:$0xff]
  %v1715 = vld [vmem:[%s3 + $0xd0] sm:$0xff]
  %v1716 = vld [vmem:[%s3 + $0xd8] sm:$0xff]
  %v1718 = vsel %vm293, %v1697, 0
  %v1721 = vsel %vm293, %v1698, 0
  %v1724 = vsel %vm293, %v1699, 0
  %v1727 = vsel %vm293, %v1700, 0
  %v1730 = vsel %vm293, %v1701, 0
  %v1733 = vsel %vm293, %v1702, 0
  %v1736 = vsel %vm293, %v1703, 0
  %v1739 = vsel %vm293, %v1704, 0
  %v1742 = vsel %vm293, %v1705, 0
  %v1745 = vsel %vm293, %v1706, 0
  %v1748 = vsel %vm293, %v1707, 0
  %v1751 = vsel %vm293, %v1708, 0
  %v1754 = vsel %vm293, %v1709, 0
  %v1757 = vsel %vm293, %v1710, 0
  %v1760 = vsel %vm293, %v1711, 0
  %v1763 = vsel %vm293, %v1712, 0
  %1765 = vmatprep.subr.mxu0 0.0
  %1766 = vmatpush1.msra.mxu0 0.0
  %1767 = vmatprep.subr.mxu0 0.0
  %1768 = vmatpush1.msra.mxu0 0.0
  %1769 = vmatprep.subr.mxu0 0.0
  %1770 = vmatpush1.msra.mxu0 0.0
  %1771 = vmatprep.subr.mxu0 0.0
  %1772 = vmatpush1.msra.mxu0 0.0
  %1773 = vmatprep.subr.mxu0 0.0
  %1774 = vmatpush1.msra.mxu0 0.0
  %1775 = vmatprep.subr.mxu0 0.0
  %1776 = vmatpush1.msra.mxu0 0.0
  %1777 = vmatprep.subr.mxu0 0.0
  %1778 = vmatpush1.msra.mxu0 0.0
  %1779 = vmatprep.subr.mxu0 0.0
  %1780 = vmatpush1.msra.mxu0 0.0
  %1781 = vmatprep.subr.mxu0 0.0
  %1782 = vmatpush1.msra.mxu0 0.0
  %1783 = vmatprep.subr.mxu0 0.0
  %1784 = vmatpush1.msra.mxu0 0.0
  %1785 = vmatprep.subr.mxu0 0.0
  %1786 = vmatpush1.msra.mxu0 0.0
  %1787 = vmatprep.subr.mxu0 0.0
  %1788 = vmatpush1.msra.mxu0 0.0
  %1789 = vmatprep.subr.mxu0 0.0
  %1790 = vmatpush1.msra.mxu0 %v1716
  %1791 = vmatprep.subr.mxu0 0.0
  %1792 = vmatpush1.msra.mxu0 %v1715
  %1793 = vmatprep.subr.mxu0 0.0
  %1794 = vmatpush1.msra.mxu0 %v1714
  %1795 = vmatprep.subr.mxu0 0.0
  %1796 = vmatpush1.msra.mxu0 %v1713
  %1797 = vmatprep.subr.mxu0 0.0
  %1798 = vmatpush2.msra.mxu0 0.0
  %1799 = vmatprep.subr.mxu0 0.0
  %1800 = vmatpush2.msra.mxu0 0.0
  %1801 = vmatprep.subr.mxu0 0.0
  %1802 = vmatpush2.msra.mxu0 0.0
  %1803 = vmatprep.subr.mxu0 0.0
  %1804 = vmatpush2.msra.mxu0 0.0
  %1805 = vmatprep.subr.mxu0 0.0
  %1806 = vmatpush2.msra.mxu0 0.0
  %1807 = vmatprep.subr.mxu0 0.0
  %1808 = vmatpush2.msra.mxu0 0.0
  %1809 = vmatprep.subr.mxu0 0.0
  %1810 = vmatpush2.msra.mxu0 0.0
  %1811 = vmatprep.subr.mxu0 0.0
  %1812 = vmatpush2.msra.mxu0 0.0
  %1813 = vmatprep.subr.mxu0 0.0
  %1814 = vmatpush2.msra.mxu0 0.0
  %1815 = vmatprep.subr.mxu0 0.0
  %1816 = vmatpush2.msra.mxu0 0.0
  %1817 = vmatprep.subr.mxu0 0.0
  %1818 = vmatpush2.msra.mxu0 0.0
  %1819 = vmatprep.subr.mxu0 0.0
  %1820 = vmatpush2.msra.mxu0 0.0
  %1821 = vmatprep.subr.mxu0 0.0
  %1822 = vmatpush2.msra.mxu0 0.0
  %1823 = vmatprep.subr.mxu0 0.0
  %1824 = vmatpush2.msra.mxu0 0.0
  %1825 = vmatprep.subr.mxu0 0.0
  %1826 = vmatpush2.msra.mxu0 0.0
  %1827 = vmatprep.subr.mxu0 0.0
  %1828 = vmatpush2.msra.mxu0 0.0
  %1829 = vmatprep.mubr.f32.mxu0 0.0
  %1830 = vmatmul.mubr.f32.gmra.mxu0 %v1718
  %v1831 = vpop.f32.mrf.mxu0
  %v1832 = vadd.f32 0.0, %v1831
  %v1833 = vpop.f32.mrf.mxu0
  %1834 = vmatprep.mubr.f32.mxu0 0.0
  %1835 = vmatmul.mubr.f32.gmra.mxu0 %v1721
  %v1836 = vpop.f32.mrf.mxu0
  %v1837 = vadd.f32 0.0, %v1836
  %v1838 = vpop.f32.mrf.mxu0
  %1839 = vmatprep.mubr.f32.mxu0 0.0
  %1840 = vmatmul.mubr.f32.gmra.mxu0 %v1724
  %v1841 = vpop.f32.mrf.mxu0
  %v1842 = vadd.f32 0.0, %v1841
  %v1843 = vpop.f32.mrf.mxu0
  %1844 = vmatprep.mubr.f32.mxu0 0.0
  %1845 = vmatmul.mubr.f32.gmra.mxu0 %v1727
  %v1846 = vpop.f32.mrf.mxu0
  %v1847 = vadd.f32 0.0, %v1846
  %v1848 = vpop.f32.mrf.mxu0
  %1849 = vmatprep.mubr.f32.mxu0 0.0
  %1850 = vmatmul.mubr.f32.gmra.mxu0 %v1730
  %v1851 = vpop.f32.mrf.mxu0
  %v1852 = vadd.f32 0.0, %v1851
  %v1853 = vpop.f32.mrf.mxu0
  %1854 = vmatprep.mubr.f32.mxu0 0.0
  %1855 = vmatmul.mubr.f32.gmra.mxu0 %v1733
  %v1856 = vpop.f32.mrf.mxu0
  %v1857 = vadd.f32 0.0, %v1856
  %v1858 = vpop.f32.mrf.mxu0
  %1859 = vmatprep.mubr.f32.mxu0 0.0
  %1860 = vmatmul.mubr.f32.gmra.mxu0 %v1736
  %v1861 = vpop.f32.mrf.mxu0
  %v1862 = vadd.f32 0.0, %v1861
  %v1863 = vpop.f32.mrf.mxu0
  %1864 = vmatprep.mubr.f32.mxu0 0.0
  %1865 = vmatmul.mubr.f32.gmra.mxu0 %v1739
  %v1866 = vpop.f32.mrf.mxu0
  %v1867 = vadd.f32 0.0, %v1866
  %v1868 = vpop.f32.mrf.mxu0
  %1869 = vmatprep.mubr.f32.mxu0 0.0
  %1870 = vmatmul.mubr.f32.gmra.mxu0 %v1742
  %v1871 = vpop.f32.mrf.mxu0
  %v1872 = vadd.f32 0.0, %v1871
  %v1873 = vpop.f32.mrf.mxu0
  %1874 = vmatprep.mubr.f32.mxu0 0.0
  %1875 = vmatmul.mubr.f32.gmra.mxu0 %v1745
  %v1876 = vpop.f32.mrf.mxu0
  %v1877 = vadd.f32 0.0, %v1876
  %v1878 = vpop.f32.mrf.mxu0
  %1879 = vmatprep.mubr.f32.mxu0 0.0
  %1880 = vmatmul.mubr.f32.gmra.mxu0 %v1748
  %v1881 = vpop.f32.mrf.mxu0
  %v1882 = vadd.f32 0.0, %v1881
  %v1883 = vpop.f32.mrf.mxu0
  %1884 = vmatprep.mubr.f32.mxu0 0.0
  %1885 = vmatmul.mubr.f32.gmra.mxu0 %v1751
  %v1886 = vpop.f32.mrf.mxu0
  %v1887 = vadd.f32 0.0, %v1886
  %v1888 = vpop.f32.mrf.mxu0
  %1889 = vmatprep.mubr.f32.mxu0 0.0
  %1890 = vmatmul.mubr.f32.gmra.mxu0 %v1754
  %v1891 = vpop.f32.mrf.mxu0
  %v1892 = vadd.f32 0.0, %v1891
  %v1893 = vpop.f32.mrf.mxu0
  %1894 = vmatprep.mubr.f32.mxu0 0.0
  %1895 = vmatmul.mubr.f32.gmra.mxu0 %v1757
  %v1896 = vpop.f32.mrf.mxu0
  %v1897 = vadd.f32 0.0, %v1896
  %v1898 = vpop.f32.mrf.mxu0
  %1899 = vmatprep.mubr.f32.mxu0 0.0
  %1900 = vmatmul.mubr.f32.gmra.mxu0 %v1760
  %v1901 = vpop.f32.mrf.mxu0
  %v1902 = vadd.f32 0.0, %v1901
  %v1903 = vpop.f32.mrf.mxu0
  %1904 = vmatprep.mubr.f32.mxu0 0.0
  %1905 = vmatmul.mubr.f32.gmra.mxu0 %v1763
  %v1906 = vpop.f32.mrf.mxu0
  %v1907 = vadd.f32 0.0, %v1906
  %v1908 = vpop.f32.mrf.mxu0
  %1909 = vdwg.mxu0
  %v1910 = vadd.f32 %v1680, %v1832
  %v1911 = vadd.f32 %v1681, %v1837
  %v1912 = vadd.f32 %v1682, %v1842
  %v1913 = vadd.f32 %v1683, %v1847
  %v1914 = vadd.f32 %v1684, %v1852
  %v1915 = vadd.f32 %v1685, %v1857
  %v1916 = vadd.f32 %v1686, %v1862
  %v1917 = vadd.f32 %v1687, %v1867
  %v1918 = vadd.f32 %v1688, %v1872
  %v1919 = vadd.f32 %v1689, %v1877
  %v1920 = vadd.f32 %v1690, %v1882
  %v1921 = vadd.f32 %v1691, %v1887
  %v1922 = vadd.f32 %v1692, %v1892
  %v1923 = vadd.f32 %v1693, %v1897
  %v1924 = vadd.f32 %v1694, %v1902
  %v1925 = vadd.f32 %v1695, %v1907
  %v1926 = vld [vmem:[%s1696 + $0x1] sm:$0xff]
  %v1927 = vld [vmem:[%s1696 + $0x11] sm:$0xff]
  %v1928 = vld [vmem:[%s1696 + $0x21] sm:$0xff]
  %v1929 = vld [vmem:[%s1696 + $0x31] sm:$0xff]
  %v1930 = vld [vmem:[%s1696 + $0x41] sm:$0xff]
  %v1931 = vld [vmem:[%s1696 + $0x51] sm:$0xff]
  %v1932 = vld [vmem:[%s1696 + $0x61] sm:$0xff]
  %v1933 = vld [vmem:[%s1696 + $0x71] sm:$0xff]
  %v1934 = vld [vmem:[%s1696 + $0xa1] sm:$0xff]
  %v1935 = vld [vmem:[%s1696 + $0xb1] sm:$0xff]
  %v1936 = vld [vmem:[%s1696 + $0xc1] sm:$0xff]
  %v1937 = vld [vmem:[%s1696 + $0xd1] sm:$0xff]
  %v1938 = vld [vmem:[%s1696 + $0xe1] sm:$0xff]
  %v1939 = vld [vmem:[%s1696 + $0xf1] sm:$0xff]
  %v1940 = vld [vmem:[%s1696 + $0x101] sm:$0xff]
  %v1941 = vld [vmem:[%s1696 + $0x111] sm:$0xff]
  %v1942 = vld [vmem:[%s3 + $0xe0] sm:$0xff]
  %v1943 = vld [vmem:[%s3 + $0xe8] sm:$0xff]
  %v1944 = vld [vmem:[%s3 + $0xf0] sm:$0xff]
  %v1945 = vld [vmem:[%s3 + $0xf8] sm:$0xff]
  %v1947 = vsel %vm293, %v1926, 0
  %v1950 = vsel %vm293, %v1927, 0
  %v1953 = vsel %vm293, %v1928, 0
  %v1956 = vsel %vm293, %v1929, 0
  %v1959 = vsel %vm293, %v1930, 0
  %v1962 = vsel %vm293, %v1931, 0
  %v1965 = vsel %vm293, %v1932, 0
  %v1968 = vsel %vm293, %v1933, 0
  %v1971 = vsel %vm293, %v1934, 0
  %v1974 = vsel %vm293, %v1935, 0
  %v1977 = vsel %vm293, %v1936, 0
  %v1980 = vsel %vm293, %v1937, 0
  %v1983 = vsel %vm293, %v1938, 0
  %v1986 = vsel %vm293, %v1939, 0
  %v1989 = vsel %vm293, %v1940, 0
  %v1992 = vsel %vm293, %v1941, 0
  %1994 = vmatprep.subr.mxu0 0.0
  %1995 = vmatpush1.msra.mxu0 0.0
  %1996 = vmatprep.subr.mxu0 0.0
  %1997 = vmatpush1.msra.mxu0 0.0
  %1998 = vmatprep.subr.mxu0 0.0
  %1999 = vmatpush1.msra.mxu0 0.0
  %2000 = vmatprep.subr.mxu0 0.0
  %2001 = vmatpush1.msra.mxu0 0.0
  %2002 = vmatprep.subr.mxu0 0.0
  %2003 = vmatpush1.msra.mxu0 0.0
  %2004 = vmatprep.subr.mxu0 0.0
  %2005 = vmatpush1.msra.mxu0 0.0
  %2006 = vmatprep.subr.mxu0 0.0
  %2007 = vmatpush1.msra.mxu0 0.0
  %2008 = vmatprep.subr.mxu0 0.0
  %2009 = vmatpush1.msra.mxu0 0.0
  %2010 = vmatprep.subr.mxu0 0.0
  %2011 = vmatpush1.msra.mxu0 0.0
  %2012 = vmatprep.subr.mxu0 0.0
  %2013 = vmatpush1.msra.mxu0 0.0
  %2014 = vmatprep.subr.mxu0 0.0
  %2015 = vmatpush1.msra.mxu0 0.0
  %2016 = vmatprep.subr.mxu0 0.0
  %2017 = vmatpush1.msra.mxu0 0.0
  %2018 = vmatprep.subr.mxu0 0.0
  %2019 = vmatpush1.msra.mxu0 %v1945
  %2020 = vmatprep.subr.mxu0 0.0
  %2021 = vmatpush1.msra.mxu0 %v1944
  %2022 = vmatprep.subr.mxu0 0.0
  %2023 = vmatpush1.msra.mxu0 %v1943
  %2024 = vmatprep.subr.mxu0 0.0
  %2025 = vmatpush1.msra.mxu0 %v1942
  %2026 = vmatprep.subr.mxu0 0.0
  %2027 = vmatpush2.msra.mxu0 0.0
  %2028 = vmatprep.subr.mxu0 0.0
  %2029 = vmatpush2.msra.mxu0 0.0
  %2030 = vmatprep.subr.mxu0 0.0
  %2031 = vmatpush2.msra.mxu0 0.0
  %2032 = vmatprep.subr.mxu0 0.0
  %2033 = vmatpush2.msra.mxu0 0.0
  %2034 = vmatprep.subr.mxu0 0.0
  %2035 = vmatpush2.msra.mxu0 0.0
  %2036 = vmatprep.subr.mxu0 0.0
  %2037 = vmatpush2.msra.mxu0 0.0
  %2038 = vmatprep.subr.mxu0 0.0
  %2039 = vmatpush2.msra.mxu0 0.0
  %2040 = vmatprep.subr.mxu0 0.0
  %2041 = vmatpush2.msra.mxu0 0.0
  %2042 = vmatprep.subr.mxu0 0.0
  %2043 = vmatpush2.msra.mxu0 0.0
  %2044 = vmatprep.subr.mxu0 0.0
  %2045 = vmatpush2.msra.mxu0 0.0
  %2046 = vmatprep.subr.mxu0 0.0
  %2047 = vmatpush2.msra.mxu0 0.0
  %2048 = vmatprep.subr.mxu0 0.0
  %2049 = vmatpush2.msra.mxu0 0.0
  %2050 = vmatprep.subr.mxu0 0.0
  %2051 = vmatpush2.msra.mxu0 0.0
  %2052 = vmatprep.subr.mxu0 0.0
  %2053 = vmatpush2.msra.mxu0 0.0
  %2054 = vmatprep.subr.mxu0 0.0
  %2055 = vmatpush2.msra.mxu0 0.0
  %2056 = vmatprep.subr.mxu0 0.0
  %2057 = vmatpush2.msra.mxu0 0.0
  %2058 = vmatprep.mubr.f32.mxu0 0.0
  %2059 = vmatmul.mubr.f32.gmra.mxu0 %v1947
  %v2060 = vpop.f32.mrf.mxu0
  %v2061 = vadd.f32 0.0, %v2060
  %v2062 = vpop.f32.mrf.mxu0
  %2063 = vmatprep.mubr.f32.mxu0 0.0
  %2064 = vmatmul.mubr.f32.gmra.mxu0 %v1950
  %v2065 = vpop.f32.mrf.mxu0
  %v2066 = vadd.f32 0.0, %v2065
  %v2067 = vpop.f32.mrf.mxu0
  %2068 = vmatprep.mubr.f32.mxu0 0.0
  %2069 = vmatmul.mubr.f32.gmra.mxu0 %v1953
  %v2070 = vpop.f32.mrf.mxu0
  %v2071 = vadd.f32 0.0, %v2070
  %v2072 = vpop.f32.mrf.mxu0
  %2073 = vmatprep.mubr.f32.mxu0 0.0
  %2074 = vmatmul.mubr.f32.gmra.mxu0 %v1956
  %v2075 = vpop.f32.mrf.mxu0
  %v2076 = vadd.f32 0.0, %v2075
  %v2077 = vpop.f32.mrf.mxu0
  %2078 = vmatprep.mubr.f32.mxu0 0.0
  %2079 = vmatmul.mubr.f32.gmra.mxu0 %v1959
  %v2080 = vpop.f32.mrf.mxu0
  %v2081 = vadd.f32 0.0, %v2080
  %v2082 = vpop.f32.mrf.mxu0
  %2083 = vmatprep.mubr.f32.mxu0 0.0
  %2084 = vmatmul.mubr.f32.gmra.mxu0 %v1962
  %v2085 = vpop.f32.mrf.mxu0
  %v2086 = vadd.f32 0.0, %v2085
  %v2087 = vpop.f32.mrf.mxu0
  %2088 = vmatprep.mubr.f32.mxu0 0.0
  %2089 = vmatmul.mubr.f32.gmra.mxu0 %v1965
  %v2090 = vpop.f32.mrf.mxu0
  %v2091 = vadd.f32 0.0, %v2090
  %v2092 = vpop.f32.mrf.mxu0
  %2093 = vmatprep.mubr.f32.mxu0 0.0
  %2094 = vmatmul.mubr.f32.gmra.mxu0 %v1968
  %v2095 = vpop.f32.mrf.mxu0
  %v2096 = vadd.f32 0.0, %v2095
  %v2097 = vpop.f32.mrf.mxu0
  %2098 = vmatprep.mubr.f32.mxu0 0.0
  %2099 = vmatmul.mubr.f32.gmra.mxu0 %v1971
  %v2100 = vpop.f32.mrf.mxu0
  %v2101 = vadd.f32 0.0, %v2100
  %v2102 = vpop.f32.mrf.mxu0
  %2103 = vmatprep.mubr.f32.mxu0 0.0
  %2104 = vmatmul.mubr.f32.gmra.mxu0 %v1974
  %v2105 = vpop.f32.mrf.mxu0
  %v2106 = vadd.f32 0.0, %v2105
  %v2107 = vpop.f32.mrf.mxu0
  %2108 = vmatprep.mubr.f32.mxu0 0.0
  %2109 = vmatmul.mubr.f32.gmra.mxu0 %v1977
  %v2110 = vpop.f32.mrf.mxu0
  %v2111 = vadd.f32 0.0, %v2110
  %v2112 = vpop.f32.mrf.mxu0
  %2113 = vmatprep.mubr.f32.mxu0 0.0
  %2114 = vmatmul.mubr.f32.gmra.mxu0 %v1980
  %v2115 = vpop.f32.mrf.mxu0
  %v2116 = vadd.f32 0.0, %v2115
  %v2117 = vpop.f32.mrf.mxu0
  %2118 = vmatprep.mubr.f32.mxu0 0.0
  %2119 = vmatmul.mubr.f32.gmra.mxu0 %v1983
  %v2120 = vpop.f32.mrf.mxu0
  %v2121 = vadd.f32 0.0, %v2120
  %v2122 = vpop.f32.mrf.mxu0
  %2123 = vmatprep.mubr.f32.mxu0 0.0
  %2124 = vmatmul.mubr.f32.gmra.mxu0 %v1986
  %v2125 = vpop.f32.mrf.mxu0
  %v2126 = vadd.f32 0.0, %v2125
  %v2127 = vpop.f32.mrf.mxu0
  %2128 = vmatprep.mubr.f32.mxu0 0.0
  %2129 = vmatmul.mubr.f32.gmra.mxu0 %v1989
  %v2130 = vpop.f32.mrf.mxu0
  %v2131 = vadd.f32 0.0, %v2130
  %v2132 = vpop.f32.mrf.mxu0
  %2133 = vmatprep.mubr.f32.mxu0 0.0
  %2134 = vmatmul.mubr.f32.gmra.mxu0 %v1992
  %v2135 = vpop.f32.mrf.mxu0
  %v2136 = vadd.f32 0.0, %v2135
  %v2137 = vpop.f32.mrf.mxu0
  %2138 = vdwg.mxu0
  %v2139 = vadd.f32 %v1910, %v2061
  %v2140 = vadd.f32 %v1911, %v2066
  %v2141 = vadd.f32 %v1912, %v2071
  %v2142 = vadd.f32 %v1913, %v2076
  %v2143 = vadd.f32 %v1914, %v2081
  %v2144 = vadd.f32 %v1915, %v2086
  %v2145 = vadd.f32 %v1916, %v2091
  %v2146 = vadd.f32 %v1917, %v2096
  %v2147 = vadd.f32 %v1918, %v2101
  %v2148 = vadd.f32 %v1919, %v2106
  %v2149 = vadd.f32 %v1920, %v2111
  %v2150 = vadd.f32 %v1921, %v2116
  %v2151 = vadd.f32 %v1922, %v2121
  %v2152 = vadd.f32 %v1923, %v2126
  %v2153 = vadd.f32 %v1924, %v2131
  %v2154 = vadd.f32 %v1925, %v2136
  %v2155 = vld [vmem:[%s1696 + $0x2] sm:$0xff]
  %v2156 = vld [vmem:[%s1696 + $0x12] sm:$0xff]
  %v2157 = vld [vmem:[%s1696 + $0x22] sm:$0xff]
  %v2158 = vld [vmem:[%s1696 + $0x32] sm:$0xff]
  %v2159 = vld [vmem:[%s1696 + $0x42] sm:$0xff]
  %v2160 = vld [vmem:[%s1696 + $0x52] sm:$0xff]
  %v2161 = vld [vmem:[%s1696 + $0x62] sm:$0xff]
  %v2162 = vld [vmem:[%s1696 + $0x72] sm:$0xff]
  %v2163 = vld [vmem:[%s1696 + $0xa2] sm:$0xff]
  %v2164 = vld [vmem:[%s1696 + $0xb2] sm:$0xff]
  %v2165 = vld [vmem:[%s1696 + $0xc2] sm:$0xff]
  %v2166 = vld [vmem:[%s1696 + $0xd2] sm:$0xff]
  %v2167 = vld [vmem:[%s1696 + $0xe2] sm:$0xff]
  %v2168 = vld [vmem:[%s1696 + $0xf2] sm:$0xff]
  %v2169 = vld [vmem:[%s1696 + $0x102] sm:$0xff]
  %v2170 = vld [vmem:[%s1696 + $0x112] sm:$0xff]
  %v2171 = vld [vmem:[%s3 + $0x100] sm:$0xff]
  %v2172 = vld [vmem:[%s3 + $0x108] sm:$0xff]
  %v2173 = vld [vmem:[%s3 + $0x110] sm:$0xff]
  %v2174 = vld [vmem:[%s3 + $0x118] sm:$0xff]
  %v2176 = vsel %vm293, %v2155, 0
  %v2179 = vsel %vm293, %v2156, 0
  %v2182 = vsel %vm293, %v2157, 0
  %v2185 = vsel %vm293, %v2158, 0
  %v2188 = vsel %vm293, %v2159, 0
  %v2191 = vsel %vm293, %v2160, 0
  %v2194 = vsel %vm293, %v2161, 0
  %v2197 = vsel %vm293, %v2162, 0
  %v2200 = vsel %vm293, %v2163, 0
  %v2203 = vsel %vm293, %v2164, 0
  %v2206 = vsel %vm293, %v2165, 0
  %v2209 = vsel %vm293, %v2166, 0
  %v2212 = vsel %vm293, %v2167, 0
  %v2215 = vsel %vm293, %v2168, 0
  %v2218 = vsel %vm293, %v2169, 0
  %v2221 = vsel %vm293, %v2170, 0
  %2223 = vmatprep.subr.mxu0 0.0
  %2224 = vmatpush1.msra.mxu0 0.0
  %2225 = vmatprep.subr.mxu0 0.0
  %2226 = vmatpush1.msra.mxu0 0.0
  %2227 = vmatprep.subr.mxu0 0.0
  %2228 = vmatpush1.msra.mxu0 0.0
  %2229 = vmatprep.subr.mxu0 0.0
  %2230 = vmatpush1.msra.mxu0 0.0
  %2231 = vmatprep.subr.mxu0 0.0
  %2232 = vmatpush1.msra.mxu0 0.0
  %2233 = vmatprep.subr.mxu0 0.0
  %2234 = vmatpush1.msra.mxu0 0.0
  %2235 = vmatprep.subr.mxu0 0.0
  %2236 = vmatpush1.msra.mxu0 0.0
  %2237 = vmatprep.subr.mxu0 0.0
  %2238 = vmatpush1.msra.mxu0 0.0
  %2239 = vmatprep.subr.mxu0 0.0
  %2240 = vmatpush1.msra.mxu0 0.0
  %2241 = vmatprep.subr.mxu0 0.0
  %2242 = vmatpush1.msra.mxu0 0.0
  %2243 = vmatprep.subr.mxu0 0.0
  %2244 = vmatpush1.msra.mxu0 0.0
  %2245 = vmatprep.subr.mxu0 0.0
  %2246 = vmatpush1.msra.mxu0 0.0
  %2247 = vmatprep.subr.mxu0 0.0
  %2248 = vmatpush1.msra.mxu0 %v2174
  %2249 = vmatprep.subr.mxu0 0.0
  %2250 = vmatpush1.msra.mxu0 %v2173
  %2251 = vmatprep.subr.mxu0 0.0
  %2252 = vmatpush1.msra.mxu0 %v2172
  %2253 = vmatprep.subr.mxu0 0.0
  %2254 = vmatpush1.msra.mxu0 %v2171
  %2255 = vmatprep.subr.mxu0 0.0
  %2256 = vmatpush2.msra.mxu0 0.0
  %2257 = vmatprep.subr.mxu0 0.0
  %2258 = vmatpush2.msra.mxu0 0.0
  %2259 = vmatprep.subr.mxu0 0.0
  %2260 = vmatpush2.msra.mxu0 0.0
  %2261 = vmatprep.subr.mxu0 0.0
  %2262 = vmatpush2.msra.mxu0 0.0
  %2263 = vmatprep.subr.mxu0 0.0
  %2264 = vmatpush2.msra.mxu0 0.0
  %2265 = vmatprep.subr.mxu0 0.0
  %2266 = vmatpush2.msra.mxu0 0.0
  %2267 = vmatprep.subr.mxu0 0.0
  %2268 = vmatpush2.msra.mxu0 0.0
  %2269 = vmatprep.subr.mxu0 0.0
  %2270 = vmatpush2.msra.mxu0 0.0
  %2271 = vmatprep.subr.mxu0 0.0
  %2272 = vmatpush2.msra.mxu0 0.0
  %2273 = vmatprep.subr.mxu0 0.0
  %2274 = vmatpush2.msra.mxu0 0.0
  %2275 = vmatprep.subr.mxu0 0.0
  %2276 = vmatpush2.msra.mxu0 0.0
  %2277 = vmatprep.subr.mxu0 0.0
  %2278 = vmatpush2.msra.mxu0 0.0
  %2279 = vmatprep.subr.mxu0 0.0
  %2280 = vmatpush2.msra.mxu0 0.0
  %2281 = vmatprep.subr.mxu0 0.0
  %2282 = vmatpush2.msra.mxu0 0.0
  %2283 = vmatprep.subr.mxu0 0.0
  %2284 = vmatpush2.msra.mxu0 0.0
  %2285 = vmatprep.subr.mxu0 0.0
  %2286 = vmatpush2.msra.mxu0 0.0
  %2287 = vmatprep.mubr.f32.mxu0 0.0
  %2288 = vmatmul.mubr.f32.gmra.mxu0 %v2176
  %v2289 = vpop.f32.mrf.mxu0
  %v2290 = vadd.f32 0.0, %v2289
  %v2291 = vpop.f32.mrf.mxu0
  %2292 = vmatprep.mubr.f32.mxu0 0.0
  %2293 = vmatmul.mubr.f32.gmra.mxu0 %v2179
  %v2294 = vpop.f32.mrf.mxu0
  %v2295 = vadd.f32 0.0, %v2294
  %v2296 = vpop.f32.mrf.mxu0
  %2297 = vmatprep.mubr.f32.mxu0 0.0
  %2298 = vmatmul.mubr.f32.gmra.mxu0 %v2182
  %v2299 = vpop.f32.mrf.mxu0
  %v2300 = vadd.f32 0.0, %v2299
  %v2301 = vpop.f32.mrf.mxu0
  %2302 = vmatprep.mubr.f32.mxu0 0.0
  %2303 = vmatmul.mubr.f32.gmra.mxu0 %v2185
  %v2304 = vpop.f32.mrf.mxu0
  %v2305 = vadd.f32 0.0, %v2304
  %v2306 = vpop.f32.mrf.mxu0
  %2307 = vmatprep.mubr.f32.mxu0 0.0
  %2308 = vmatmul.mubr.f32.gmra.mxu0 %v2188
  %v2309 = vpop.f32.mrf.mxu0
  %v2310 = vadd.f32 0.0, %v2309
  %v2311 = vpop.f32.mrf.mxu0
  %2312 = vmatprep.mubr.f32.mxu0 0.0
  %2313 = vmatmul.mubr.f32.gmra.mxu0 %v2191
  %v2314 = vpop.f32.mrf.mxu0
  %v2315 = vadd.f32 0.0, %v2314
  %v2316 = vpop.f32.mrf.mxu0
  %2317 = vmatprep.mubr.f32.mxu0 0.0
  %2318 = vmatmul.mubr.f32.gmra.mxu0 %v2194
  %v2319 = vpop.f32.mrf.mxu0
  %v2320 = vadd.f32 0.0, %v2319
  %v2321 = vpop.f32.mrf.mxu0
  %2322 = vmatprep.mubr.f32.mxu0 0.0
  %2323 = vmatmul.mubr.f32.gmra.mxu0 %v2197
  %v2324 = vpop.f32.mrf.mxu0
  %v2325 = vadd.f32 0.0, %v2324
  %v2326 = vpop.f32.mrf.mxu0
  %2327 = vmatprep.mubr.f32.mxu0 0.0
  %2328 = vmatmul.mubr.f32.gmra.mxu0 %v2200
  %v2329 = vpop.f32.mrf.mxu0
  %v2330 = vadd.f32 0.0, %v2329
  %v2331 = vpop.f32.mrf.mxu0
  %2332 = vmatprep.mubr.f32.mxu0 0.0
  %2333 = vmatmul.mubr.f32.gmra.mxu0 %v2203
  %v2334 = vpop.f32.mrf.mxu0
  %v2335 = vadd.f32 0.0, %v2334
  %v2336 = vpop.f32.mrf.mxu0
  %2337 = vmatprep.mubr.f32.mxu0 0.0
  %2338 = vmatmul.mubr.f32.gmra.mxu0 %v2206
  %v2339 = vpop.f32.mrf.mxu0
  %v2340 = vadd.f32 0.0, %v2339
  %v2341 = vpop.f32.mrf.mxu0
  %2342 = vmatprep.mubr.f32.mxu0 0.0
  %2343 = vmatmul.mubr.f32.gmra.mxu0 %v2209
  %v2344 = vpop.f32.mrf.mxu0
  %v2345 = vadd.f32 0.0, %v2344
  %v2346 = vpop.f32.mrf.mxu0
  %2347 = vmatprep.mubr.f32.mxu0 0.0
  %2348 = vmatmul.mubr.f32.gmra.mxu0 %v2212
  %v2349 = vpop.f32.mrf.mxu0
  %v2350 = vadd.f32 0.0, %v2349
  %v2351 = vpop.f32.mrf.mxu0
  %2352 = vmatprep.mubr.f32.mxu0 0.0
  %2353 = vmatmul.mubr.f32.gmra.mxu0 %v2215
  %v2354 = vpop.f32.mrf.mxu0
  %v2355 = vadd.f32 0.0, %v2354
  %v2356 = vpop.f32.mrf.mxu0
  %2357 = vmatprep.mubr.f32.mxu0 0.0
  %2358 = vmatmul.mubr.f32.gmra.mxu0 %v2218
  %v2359 = vpop.f32.mrf.mxu0
  %v2360 = vadd.f32 0.0, %v2359
  %v2361 = vpop.f32.mrf.mxu0
  %2362 = vmatprep.mubr.f32.mxu0 0.0
  %2363 = vmatmul.mubr.f32.gmra.mxu0 %v2221
  %v2364 = vpop.f32.mrf.mxu0
  %v2365 = vadd.f32 0.0, %v2364
  %v2366 = vpop.f32.mrf.mxu0
  %2367 = vdwg.mxu0
  %v2368 = vadd.f32 %v2139, %v2290
  %v2369 = vadd.f32 %v2140, %v2295
  %v2370 = vadd.f32 %v2141, %v2300
  %v2371 = vadd.f32 %v2142, %v2305
  %v2372 = vadd.f32 %v2143, %v2310
  %v2373 = vadd.f32 %v2144, %v2315
  %v2374 = vadd.f32 %v2145, %v2320
  %v2375 = vadd.f32 %v2146, %v2325
  %v2376 = vadd.f32 %v2147, %v2330
  %v2377 = vadd.f32 %v2148, %v2335
  %v2378 = vadd.f32 %v2149, %v2340
  %v2379 = vadd.f32 %v2150, %v2345
  %v2380 = vadd.f32 %v2151, %v2350
  %v2381 = vadd.f32 %v2152, %v2355
  %v2382 = vadd.f32 %v2153, %v2360
  %v2383 = vadd.f32 %v2154, %v2365
  %v2384 = vld [vmem:[%s4] sm:$0x1]
  %v2386 = vlaneseq
  %v2387 = vshrl.u32 %v2386, 7
  %v2388 = vsub.s32 0, %v2387
  %v2389 = vrot.slane %v2384, %v2388
  %v2391 = vadd.f32 %v2368, %v2389
  %v2392 = vadd.f32 %v2369, %v2389
  %v2393 = vadd.f32 %v2370, %v2389
  %v2394 = vadd.f32 %v2371, %v2389
  %v2395 = vadd.f32 %v2372, %v2389
  %v2396 = vadd.f32 %v2373, %v2389
  %v2397 = vadd.f32 %v2374, %v2389
  %v2398 = vadd.f32 %v2375, %v2389
  %v2399 = vadd.f32 %v2376, %v2389
  %v2400 = vadd.f32 %v2377, %v2389
  %v2401 = vadd.f32 %v2378, %v2389
  %v2402 = vadd.f32 %v2379, %v2389
  %v2403 = vadd.f32 %v2380, %v2389
  %v2404 = vadd.f32 %v2381, %v2389
  %v2405 = vadd.f32 %v2382, %v2389
  %v2406 = vadd.f32 %v2383, %v2389
  %v2407 = vmax.f32 %v2391, 0.0
  %v2408 = vmax.f32 %v2392, 0.0
  %v2409 = vmax.f32 %v2393, 0.0
  %v2410 = vmax.f32 %v2394, 0.0
  %v2411 = vmax.f32 %v2395, 0.0
  %v2412 = vmax.f32 %v2396, 0.0
  %v2413 = vmax.f32 %v2397, 0.0
  %v2414 = vmax.f32 %v2398, 0.0
  %v2415 = vmax.f32 %v2399, 0.0
  %v2416 = vmax.f32 %v2400, 0.0
  %v2417 = vmax.f32 %v2401, 0.0
  %v2418 = vmax.f32 %v2402, 0.0
  %v2419 = vmax.f32 %v2403, 0.0
  %v2420 = vmax.f32 %v2404, 0.0
  %v2421 = vmax.f32 %v2405, 0.0
  %v2422 = vmax.f32 %v2406, 0.0
  %vm2423 = vcmask 523264
  %2424 = vst.msk [vmem:[#allocation3] sm:$0xff] %vm2423, 0.0
  %vm2425 = vcmask 517120
  %2426 = vst.msk [vmem:[#allocation3 + $0x8] sm:$0x3] %vm2425, 0.0
  %2427 = vst.msk [vmem:[#allocation3 + $0xa0] sm:$0xff] %vm2423, 0.0
  %2428 = vst.msk [vmem:[#allocation3 + $0xa8] sm:$0x3] %vm2425, 0.0
  %s2429 = scalar_lea.vmem [#allocation3], 144
  %2430 = vst.msk [vmem:[%s2429] sm:$0xff] %vm2423, 0.0
  %2431 = vst.msk [vmem:[%s2429 + $0x8] sm:$0x3] %vm2425, 0.0
  %2432 = vst.msk [vmem:[%s2429 + $0xa0] sm:$0xff] %vm2423, 0.0
  %2433 = vst.msk [vmem:[%s2429 + $0xa8] sm:$0x3] %vm2425, 0.0
  %s2434 = scalar_lea.vmem [#allocation3], 16
  %vm2435 = vcmask 516096
  %2436 = vst.msk [vmem:[%s2434] sm:$0x1] %vm2435, 0.0
  %2437 = vst.msk [vmem:[%s2434 + $0x10] sm:$0x1] %vm2435, 0.0
  %2438 = vst.msk [vmem:[%s2434 + $0x20] sm:$0x1] %vm2435, 0.0
  %2439 = vst.msk [vmem:[%s2434 + $0x30] sm:$0x1] %vm2435, 0.0
  %2440 = vst.msk [vmem:[%s2434 + $0x40] sm:$0x1] %vm2435, 0.0
  %2441 = vst.msk [vmem:[%s2434 + $0x50] sm:$0x1] %vm2435, 0.0
  %2442 = vst.msk [vmem:[%s2434 + $0x60] sm:$0x1] %vm2435, 0.0
  %2443 = vst.msk [vmem:[%s2434 + $0x70] sm:$0x1] %vm2435, 0.0
  %2444 = vst.msk [vmem:[%s2434 + $0xa0] sm:$0x1] %vm2435, 0.0
  %2445 = vst.msk [vmem:[%s2434 + $0xb0] sm:$0x1] %vm2435, 0.0
  %2446 = vst.msk [vmem:[%s2434 + $0xc0] sm:$0x1] %vm2435, 0.0
  %2447 = vst.msk [vmem:[%s2434 + $0xd0] sm:$0x1] %vm2435, 0.0
  %2448 = vst.msk [vmem:[%s2434 + $0xe0] sm:$0x1] %vm2435, 0.0
  %2449 = vst.msk [vmem:[%s2434 + $0xf0] sm:$0x1] %vm2435, 0.0
  %2450 = vst.msk [vmem:[%s2434 + $0x100] sm:$0x1] %vm2435, 0.0
  %2451 = vst.msk [vmem:[%s2434 + $0x110] sm:$0x1] %vm2435, 0.0
  %2452 = vst.msk [vmem:[%s2434 + $0x9] sm:$0x1] %vm2435, 0.0
  %2453 = vst.msk [vmem:[%s2434 + $0x19] sm:$0x1] %vm2435, 0.0
  %2454 = vst.msk [vmem:[%s2434 + $0x29] sm:$0x1] %vm2435, 0.0
  %2455 = vst.msk [vmem:[%s2434 + $0x39] sm:$0x1] %vm2435, 0.0
  %2456 = vst.msk [vmem:[%s2434 + $0x49] sm:$0x1] %vm2435, 0.0
  %2457 = vst.msk [vmem:[%s2434 + $0x59] sm:$0x1] %vm2435, 0.0
  %2458 = vst.msk [vmem:[%s2434 + $0x69] sm:$0x1] %vm2435, 0.0
  %2459 = vst.msk [vmem:[%s2434 + $0x79] sm:$0x1] %vm2435, 0.0
  %2460 = vst.msk [vmem:[%s2434 + $0xa9] sm:$0x1] %vm2435, 0.0
  %2461 = vst.msk [vmem:[%s2434 + $0xb9] sm:$0x1] %vm2435, 0.0
  %2462 = vst.msk [vmem:[%s2434 + $0xc9] sm:$0x1] %vm2435, 0.0
  %2463 = vst.msk [vmem:[%s2434 + $0xd9] sm:$0x1] %vm2435, 0.0
  %2464 = vst.msk [vmem:[%s2434 + $0xe9] sm:$0x1] %vm2435, 0.0
  %2465 = vst.msk [vmem:[%s2434 + $0xf9] sm:$0x1] %vm2435, 0.0
  %2466 = vst.msk [vmem:[%s2434 + $0x109] sm:$0x1] %vm2435, 0.0
  %2467 = vst.msk [vmem:[%s2434 + $0x119] sm:$0x1] %vm2435, 0.0
  %2468 = vst.msk [vmem:[%s2434 + $0x1] sm:$0xff] %vm2423, %v2407
  %2469 = vst.msk [vmem:[%s2434 + $0x11] sm:$0xff] %vm2423, %v2408
  %2470 = vst.msk [vmem:[%s2434 + $0x21] sm:$0xff] %vm2423, %v2409
  %2471 = vst.msk [vmem:[%s2434 + $0x31] sm:$0xff] %vm2423, %v2410
  %2472 = vst.msk [vmem:[%s2434 + $0x41] sm:$0xff] %vm2423, %v2411
  %2473 = vst.msk [vmem:[%s2434 + $0x51] sm:$0xff] %vm2423, %v2412
  %2474 = vst.msk [vmem:[%s2434 + $0x61] sm:$0xff] %vm2423, %v2413
  %2475 = vst.msk [vmem:[%s2434 + $0x71] sm:$0xff] %vm2423, %v2414
  %2476 = vst.msk [vmem:[%s2434 + $0xa1] sm:$0xff] %vm2423, %v2415
  %2477 = vst.msk [vmem:[%s2434 + $0xb1] sm:$0xff] %vm2423, %v2416
  %2478 = vst.msk [vmem:[%s2434 + $0xc1] sm:$0xff] %vm2423, %v2417
  %2479 = vst.msk [vmem:[%s2434 + $0xd1] sm:$0xff] %vm2423, %v2418
  %2480 = vst.msk [vmem:[%s2434 + $0xe1] sm:$0xff] %vm2423, %v2419
  %2481 = vst.msk [vmem:[%s2434 + $0xf1] sm:$0xff] %vm2423, %v2420
  %2482 = vst.msk [vmem:[%s2434 + $0x101] sm:$0xff] %vm2423, %v2421
  %2483 = vst.msk [vmem:[%s2434 + $0x111] sm:$0xff] %vm2423, %v2422
  %v2484 = vld [vmem:[#allocation3] sm:$0xff]
  %v2485 = vld [vmem:[#allocation3 + $0x10] sm:$0xff]
  %v2486 = vld [vmem:[#allocation3 + $0x20] sm:$0xff]
  %v2487 = vld [vmem:[#allocation3 + $0x30] sm:$0xff]
  %v2488 = vld [vmem:[#allocation3 + $0x40] sm:$0xff]
  %v2489 = vld [vmem:[#allocation3 + $0x50] sm:$0xff]
  %v2490 = vld [vmem:[#allocation3 + $0x60] sm:$0xff]
  %v2491 = vld [vmem:[#allocation3 + $0x70] sm:$0xff]
  %v2492 = vld [vmem:[#allocation3 + $0xa0] sm:$0xff]
  %v2493 = vld [vmem:[#allocation3 + $0xb0] sm:$0xff]
  %v2494 = vld [vmem:[#allocation3 + $0xc0] sm:$0xff]
  %v2495 = vld [vmem:[#allocation3 + $0xd0] sm:$0xff]
  %v2496 = vld [vmem:[#allocation3 + $0xe0] sm:$0xff]
  %v2497 = vld [vmem:[#allocation3 + $0xf0] sm:$0xff]
  %v2498 = vld [vmem:[#allocation3 + $0x100] sm:$0xff]
  %v2499 = vld [vmem:[#allocation3 + $0x110] sm:$0xff]
  %v2500 = vld [vmem:[%s5] sm:$0xff]
  %v2501 = vld [vmem:[%s5 + $0x8] sm:$0xff]
  %v2502 = vld [vmem:[%s5 + $0x10] sm:$0xff]
  %v2503 = vld [vmem:[%s5 + $0x18] sm:$0xff]
  %v2504 = vld [vmem:[%s5 + $0x20] sm:$0xff]
  %v2505 = vld [vmem:[%s5 + $0x28] sm:$0xff]
  %v2506 = vld [vmem:[%s5 + $0x30] sm:$0xff]
  %v2507 = vld [vmem:[%s5 + $0x38] sm:$0xff]
  %v2508 = vld [vmem:[#allocation3 + $0x1] sm:$0xff]
  %v2509 = vld [vmem:[#allocation3 + $0x11] sm:$0xff]
  %v2510 = vld [vmem:[#allocation3 + $0x21] sm:$0xff]
  %v2511 = vld [vmem:[#allocation3 + $0x31] sm:$0xff]
  %v2512 = vld [vmem:[#allocation3 + $0x41] sm:$0xff]
  %v2513 = vld [vmem:[#allocation3 + $0x51] sm:$0xff]
  %v2514 = vld [vmem:[#allocation3 + $0x61] sm:$0xff]
  %v2515 = vld [vmem:[#allocation3 + $0x71] sm:$0xff]
  %v2516 = vld [vmem:[#allocation3 + $0xa1] sm:$0xff]
  %v2517 = vld [vmem:[#allocation3 + $0xb1] sm:$0xff]
  %v2518 = vld [vmem:[#allocation3 + $0xc1] sm:$0xff]
  %v2519 = vld [vmem:[#allocation3 + $0xd1] sm:$0xff]
  %v2520 = vld [vmem:[#allocation3 + $0xe1] sm:$0xff]
  %v2521 = vld [vmem:[#allocation3 + $0xf1] sm:$0xff]
  %v2522 = vld [vmem:[#allocation3 + $0x101] sm:$0xff]
  %v2523 = vld [vmem:[#allocation3 + $0x111] sm:$0xff]
  %v2524 = vld [vmem:[%s5 + $0x40] sm:$0xff]
  %v2525 = vld [vmem:[%s5 + $0x48] sm:$0xff]
  %v2526 = vld [vmem:[%s5 + $0x50] sm:$0xff]
  %v2527 = vld [vmem:[%s5 + $0x58] sm:$0xff]
  %v2528 = vld [vmem:[%s5 + $0x60] sm:$0xff]
  %v2529 = vld [vmem:[%s5 + $0x68] sm:$0xff]
  %v2530 = vld [vmem:[%s5 + $0x70] sm:$0xff]
  %v2531 = vld [vmem:[%s5 + $0x78] sm:$0xff]
  %v2533 = vsel %vm2423, %v2508, 0
  %v2536 = vsel %vm2423, %v2509, 0
  %v2539 = vsel %vm2423, %v2510, 0
  %v2542 = vsel %vm2423, %v2511, 0
  %v2545 = vsel %vm2423, %v2512, 0
  %v2548 = vsel %vm2423, %v2513, 0
  %v2551 = vsel %vm2423, %v2514, 0
  %v2554 = vsel %vm2423, %v2515, 0
  %v2557 = vsel %vm2423, %v2516, 0
  %v2560 = vsel %vm2423, %v2517, 0
  %v2563 = vsel %vm2423, %v2518, 0
  %v2566 = vsel %vm2423, %v2519, 0
  %v2569 = vsel %vm2423, %v2520, 0
  %v2572 = vsel %vm2423, %v2521, 0
  %v2575 = vsel %vm2423, %v2522, 0
  %v2578 = vsel %vm2423, %v2523, 0
  %2580 = vmatprep.subr.mxu0 0.0
  %2581 = vmatpush1.msra.mxu0 0.0
  %2582 = vmatprep.subr.mxu0 0.0
  %2583 = vmatpush1.msra.mxu0 0.0
  %2584 = vmatprep.subr.mxu0 0.0
  %2585 = vmatpush1.msra.mxu0 0.0
  %2586 = vmatprep.subr.mxu0 0.0
  %2587 = vmatpush1.msra.mxu0 0.0
  %2588 = vmatprep.subr.mxu0 0.0
  %2589 = vmatpush1.msra.mxu0 0.0
  %2590 = vmatprep.subr.mxu0 0.0
  %2591 = vmatpush1.msra.mxu0 0.0
  %2592 = vmatprep.subr.mxu0 0.0
  %2593 = vmatpush1.msra.mxu0 0.0
  %2594 = vmatprep.subr.mxu0 0.0
  %2595 = vmatpush1.msra.mxu0 0.0
  %2596 = vmatprep.subr.mxu0 0.0
  %2597 = vmatpush1.msra.mxu0 %v2531
  %2598 = vmatprep.subr.mxu0 0.0
  %2599 = vmatpush1.msra.mxu0 %v2530
  %2600 = vmatprep.subr.mxu0 0.0
  %2601 = vmatpush1.msra.mxu0 %v2529
  %2602 = vmatprep.subr.mxu0 0.0
  %2603 = vmatpush1.msra.mxu0 %v2528
  %2604 = vmatprep.subr.mxu0 0.0
  %2605 = vmatpush1.msra.mxu0 %v2527
  %2606 = vmatprep.subr.mxu0 0.0
  %2607 = vmatpush1.msra.mxu0 %v2526
  %2608 = vmatprep.subr.mxu0 0.0
  %2609 = vmatpush1.msra.mxu0 %v2525
  %2610 = vmatprep.subr.mxu0 0.0
  %2611 = vmatpush1.msra.mxu0 %v2524
  %2612 = vmatprep.subr.mxu0 0.0
  %2613 = vmatpush2.msra.mxu0 0.0
  %2614 = vmatprep.subr.mxu0 0.0
  %2615 = vmatpush2.msra.mxu0 0.0
  %2616 = vmatprep.subr.mxu0 0.0
  %2617 = vmatpush2.msra.mxu0 0.0
  %2618 = vmatprep.subr.mxu0 0.0
  %2619 = vmatpush2.msra.mxu0 0.0
  %2620 = vmatprep.subr.mxu0 0.0
  %2621 = vmatpush2.msra.mxu0 0.0
  %2622 = vmatprep.subr.mxu0 0.0
  %2623 = vmatpush2.msra.mxu0 0.0
  %2624 = vmatprep.subr.mxu0 0.0
  %2625 = vmatpush2.msra.mxu0 0.0
  %2626 = vmatprep.subr.mxu0 0.0
  %2627 = vmatpush2.msra.mxu0 0.0
  %2628 = vmatprep.subr.mxu0 0.0
  %2629 = vmatpush2.msra.mxu0 0.0
  %2630 = vmatprep.subr.mxu0 0.0
  %2631 = vmatpush2.msra.mxu0 0.0
  %2632 = vmatprep.subr.mxu0 0.0
  %2633 = vmatpush2.msra.mxu0 0.0
  %2634 = vmatprep.subr.mxu0 0.0
  %2635 = vmatpush2.msra.mxu0 0.0
  %2636 = vmatprep.subr.mxu0 0.0
  %2637 = vmatpush2.msra.mxu0 0.0
  %2638 = vmatprep.subr.mxu0 0.0
  %2639 = vmatpush2.msra.mxu0 0.0
  %2640 = vmatprep.subr.mxu0 0.0
  %2641 = vmatpush2.msra.mxu0 0.0
  %2642 = vmatprep.subr.mxu0 0.0
  %2643 = vmatpush2.msra.mxu0 0.0
  %2644 = vmatprep.mubr.f32.mxu0 0.0
  %2645 = vmatmul.mubr.f32.gmra.mxu0 %v2533
  %v2646 = vpop.f32.mrf.mxu0
  %v2647 = vadd.f32 0.0, %v2646
  %v2648 = vpop.f32.mrf.mxu0
  %2649 = vmatprep.mubr.f32.mxu0 0.0
  %2650 = vmatmul.mubr.f32.gmra.mxu0 %v2536
  %v2651 = vpop.f32.mrf.mxu0
  %v2652 = vadd.f32 0.0, %v2651
  %v2653 = vpop.f32.mrf.mxu0
  %2654 = vmatprep.mubr.f32.mxu0 0.0
  %2655 = vmatmul.mubr.f32.gmra.mxu0 %v2539
  %v2656 = vpop.f32.mrf.mxu0
  %v2657 = vadd.f32 0.0, %v2656
  %v2658 = vpop.f32.mrf.mxu0
  %2659 = vmatprep.mubr.f32.mxu0 0.0
  %2660 = vmatmul.mubr.f32.gmra.mxu0 %v2542
  %v2661 = vpop.f32.mrf.mxu0
  %v2662 = vadd.f32 0.0, %v2661
  %v2663 = vpop.f32.mrf.mxu0
  %2664 = vmatprep.mubr.f32.mxu0 0.0
  %2665 = vmatmul.mubr.f32.gmra.mxu0 %v2545
  %v2666 = vpop.f32.mrf.mxu0
  %v2667 = vadd.f32 0.0, %v2666
  %v2668 = vpop.f32.mrf.mxu0
  %2669 = vmatprep.mubr.f32.mxu0 0.0
  %2670 = vmatmul.mubr.f32.gmra.mxu0 %v2548
  %v2671 = vpop.f32.mrf.mxu0
  %v2672 = vadd.f32 0.0, %v2671
  %v2673 = vpop.f32.mrf.mxu0
  %2674 = vmatprep.mubr.f32.mxu0 0.0
  %2675 = vmatmul.mubr.f32.gmra.mxu0 %v2551
  %v2676 = vpop.f32.mrf.mxu0
  %v2677 = vadd.f32 0.0, %v2676
  %v2678 = vpop.f32.mrf.mxu0
  %2679 = vmatprep.mubr.f32.mxu0 0.0
  %2680 = vmatmul.mubr.f32.gmra.mxu0 %v2554
  %v2681 = vpop.f32.mrf.mxu0
  %v2682 = vadd.f32 0.0, %v2681
  %v2683 = vpop.f32.mrf.mxu0
  %2684 = vmatprep.mubr.f32.mxu0 0.0
  %2685 = vmatmul.mubr.f32.gmra.mxu0 %v2557
  %v2686 = vpop.f32.mrf.mxu0
  %v2687 = vadd.f32 0.0, %v2686
  %v2688 = vpop.f32.mrf.mxu0
  %2689 = vmatprep.mubr.f32.mxu0 0.0
  %2690 = vmatmul.mubr.f32.gmra.mxu0 %v2560
  %v2691 = vpop.f32.mrf.mxu0
  %v2692 = vadd.f32 0.0, %v2691
  %v2693 = vpop.f32.mrf.mxu0
  %2694 = vmatprep.mubr.f32.mxu0 0.0
  %2695 = vmatmul.mubr.f32.gmra.mxu0 %v2563
  %v2696 = vpop.f32.mrf.mxu0
  %v2697 = vadd.f32 0.0, %v2696
  %v2698 = vpop.f32.mrf.mxu0
  %2699 = vmatprep.mubr.f32.mxu0 0.0
  %2700 = vmatmul.mubr.f32.gmra.mxu0 %v2566
  %v2701 = vpop.f32.mrf.mxu0
  %v2702 = vadd.f32 0.0, %v2701
  %v2703 = vpop.f32.mrf.mxu0
  %2704 = vmatprep.mubr.f32.mxu0 0.0
  %2705 = vmatmul.mubr.f32.gmra.mxu0 %v2569
  %v2706 = vpop.f32.mrf.mxu0
  %v2707 = vadd.f32 0.0, %v2706
  %v2708 = vpop.f32.mrf.mxu0
  %2709 = vmatprep.mubr.f32.mxu0 0.0
  %2710 = vmatmul.mubr.f32.gmra.mxu0 %v2572
  %v2711 = vpop.f32.mrf.mxu0
  %v2712 = vadd.f32 0.0, %v2711
  %v2713 = vpop.f32.mrf.mxu0
  %2714 = vmatprep.mubr.f32.mxu0 0.0
  %2715 = vmatmul.mubr.f32.gmra.mxu0 %v2575
  %v2716 = vpop.f32.mrf.mxu0
  %v2717 = vadd.f32 0.0, %v2716
  %v2718 = vpop.f32.mrf.mxu0
  %2719 = vmatprep.mubr.f32.mxu0 0.0
  %2720 = vmatmul.mubr.f32.gmra.mxu0 %v2578
  %v2721 = vpop.f32.mrf.mxu0
  %v2722 = vadd.f32 0.0, %v2721
  %v2723 = vpop.f32.mrf.mxu0
  %2724 = vdwg.mxu0
  %v2726 = vsel %vm2423, %v2484, 0
  %v2729 = vsel %vm2423, %v2485, 0
  %v2732 = vsel %vm2423, %v2486, 0
  %v2735 = vsel %vm2423, %v2487, 0
  %v2738 = vsel %vm2423, %v2488, 0
  %v2741 = vsel %vm2423, %v2489, 0
  %v2744 = vsel %vm2423, %v2490, 0
  %v2747 = vsel %vm2423, %v2491, 0
  %v2750 = vsel %vm2423, %v2492, 0
  %v2753 = vsel %vm2423, %v2493, 0
  %v2756 = vsel %vm2423, %v2494, 0
  %v2759 = vsel %vm2423, %v2495, 0
  %v2762 = vsel %vm2423, %v2496, 0
  %v2765 = vsel %vm2423, %v2497, 0
  %v2768 = vsel %vm2423, %v2498, 0
  %v2771 = vsel %vm2423, %v2499, 0
  %2773 = vmatprep.subr.mxu0 0.0
  %2774 = vmatpush1.msra.mxu0 0.0
  %2775 = vmatprep.subr.mxu0 0.0
  %2776 = vmatpush1.msra.mxu0 0.0
  %2777 = vmatprep.subr.mxu0 0.0
  %2778 = vmatpush1.msra.mxu0 0.0
  %2779 = vmatprep.subr.mxu0 0.0
  %2780 = vmatpush1.msra.mxu0 0.0
  %2781 = vmatprep.subr.mxu0 0.0
  %2782 = vmatpush1.msra.mxu0 0.0
  %2783 = vmatprep.subr.mxu0 0.0
  %2784 = vmatpush1.msra.mxu0 0.0
  %2785 = vmatprep.subr.mxu0 0.0
  %2786 = vmatpush1.msra.mxu0 0.0
  %2787 = vmatprep.subr.mxu0 0.0
  %2788 = vmatpush1.msra.mxu0 0.0
  %2789 = vmatprep.subr.mxu0 0.0
  %2790 = vmatpush1.msra.mxu0 %v2507
  %2791 = vmatprep.subr.mxu0 0.0
  %2792 = vmatpush1.msra.mxu0 %v2506
  %2793 = vmatprep.subr.mxu0 0.0
  %2794 = vmatpush1.msra.mxu0 %v2505
  %2795 = vmatprep.subr.mxu0 0.0
  %2796 = vmatpush1.msra.mxu0 %v2504
  %2797 = vmatprep.subr.mxu0 0.0
  %2798 = vmatpush1.msra.mxu0 %v2503
  %2799 = vmatprep.subr.mxu0 0.0
  %2800 = vmatpush1.msra.mxu0 %v2502
  %2801 = vmatprep.subr.mxu0 0.0
  %2802 = vmatpush1.msra.mxu0 %v2501
  %2803 = vmatprep.subr.mxu0 0.0
  %2804 = vmatpush1.msra.mxu0 %v2500
  %2805 = vmatprep.subr.mxu0 0.0
  %2806 = vmatpush2.msra.mxu0 0.0
  %2807 = vmatprep.subr.mxu0 0.0
  %2808 = vmatpush2.msra.mxu0 0.0
  %2809 = vmatprep.subr.mxu0 0.0
  %2810 = vmatpush2.msra.mxu0 0.0
  %2811 = vmatprep.subr.mxu0 0.0
  %2812 = vmatpush2.msra.mxu0 0.0
  %2813 = vmatprep.subr.mxu0 0.0
  %2814 = vmatpush2.msra.mxu0 0.0
  %2815 = vmatprep.subr.mxu0 0.0
  %2816 = vmatpush2.msra.mxu0 0.0
  %2817 = vmatprep.subr.mxu0 0.0
  %2818 = vmatpush2.msra.mxu0 0.0
  %2819 = vmatprep.subr.mxu0 0.0
  %2820 = vmatpush2.msra.mxu0 0.0
  %2821 = vmatprep.subr.mxu0 0.0
  %2822 = vmatpush2.msra.mxu0 0.0
  %2823 = vmatprep.subr.mxu0 0.0
  %2824 = vmatpush2.msra.mxu0 0.0
  %2825 = vmatprep.subr.mxu0 0.0
  %2826 = vmatpush2.msra.mxu0 0.0
  %2827 = vmatprep.subr.mxu0 0.0
  %2828 = vmatpush2.msra.mxu0 0.0
  %2829 = vmatprep.subr.mxu0 0.0
  %2830 = vmatpush2.msra.mxu0 0.0
  %2831 = vmatprep.subr.mxu0 0.0
  %2832 = vmatpush2.msra.mxu0 0.0
  %2833 = vmatprep.subr.mxu0 0.0
  %2834 = vmatpush2.msra.mxu0 0.0
  %2835 = vmatprep.subr.mxu0 0.0
  %2836 = vmatpush2.msra.mxu0 0.0
  %2837 = vmatprep.mubr.f32.mxu0 0.0
  %2838 = vmatmul.mubr.f32.gmra.mxu0 %v2726
  %v2839 = vpop.f32.mrf.mxu0
  %v2840 = vadd.f32 %v2647, %v2839
  %v2841 = vpop.f32.mrf.mxu0
  %2842 = vmatprep.mubr.f32.mxu0 0.0
  %2843 = vmatmul.mubr.f32.gmra.mxu0 %v2729
  %v2844 = vpop.f32.mrf.mxu0
  %v2845 = vadd.f32 %v2652, %v2844
  %v2846 = vpop.f32.mrf.mxu0
  %2847 = vmatprep.mubr.f32.mxu0 0.0
  %2848 = vmatmul.mubr.f32.gmra.mxu0 %v2732
  %v2849 = vpop.f32.mrf.mxu0
  %v2850 = vadd.f32 %v2657, %v2849
  %v2851 = vpop.f32.mrf.mxu0
  %2852 = vmatprep.mubr.f32.mxu0 0.0
  %2853 = vmatmul.mubr.f32.gmra.mxu0 %v2735
  %v2854 = vpop.f32.mrf.mxu0
  %v2855 = vadd.f32 %v2662, %v2854
  %v2856 = vpop.f32.mrf.mxu0
  %2857 = vmatprep.mubr.f32.mxu0 0.0
  %2858 = vmatmul.mubr.f32.gmra.mxu0 %v2738
  %v2859 = vpop.f32.mrf.mxu0
  %v2860 = vadd.f32 %v2667, %v2859
  %v2861 = vpop.f32.mrf.mxu0
  %2862 = vmatprep.mubr.f32.mxu0 0.0
  %2863 = vmatmul.mubr.f32.gmra.mxu0 %v2741
  %v2864 = vpop.f32.mrf.mxu0
  %v2865 = vadd.f32 %v2672, %v2864
  %v2866 = vpop.f32.mrf.mxu0
  %2867 = vmatprep.mubr.f32.mxu0 0.0
  %2868 = vmatmul.mubr.f32.gmra.mxu0 %v2744
  %v2869 = vpop.f32.mrf.mxu0
  %v2870 = vadd.f32 %v2677, %v2869
  %v2871 = vpop.f32.mrf.mxu0
  %2872 = vmatprep.mubr.f32.mxu0 0.0
  %2873 = vmatmul.mubr.f32.gmra.mxu0 %v2747
  %v2874 = vpop.f32.mrf.mxu0
  %v2875 = vadd.f32 %v2682, %v2874
  %v2876 = vpop.f32.mrf.mxu0
  %2877 = vmatprep.mubr.f32.mxu0 0.0
  %2878 = vmatmul.mubr.f32.gmra.mxu0 %v2750
  %v2879 = vpop.f32.mrf.mxu0
  %v2880 = vadd.f32 %v2687, %v2879
  %v2881 = vpop.f32.mrf.mxu0
  %2882 = vmatprep.mubr.f32.mxu0 0.0
  %2883 = vmatmul.mubr.f32.gmra.mxu0 %v2753
  %v2884 = vpop.f32.mrf.mxu0
  %v2885 = vadd.f32 %v2692, %v2884
  %v2886 = vpop.f32.mrf.mxu0
  %2887 = vmatprep.mubr.f32.mxu0 0.0
  %2888 = vmatmul.mubr.f32.gmra.mxu0 %v2756
  %v2889 = vpop.f32.mrf.mxu0
  %v2890 = vadd.f32 %v2697, %v2889
  %v2891 = vpop.f32.mrf.mxu0
  %2892 = vmatprep.mubr.f32.mxu0 0.0
  %2893 = vmatmul.mubr.f32.gmra.mxu0 %v2759
  %v2894 = vpop.f32.mrf.mxu0
  %v2895 = vadd.f32 %v2702, %v2894
  %v2896 = vpop.f32.mrf.mxu0
  %2897 = vmatprep.mubr.f32.mxu0 0.0
  %2898 = vmatmul.mubr.f32.gmra.mxu0 %v2762
  %v2899 = vpop.f32.mrf.mxu0
  %v2900 = vadd.f32 %v2707, %v2899
  %v2901 = vpop.f32.mrf.mxu0
  %2902 = vmatprep.mubr.f32.mxu0 0.0
  %2903 = vmatmul.mubr.f32.gmra.mxu0 %v2765
  %v2904 = vpop.f32.mrf.mxu0
  %v2905 = vadd.f32 %v2712, %v2904
  %v2906 = vpop.f32.mrf.mxu0
  %2907 = vmatprep.mubr.f32.mxu0 0.0
  %2908 = vmatmul.mubr.f32.gmra.mxu0 %v2768
  %v2909 = vpop.f32.mrf.mxu0
  %v2910 = vadd.f32 %v2717, %v2909
  %v2911 = vpop.f32.mrf.mxu0
  %2912 = vmatprep.mubr.f32.mxu0 0.0
  %2913 = vmatmul.mubr.f32.gmra.mxu0 %v2771
  %v2914 = vpop.f32.mrf.mxu0
  %v2915 = vadd.f32 %v2722, %v2914
  %v2916 = vpop.f32.mrf.mxu0
  %2917 = vdwg.mxu0
  %v2918 = vld [vmem:[#allocation3 + $0x2] sm:$0xff]
  %v2919 = vld [vmem:[#allocation3 + $0x12] sm:$0xff]
  %v2920 = vld [vmem:[#allocation3 + $0x22] sm:$0xff]
  %v2921 = vld [vmem:[#allocation3 + $0x32] sm:$0xff]
  %v2922 = vld [vmem:[#allocation3 + $0x42] sm:$0xff]
  %v2923 = vld [vmem:[#allocation3 + $0x52] sm:$0xff]
  %v2924 = vld [vmem:[#allocation3 + $0x62] sm:$0xff]
  %v2925 = vld [vmem:[#allocation3 + $0x72] sm:$0xff]
  %v2926 = vld [vmem:[#allocation3 + $0xa2] sm:$0xff]
  %v2927 = vld [vmem:[#allocation3 + $0xb2] sm:$0xff]
  %v2928 = vld [vmem:[#allocation3 + $0xc2] sm:$0xff]
  %v2929 = vld [vmem:[#allocation3 + $0xd2] sm:$0xff]
  %v2930 = vld [vmem:[#allocation3 + $0xe2] sm:$0xff]
  %v2931 = vld [vmem:[#allocation3 + $0xf2] sm:$0xff]
  %v2932 = vld [vmem:[#allocation3 + $0x102] sm:$0xff]
  %v2933 = vld [vmem:[#allocation3 + $0x112] sm:$0xff]
  %v2934 = vld [vmem:[%s5 + $0x80] sm:$0xff]
  %v2935 = vld [vmem:[%s5 + $0x88] sm:$0xff]
  %v2936 = vld [vmem:[%s5 + $0x90] sm:$0xff]
  %v2937 = vld [vmem:[%s5 + $0x98] sm:$0xff]
  %v2938 = vld [vmem:[%s5 + $0xa0] sm:$0xff]
  %v2939 = vld [vmem:[%s5 + $0xa8] sm:$0xff]
  %v2940 = vld [vmem:[%s5 + $0xb0] sm:$0xff]
  %v2941 = vld [vmem:[%s5 + $0xb8] sm:$0xff]
  %v2943 = vsel %vm2423, %v2918, 0
  %v2946 = vsel %vm2423, %v2919, 0
  %v2949 = vsel %vm2423, %v2920, 0
  %v2952 = vsel %vm2423, %v2921, 0
  %v2955 = vsel %vm2423, %v2922, 0
  %v2958 = vsel %vm2423, %v2923, 0
  %v2961 = vsel %vm2423, %v2924, 0
  %v2964 = vsel %vm2423, %v2925, 0
  %v2967 = vsel %vm2423, %v2926, 0
  %v2970 = vsel %vm2423, %v2927, 0
  %v2973 = vsel %vm2423, %v2928, 0
  %v2976 = vsel %vm2423, %v2929, 0
  %v2979 = vsel %vm2423, %v2930, 0
  %v2982 = vsel %vm2423, %v2931, 0
  %v2985 = vsel %vm2423, %v2932, 0
  %v2988 = vsel %vm2423, %v2933, 0
  %2990 = vmatprep.subr.mxu0 0.0
  %2991 = vmatpush1.msra.mxu0 0.0
  %2992 = vmatprep.subr.mxu0 0.0
  %2993 = vmatpush1.msra.mxu0 0.0
  %2994 = vmatprep.subr.mxu0 0.0
  %2995 = vmatpush1.msra.mxu0 0.0
  %2996 = vmatprep.subr.mxu0 0.0
  %2997 = vmatpush1.msra.mxu0 0.0
  %2998 = vmatprep.subr.mxu0 0.0
  %2999 = vmatpush1.msra.mxu0 0.0
  %3000 = vmatprep.subr.mxu0 0.0
  %3001 = vmatpush1.msra.mxu0 0.0
  %3002 = vmatprep.subr.mxu0 0.0
  %3003 = vmatpush1.msra.mxu0 0.0
  %3004 = vmatprep.subr.mxu0 0.0
  %3005 = vmatpush1.msra.mxu0 0.0
  %3006 = vmatprep.subr.mxu0 0.0
  %3007 = vmatpush1.msra.mxu0 %v2941
  %3008 = vmatprep.subr.mxu0 0.0
  %3009 = vmatpush1.msra.mxu0 %v2940
  %3010 = vmatprep.subr.mxu0 0.0
  %3011 = vmatpush1.msra.mxu0 %v2939
  %3012 = vmatprep.subr.mxu0 0.0
  %3013 = vmatpush1.msra.mxu0 %v2938
  %3014 = vmatprep.subr.mxu0 0.0
  %3015 = vmatpush1.msra.mxu0 %v2937
  %3016 = vmatprep.subr.mxu0 0.0
  %3017 = vmatpush1.msra.mxu0 %v2936
  %3018 = vmatprep.subr.mxu0 0.0
  %3019 = vmatpush1.msra.mxu0 %v2935
  %3020 = vmatprep.subr.mxu0 0.0
  %3021 = vmatpush1.msra.mxu0 %v2934
  %3022 = vmatprep.subr.mxu0 0.0
  %3023 = vmatpush2.msra.mxu0 0.0
  %3024 = vmatprep.subr.mxu0 0.0
  %3025 = vmatpush2.msra.mxu0 0.0
  %3026 = vmatprep.subr.mxu0 0.0
  %3027 = vmatpush2.msra.mxu0 0.0
  %3028 = vmatprep.subr.mxu0 0.0
  %3029 = vmatpush2.msra.mxu0 0.0
  %3030 = vmatprep.subr.mxu0 0.0
  %3031 = vmatpush2.msra.mxu0 0.0
  %3032 = vmatprep.subr.mxu0 0.0
  %3033 = vmatpush2.msra.mxu0 0.0
  %3034 = vmatprep.subr.mxu0 0.0
  %3035 = vmatpush2.msra.mxu0 0.0
  %3036 = vmatprep.subr.mxu0 0.0
  %3037 = vmatpush2.msra.mxu0 0.0
  %3038 = vmatprep.subr.mxu0 0.0
  %3039 = vmatpush2.msra.mxu0 0.0
  %3040 = vmatprep.subr.mxu0 0.0
  %3041 = vmatpush2.msra.mxu0 0.0
  %3042 = vmatprep.subr.mxu0 0.0
  %3043 = vmatpush2.msra.mxu0 0.0
  %3044 = vmatprep.subr.mxu0 0.0
  %3045 = vmatpush2.msra.mxu0 0.0
  %3046 = vmatprep.subr.mxu0 0.0
  %3047 = vmatpush2.msra.mxu0 0.0
  %3048 = vmatprep.subr.mxu0 0.0
  %3049 = vmatpush2.msra.mxu0 0.0
  %3050 = vmatprep.subr.mxu0 0.0
  %3051 = vmatpush2.msra.mxu0 0.0
  %3052 = vmatprep.subr.mxu0 0.0
  %3053 = vmatpush2.msra.mxu0 0.0
  %3054 = vmatprep.mubr.f32.mxu0 0.0
  %3055 = vmatmul.mubr.f32.gmra.mxu0 %v2943
  %v3056 = vpop.f32.mrf.mxu0
  %v3057 = vadd.f32 0.0, %v3056
  %v3058 = vpop.f32.mrf.mxu0
  %3059 = vmatprep.mubr.f32.mxu0 0.0
  %3060 = vmatmul.mubr.f32.gmra.mxu0 %v2946
  %v3061 = vpop.f32.mrf.mxu0
  %v3062 = vadd.f32 0.0, %v3061
  %v3063 = vpop.f32.mrf.mxu0
  %3064 = vmatprep.mubr.f32.mxu0 0.0
  %3065 = vmatmul.mubr.f32.gmra.mxu0 %v2949
  %v3066 = vpop.f32.mrf.mxu0
  %v3067 = vadd.f32 0.0, %v3066
  %v3068 = vpop.f32.mrf.mxu0
  %3069 = vmatprep.mubr.f32.mxu0 0.0
  %3070 = vmatmul.mubr.f32.gmra.mxu0 %v2952
  %v3071 = vpop.f32.mrf.mxu0
  %v3072 = vadd.f32 0.0, %v3071
  %v3073 = vpop.f32.mrf.mxu0
  %3074 = vmatprep.mubr.f32.mxu0 0.0
  %3075 = vmatmul.mubr.f32.gmra.mxu0 %v2955
  %v3076 = vpop.f32.mrf.mxu0
  %v3077 = vadd.f32 0.0, %v3076
  %v3078 = vpop.f32.mrf.mxu0
  %3079 = vmatprep.mubr.f32.mxu0 0.0
  %3080 = vmatmul.mubr.f32.gmra.mxu0 %v2958
  %v3081 = vpop.f32.mrf.mxu0
  %v3082 = vadd.f32 0.0, %v3081
  %v3083 = vpop.f32.mrf.mxu0
  %3084 = vmatprep.mubr.f32.mxu0 0.0
  %3085 = vmatmul.mubr.f32.gmra.mxu0 %v2961
  %v3086 = vpop.f32.mrf.mxu0
  %v3087 = vadd.f32 0.0, %v3086
  %v3088 = vpop.f32.mrf.mxu0
  %3089 = vmatprep.mubr.f32.mxu0 0.0
  %3090 = vmatmul.mubr.f32.gmra.mxu0 %v2964
  %v3091 = vpop.f32.mrf.mxu0
  %v3092 = vadd.f32 0.0, %v3091
  %v3093 = vpop.f32.mrf.mxu0
  %3094 = vmatprep.mubr.f32.mxu0 0.0
  %3095 = vmatmul.mubr.f32.gmra.mxu0 %v2967
  %v3096 = vpop.f32.mrf.mxu0
  %v3097 = vadd.f32 0.0, %v3096
  %v3098 = vpop.f32.mrf.mxu0
  %3099 = vmatprep.mubr.f32.mxu0 0.0
  %3100 = vmatmul.mubr.f32.gmra.mxu0 %v2970
  %v3101 = vpop.f32.mrf.mxu0
  %v3102 = vadd.f32 0.0, %v3101
  %v3103 = vpop.f32.mrf.mxu0
  %3104 = vmatprep.mubr.f32.mxu0 0.0
  %3105 = vmatmul.mubr.f32.gmra.mxu0 %v2973
  %v3106 = vpop.f32.mrf.mxu0
  %v3107 = vadd.f32 0.0, %v3106
  %v3108 = vpop.f32.mrf.mxu0
  %3109 = vmatprep.mubr.f32.mxu0 0.0
  %3110 = vmatmul.mubr.f32.gmra.mxu0 %v2976
  %v3111 = vpop.f32.mrf.mxu0
  %v3112 = vadd.f32 0.0, %v3111
  %v3113 = vpop.f32.mrf.mxu0
  %3114 = vmatprep.mubr.f32.mxu0 0.0
  %3115 = vmatmul.mubr.f32.gmra.mxu0 %v2979
  %v3116 = vpop.f32.mrf.mxu0
  %v3117 = vadd.f32 0.0, %v3116
  %v3118 = vpop.f32.mrf.mxu0
  %3119 = vmatprep.mubr.f32.mxu0 0.0
  %3120 = vmatmul.mubr.f32.gmra.mxu0 %v2982
  %v3121 = vpop.f32.mrf.mxu0
  %v3122 = vadd.f32 0.0, %v3121
  %v3123 = vpop.f32.mrf.mxu0
  %3124 = vmatprep.mubr.f32.mxu0 0.0
  %3125 = vmatmul.mubr.f32.gmra.mxu0 %v2985
  %v3126 = vpop.f32.mrf.mxu0
  %v3127 = vadd.f32 0.0, %v3126
  %v3128 = vpop.f32.mrf.mxu0
  %3129 = vmatprep.mubr.f32.mxu0 0.0
  %3130 = vmatmul.mubr.f32.gmra.mxu0 %v2988
  %v3131 = vpop.f32.mrf.mxu0
  %v3132 = vadd.f32 0.0, %v3131
  %v3133 = vpop.f32.mrf.mxu0
  %3134 = vdwg.mxu0
  %v3135 = vadd.f32 %v2840, %v3057
  %v3136 = vadd.f32 %v2845, %v3062
  %v3137 = vadd.f32 %v2850, %v3067
  %v3138 = vadd.f32 %v2855, %v3072
  %v3139 = vadd.f32 %v2860, %v3077
  %v3140 = vadd.f32 %v2865, %v3082
  %v3141 = vadd.f32 %v2870, %v3087
  %v3142 = vadd.f32 %v2875, %v3092
  %v3143 = vadd.f32 %v2880, %v3097
  %v3144 = vadd.f32 %v2885, %v3102
  %v3145 = vadd.f32 %v2890, %v3107
  %v3146 = vadd.f32 %v2895, %v3112
  %v3147 = vadd.f32 %v2900, %v3117
  %v3148 = vadd.f32 %v2905, %v3122
  %v3149 = vadd.f32 %v2910, %v3127
  %v3150 = vadd.f32 %v2915, %v3132
  %v3151 = vld [vmem:[%s2434] sm:$0xff]
  %v3152 = vld [vmem:[%s2434 + $0x10] sm:$0xff]
  %v3153 = vld [vmem:[%s2434 + $0x20] sm:$0xff]
  %v3154 = vld [vmem:[%s2434 + $0x30] sm:$0xff]
  %v3155 = vld [vmem:[%s2434 + $0x40] sm:$0xff]
  %v3156 = vld [vmem:[%s2434 + $0x50] sm:$0xff]
  %v3157 = vld [vmem:[%s2434 + $0x60] sm:$0xff]
  %v3158 = vld [vmem:[%s2434 + $0x70] sm:$0xff]
  %v3159 = vld [vmem:[%s2434 + $0xa0] sm:$0xff]
  %v3160 = vld [vmem:[%s2434 + $0xb0] sm:$0xff]
  %v3161 = vld [vmem:[%s2434 + $0xc0] sm:$0xff]
  %v3162 = vld [vmem:[%s2434 + $0xd0] sm:$0xff]
  %v3163 = vld [vmem:[%s2434 + $0xe0] sm:$0xff]
  %v3164 = vld [vmem:[%s2434 + $0xf0] sm:$0xff]
  %v3165 = vld [vmem:[%s2434 + $0x100] sm:$0xff]
  %v3166 = vld [vmem:[%s2434 + $0x110] sm:$0xff]
  %v3167 = vld [vmem:[%s5 + $0xc0] sm:$0xff]
  %v3168 = vld [vmem:[%s5 + $0xc8] sm:$0xff]
  %v3169 = vld [vmem:[%s5 + $0xd0] sm:$0xff]
  %v3170 = vld [vmem:[%s5 + $0xd8] sm:$0xff]
  %v3171 = vld [vmem:[%s5 + $0xe0] sm:$0xff]
  %v3172 = vld [vmem:[%s5 + $0xe8] sm:$0xff]
  %v3173 = vld [vmem:[%s5 + $0xf0] sm:$0xff]
  %v3174 = vld [vmem:[%s5 + $0xf8] sm:$0xff]
  %v3176 = vsel %vm2423, %v3151, 0
  %v3179 = vsel %vm2423, %v3152, 0
  %v3182 = vsel %vm2423, %v3153, 0
  %v3185 = vsel %vm2423, %v3154, 0
  %v3188 = vsel %vm2423, %v3155, 0
  %v3191 = vsel %vm2423, %v3156, 0
  %v3194 = vsel %vm2423, %v3157, 0
  %v3197 = vsel %vm2423, %v3158, 0
  %v3200 = vsel %vm2423, %v3159, 0
  %v3203 = vsel %vm2423, %v3160, 0
  %v3206 = vsel %vm2423, %v3161, 0
  %v3209 = vsel %vm2423, %v3162, 0
  %v3212 = vsel %vm2423, %v3163, 0
  %v3215 = vsel %vm2423, %v3164, 0
  %v3218 = vsel %vm2423, %v3165, 0
  %v3221 = vsel %vm2423, %v3166, 0
  %3223 = vmatprep.subr.mxu0 0.0
  %3224 = vmatpush1.msra.mxu0 0.0
  %3225 = vmatprep.subr.mxu0 0.0
  %3226 = vmatpush1.msra.mxu0 0.0
  %3227 = vmatprep.subr.mxu0 0.0
  %3228 = vmatpush1.msra.mxu0 0.0
  %3229 = vmatprep.subr.mxu0 0.0
  %3230 = vmatpush1.msra.mxu0 0.0
  %3231 = vmatprep.subr.mxu0 0.0
  %3232 = vmatpush1.msra.mxu0 0.0
  %3233 = vmatprep.subr.mxu0 0.0
  %3234 = vmatpush1.msra.mxu0 0.0
  %3235 = vmatprep.subr.mxu0 0.0
  %3236 = vmatpush1.msra.mxu0 0.0
  %3237 = vmatprep.subr.mxu0 0.0
  %3238 = vmatpush1.msra.mxu0 0.0
  %3239 = vmatprep.subr.mxu0 0.0
  %3240 = vmatpush1.msra.mxu0 %v3174
  %3241 = vmatprep.subr.mxu0 0.0
  %3242 = vmatpush1.msra.mxu0 %v3173
  %3243 = vmatprep.subr.mxu0 0.0
  %3244 = vmatpush1.msra.mxu0 %v3172
  %3245 = vmatprep.subr.mxu0 0.0
  %3246 = vmatpush1.msra.mxu0 %v3171
  %3247 = vmatprep.subr.mxu0 0.0
  %3248 = vmatpush1.msra.mxu0 %v3170
  %3249 = vmatprep.subr.mxu0 0.0
  %3250 = vmatpush1.msra.mxu0 %v3169
  %3251 = vmatprep.subr.mxu0 0.0
  %3252 = vmatpush1.msra.mxu0 %v3168
  %3253 = vmatprep.subr.mxu0 0.0
  %3254 = vmatpush1.msra.mxu0 %v3167
  %3255 = vmatprep.subr.mxu0 0.0
  %3256 = vmatpush2.msra.mxu0 0.0
  %3257 = vmatprep.subr.mxu0 0.0
  %3258 = vmatpush2.msra.mxu0 0.0
  %3259 = vmatprep.subr.mxu0 0.0
  %3260 = vmatpush2.msra.mxu0 0.0
  %3261 = vmatprep.subr.mxu0 0.0
  %3262 = vmatpush2.msra.mxu0 0.0
  %3263 = vmatprep.subr.mxu0 0.0
  %3264 = vmatpush2.msra.mxu0 0.0
  %3265 = vmatprep.subr.mxu0 0.0
  %3266 = vmatpush2.msra.mxu0 0.0
  %3267 = vmatprep.subr.mxu0 0.0
  %3268 = vmatpush2.msra.mxu0 0.0
  %3269 = vmatprep.subr.mxu0 0.0
  %3270 = vmatpush2.msra.mxu0 0.0
  %3271 = vmatprep.subr.mxu0 0.0
  %3272 = vmatpush2.msra.mxu0 0.0
  %3273 = vmatprep.subr.mxu0 0.0
  %3274 = vmatpush2.msra.mxu0 0.0
  %3275 = vmatprep.subr.mxu0 0.0
  %3276 = vmatpush2.msra.mxu0 0.0
  %3277 = vmatprep.subr.mxu0 0.0
  %3278 = vmatpush2.msra.mxu0 0.0
  %3279 = vmatprep.subr.mxu0 0.0
  %3280 = vmatpush2.msra.mxu0 0.0
  %3281 = vmatprep.subr.mxu0 0.0
  %3282 = vmatpush2.msra.mxu0 0.0
  %3283 = vmatprep.subr.mxu0 0.0
  %3284 = vmatpush2.msra.mxu0 0.0
  %3285 = vmatprep.subr.mxu0 0.0
  %3286 = vmatpush2.msra.mxu0 0.0
  %3287 = vmatprep.mubr.f32.mxu0 0.0
  %3288 = vmatmul.mubr.f32.gmra.mxu0 %v3176
  %v3289 = vpop.f32.mrf.mxu0
  %v3290 = vadd.f32 0.0, %v3289
  %v3291 = vpop.f32.mrf.mxu0
  %3292 = vmatprep.mubr.f32.mxu0 0.0
  %3293 = vmatmul.mubr.f32.gmra.mxu0 %v3179
  %v3294 = vpop.f32.mrf.mxu0
  %v3295 = vadd.f32 0.0, %v3294
  %v3296 = vpop.f32.mrf.mxu0
  %3297 = vmatprep.mubr.f32.mxu0 0.0
  %3298 = vmatmul.mubr.f32.gmra.mxu0 %v3182
  %v3299 = vpop.f32.mrf.mxu0
  %v3300 = vadd.f32 0.0, %v3299
  %v3301 = vpop.f32.mrf.mxu0
  %3302 = vmatprep.mubr.f32.mxu0 0.0
  %3303 = vmatmul.mubr.f32.gmra.mxu0 %v3185
  %v3304 = vpop.f32.mrf.mxu0
  %v3305 = vadd.f32 0.0, %v3304
  %v3306 = vpop.f32.mrf.mxu0
  %3307 = vmatprep.mubr.f32.mxu0 0.0
  %3308 = vmatmul.mubr.f32.gmra.mxu0 %v3188
  %v3309 = vpop.f32.mrf.mxu0
  %v3310 = vadd.f32 0.0, %v3309
  %v3311 = vpop.f32.mrf.mxu0
  %3312 = vmatprep.mubr.f32.mxu0 0.0
  %3313 = vmatmul.mubr.f32.gmra.mxu0 %v3191
  %v3314 = vpop.f32.mrf.mxu0
  %v3315 = vadd.f32 0.0, %v3314
  %v3316 = vpop.f32.mrf.mxu0
  %3317 = vmatprep.mubr.f32.mxu0 0.0
  %3318 = vmatmul.mubr.f32.gmra.mxu0 %v3194
  %v3319 = vpop.f32.mrf.mxu0
  %v3320 = vadd.f32 0.0, %v3319
  %v3321 = vpop.f32.mrf.mxu0
  %3322 = vmatprep.mubr.f32.mxu0 0.0
  %3323 = vmatmul.mubr.f32.gmra.mxu0 %v3197
  %v3324 = vpop.f32.mrf.mxu0
  %v3325 = vadd.f32 0.0, %v3324
  %v3326 = vpop.f32.mrf.mxu0
  %3327 = vmatprep.mubr.f32.mxu0 0.0
  %3328 = vmatmul.mubr.f32.gmra.mxu0 %v3200
  %v3329 = vpop.f32.mrf.mxu0
  %v3330 = vadd.f32 0.0, %v3329
  %v3331 = vpop.f32.mrf.mxu0
  %3332 = vmatprep.mubr.f32.mxu0 0.0
  %3333 = vmatmul.mubr.f32.gmra.mxu0 %v3203
  %v3334 = vpop.f32.mrf.mxu0
  %v3335 = vadd.f32 0.0, %v3334
  %v3336 = vpop.f32.mrf.mxu0
  %3337 = vmatprep.mubr.f32.mxu0 0.0
  %3338 = vmatmul.mubr.f32.gmra.mxu0 %v3206
  %v3339 = vpop.f32.mrf.mxu0
  %v3340 = vadd.f32 0.0, %v3339
  %v3341 = vpop.f32.mrf.mxu0
  %3342 = vmatprep.mubr.f32.mxu0 0.0
  %3343 = vmatmul.mubr.f32.gmra.mxu0 %v3209
  %v3344 = vpop.f32.mrf.mxu0
  %v3345 = vadd.f32 0.0, %v3344
  %v3346 = vpop.f32.mrf.mxu0
  %3347 = vmatprep.mubr.f32.mxu0 0.0
  %3348 = vmatmul.mubr.f32.gmra.mxu0 %v3212
  %v3349 = vpop.f32.mrf.mxu0
  %v3350 = vadd.f32 0.0, %v3349
  %v3351 = vpop.f32.mrf.mxu0
  %3352 = vmatprep.mubr.f32.mxu0 0.0
  %3353 = vmatmul.mubr.f32.gmra.mxu0 %v3215
  %v3354 = vpop.f32.mrf.mxu0
  %v3355 = vadd.f32 0.0, %v3354
  %v3356 = vpop.f32.mrf.mxu0
  %3357 = vmatprep.mubr.f32.mxu0 0.0
  %3358 = vmatmul.mubr.f32.gmra.mxu0 %v3218
  %v3359 = vpop.f32.mrf.mxu0
  %v3360 = vadd.f32 0.0, %v3359
  %v3361 = vpop.f32.mrf.mxu0
  %3362 = vmatprep.mubr.f32.mxu0 0.0
  %3363 = vmatmul.mubr.f32.gmra.mxu0 %v3221
  %v3364 = vpop.f32.mrf.mxu0
  %v3365 = vadd.f32 0.0, %v3364
  %v3366 = vpop.f32.mrf.mxu0
  %3367 = vdwg.mxu0
  %v3368 = vadd.f32 %v3135, %v3290
  %v3369 = vadd.f32 %v3136, %v3295
  %v3370 = vadd.f32 %v3137, %v3300
  %v3371 = vadd.f32 %v3138, %v3305
  %v3372 = vadd.f32 %v3139, %v3310
  %v3373 = vadd.f32 %v3140, %v3315
  %v3374 = vadd.f32 %v3141, %v3320
  %v3375 = vadd.f32 %v3142, %v3325
  %v3376 = vadd.f32 %v3143, %v3330
  %v3377 = vadd.f32 %v3144, %v3335
  %v3378 = vadd.f32 %v3145, %v3340
  %v3379 = vadd.f32 %v3146, %v3345
  %v3380 = vadd.f32 %v3147, %v3350
  %v3381 = vadd.f32 %v3148, %v3355
  %v3382 = vadd.f32 %v3149, %v3360
  %v3383 = vadd.f32 %v3150, %v3365
  %v3384 = vld [vmem:[%s2434 + $0x1] sm:$0xff]
  %v3385 = vld [vmem:[%s2434 + $0x11] sm:$0xff]
  %v3386 = vld [vmem:[%s2434 + $0x21] sm:$0xff]
  %v3387 = vld [vmem:[%s2434 + $0x31] sm:$0xff]
  %v3388 = vld [vmem:[%s2434 + $0x41] sm:$0xff]
  %v3389 = vld [vmem:[%s2434 + $0x51] sm:$0xff]
  %v3390 = vld [vmem:[%s2434 + $0x61] sm:$0xff]
  %v3391 = vld [vmem:[%s2434 + $0x71] sm:$0xff]
  %v3392 = vld [vmem:[%s2434 + $0xa1] sm:$0xff]
  %v3393 = vld [vmem:[%s2434 + $0xb1] sm:$0xff]
  %v3394 = vld [vmem:[%s2434 + $0xc1] sm:$0xff]
  %v3395 = vld [vmem:[%s2434 + $0xd1] sm:$0xff]
  %v3396 = vld [vmem:[%s2434 + $0xe1] sm:$0xff]
  %v3397 = vld [vmem:[%s2434 + $0xf1] sm:$0xff]
  %v3398 = vld [vmem:[%s2434 + $0x101] sm:$0xff]
  %v3399 = vld [vmem:[%s2434 + $0x111] sm:$0xff]
  %v3400 = vld [vmem:[%s5 + $0x100] sm:$0xff]
  %v3401 = vld [vmem:[%s5 + $0x108] sm:$0xff]
  %v3402 = vld [vmem:[%s5 + $0x110] sm:$0xff]
  %v3403 = vld [vmem:[%s5 + $0x118] sm:$0xff]
  %v3404 = vld [vmem:[%s5 + $0x120] sm:$0xff]
  %v3405 = vld [vmem:[%s5 + $0x128] sm:$0xff]
  %v3406 = vld [vmem:[%s5 + $0x130] sm:$0xff]
  %v3407 = vld [vmem:[%s5 + $0x138] sm:$0xff]
  %v3409 = vsel %vm2423, %v3384, 0
  %v3412 = vsel %vm2423, %v3385, 0
  %v3415 = vsel %vm2423, %v3386, 0
  %v3418 = vsel %vm2423, %v3387, 0
  %v3421 = vsel %vm2423, %v3388, 0
  %v3424 = vsel %vm2423, %v3389, 0
  %v3427 = vsel %vm2423, %v3390, 0
  %v3430 = vsel %vm2423, %v3391, 0
  %v3433 = vsel %vm2423, %v3392, 0
  %v3436 = vsel %vm2423, %v3393, 0
  %v3439 = vsel %vm2423, %v3394, 0
  %v3442 = vsel %vm2423, %v3395, 0
  %v3445 = vsel %vm2423, %v3396, 0
  %v3448 = vsel %vm2423, %v3397, 0
  %v3451 = vsel %vm2423, %v3398, 0
  %v3454 = vsel %vm2423, %v3399, 0
  %3456 = vmatprep.subr.mxu0 0.0
  %3457 = vmatpush1.msra.mxu0 0.0
  %3458 = vmatprep.subr.mxu0 0.0
  %3459 = vmatpush1.msra.mxu0 0.0
  %3460 = vmatprep.subr.mxu0 0.0
  %3461 = vmatpush1.msra.mxu0 0.0
  %3462 = vmatprep.subr.mxu0 0.0
  %3463 = vmatpush1.msra.mxu0 0.0
  %3464 = vmatprep.subr.mxu0 0.0
  %3465 = vmatpush1.msra.mxu0 0.0
  %3466 = vmatprep.subr.mxu0 0.0
  %3467 = vmatpush1.msra.mxu0 0.0
  %3468 = vmatprep.subr.mxu0 0.0
  %3469 = vmatpush1.msra.mxu0 0.0
  %3470 = vmatprep.subr.mxu0 0.0
  %3471 = vmatpush1.msra.mxu0 0.0
  %3472 = vmatprep.subr.mxu0 0.0
  %3473 = vmatpush1.msra.mxu0 %v3407
  %3474 = vmatprep.subr.mxu0 0.0
  %3475 = vmatpush1.msra.mxu0 %v3406
  %3476 = vmatprep.subr.mxu0 0.0
  %3477 = vmatpush1.msra.mxu0 %v3405
  %3478 = vmatprep.subr.mxu0 0.0
  %3479 = vmatpush1.msra.mxu0 %v3404
  %3480 = vmatprep.subr.mxu0 0.0
  %3481 = vmatpush1.msra.mxu0 %v3403
  %3482 = vmatprep.subr.mxu0 0.0
  %3483 = vmatpush1.msra.mxu0 %v3402
  %3484 = vmatprep.subr.mxu0 0.0
  %3485 = vmatpush1.msra.mxu0 %v3401
  %3486 = vmatprep.subr.mxu0 0.0
  %3487 = vmatpush1.msra.mxu0 %v3400
  %3488 = vmatprep.subr.mxu0 0.0
  %3489 = vmatpush2.msra.mxu0 0.0
  %3490 = vmatprep.subr.mxu0 0.0
  %3491 = vmatpush2.msra.mxu0 0.0
  %3492 = vmatprep.subr.mxu0 0.0
  %3493 = vmatpush2.msra.mxu0 0.0
  %3494 = vmatprep.subr.mxu0 0.0
  %3495 = vmatpush2.msra.mxu0 0.0
  %3496 = vmatprep.subr.mxu0 0.0
  %3497 = vmatpush2.msra.mxu0 0.0
  %3498 = vmatprep.subr.mxu0 0.0
  %3499 = vmatpush2.msra.mxu0 0.0
  %3500 = vmatprep.subr.mxu0 0.0
  %3501 = vmatpush2.msra.mxu0 0.0
  %3502 = vmatprep.subr.mxu0 0.0
  %3503 = vmatpush2.msra.mxu0 0.0
  %3504 = vmatprep.subr.mxu0 0.0
  %3505 = vmatpush2.msra.mxu0 0.0
  %3506 = vmatprep.subr.mxu0 0.0
  %3507 = vmatpush2.msra.mxu0 0.0
  %3508 = vmatprep.subr.mxu0 0.0
  %3509 = vmatpush2.msra.mxu0 0.0
  %3510 = vmatprep.subr.mxu0 0.0
  %3511 = vmatpush2.msra.mxu0 0.0
  %3512 = vmatprep.subr.mxu0 0.0
  %3513 = vmatpush2.msra.mxu0 0.0
  %3514 = vmatprep.subr.mxu0 0.0
  %3515 = vmatpush2.msra.mxu0 0.0
  %3516 = vmatprep.subr.mxu0 0.0
  %3517 = vmatpush2.msra.mxu0 0.0
  %3518 = vmatprep.subr.mxu0 0.0
  %3519 = vmatpush2.msra.mxu0 0.0
  %3520 = vmatprep.mubr.f32.mxu0 0.0
  %3521 = vmatmul.mubr.f32.gmra.mxu0 %v3409
  %v3522 = vpop.f32.mrf.mxu0
  %v3523 = vadd.f32 0.0, %v3522
  %v3524 = vpop.f32.mrf.mxu0
  %3525 = vmatprep.mubr.f32.mxu0 0.0
  %3526 = vmatmul.mubr.f32.gmra.mxu0 %v3412
  %v3527 = vpop.f32.mrf.mxu0
  %v3528 = vadd.f32 0.0, %v3527
  %v3529 = vpop.f32.mrf.mxu0
  %3530 = vmatprep.mubr.f32.mxu0 0.0
  %3531 = vmatmul.mubr.f32.gmra.mxu0 %v3415
  %v3532 = vpop.f32.mrf.mxu0
  %v3533 = vadd.f32 0.0, %v3532
  %v3534 = vpop.f32.mrf.mxu0
  %3535 = vmatprep.mubr.f32.mxu0 0.0
  %3536 = vmatmul.mubr.f32.gmra.mxu0 %v3418
  %v3537 = vpop.f32.mrf.mxu0
  %v3538 = vadd.f32 0.0, %v3537
  %v3539 = vpop.f32.mrf.mxu0
  %3540 = vmatprep.mubr.f32.mxu0 0.0
  %3541 = vmatmul.mubr.f32.gmra.mxu0 %v3421
  %v3542 = vpop.f32.mrf.mxu0
  %v3543 = vadd.f32 0.0, %v3542
  %v3544 = vpop.f32.mrf.mxu0
  %3545 = vmatprep.mubr.f32.mxu0 0.0
  %3546 = vmatmul.mubr.f32.gmra.mxu0 %v3424
  %v3547 = vpop.f32.mrf.mxu0
  %v3548 = vadd.f32 0.0, %v3547
  %v3549 = vpop.f32.mrf.mxu0
  %3550 = vmatprep.mubr.f32.mxu0 0.0
  %3551 = vmatmul.mubr.f32.gmra.mxu0 %v3427
  %v3552 = vpop.f32.mrf.mxu0
  %v3553 = vadd.f32 0.0, %v3552
  %v3554 = vpop.f32.mrf.mxu0
  %3555 = vmatprep.mubr.f32.mxu0 0.0
  %3556 = vmatmul.mubr.f32.gmra.mxu0 %v3430
  %v3557 = vpop.f32.mrf.mxu0
  %v3558 = vadd.f32 0.0, %v3557
  %v3559 = vpop.f32.mrf.mxu0
  %3560 = vmatprep.mubr.f32.mxu0 0.0
  %3561 = vmatmul.mubr.f32.gmra.mxu0 %v3433
  %v3562 = vpop.f32.mrf.mxu0
  %v3563 = vadd.f32 0.0, %v3562
  %v3564 = vpop.f32.mrf.mxu0
  %3565 = vmatprep.mubr.f32.mxu0 0.0
  %3566 = vmatmul.mubr.f32.gmra.mxu0 %v3436
  %v3567 = vpop.f32.mrf.mxu0
  %v3568 = vadd.f32 0.0, %v3567
  %v3569 = vpop.f32.mrf.mxu0
  %3570 = vmatprep.mubr.f32.mxu0 0.0
  %3571 = vmatmul.mubr.f32.gmra.mxu0 %v3439
  %v3572 = vpop.f32.mrf.mxu0
  %v3573 = vadd.f32 0.0, %v3572
  %v3574 = vpop.f32.mrf.mxu0
  %3575 = vmatprep.mubr.f32.mxu0 0.0
  %3576 = vmatmul.mubr.f32.gmra.mxu0 %v3442
  %v3577 = vpop.f32.mrf.mxu0
  %v3578 = vadd.f32 0.0, %v3577
  %v3579 = vpop.f32.mrf.mxu0
  %3580 = vmatprep.mubr.f32.mxu0 0.0
  %3581 = vmatmul.mubr.f32.gmra.mxu0 %v3445
  %v3582 = vpop.f32.mrf.mxu0
  %v3583 = vadd.f32 0.0, %v3582
  %v3584 = vpop.f32.mrf.mxu0
  %3585 = vmatprep.mubr.f32.mxu0 0.0
  %3586 = vmatmul.mubr.f32.gmra.mxu0 %v3448
  %v3587 = vpop.f32.mrf.mxu0
  %v3588 = vadd.f32 0.0, %v3587
  %v3589 = vpop.f32.mrf.mxu0
  %3590 = vmatprep.mubr.f32.mxu0 0.0
  %3591 = vmatmul.mubr.f32.gmra.mxu0 %v3451
  %v3592 = vpop.f32.mrf.mxu0
  %v3593 = vadd.f32 0.0, %v3592
  %v3594 = vpop.f32.mrf.mxu0
  %3595 = vmatprep.mubr.f32.mxu0 0.0
  %3596 = vmatmul.mubr.f32.gmra.mxu0 %v3454
  %v3597 = vpop.f32.mrf.mxu0
  %v3598 = vadd.f32 0.0, %v3597
  %v3599 = vpop.f32.mrf.mxu0
  %3600 = vdwg.mxu0
  %v3601 = vadd.f32 %v3368, %v3523
  %v3602 = vadd.f32 %v3369, %v3528
  %v3603 = vadd.f32 %v3370, %v3533
  %v3604 = vadd.f32 %v3371, %v3538
  %v3605 = vadd.f32 %v3372, %v3543
  %v3606 = vadd.f32 %v3373, %v3548
  %v3607 = vadd.f32 %v3374, %v3553
  %v3608 = vadd.f32 %v3375, %v3558
  %v3609 = vadd.f32 %v3376, %v3563
  %v3610 = vadd.f32 %v3377, %v3568
  %v3611 = vadd.f32 %v3378, %v3573
  %v3612 = vadd.f32 %v3379, %v3578
  %v3613 = vadd.f32 %v3380, %v3583
  %v3614 = vadd.f32 %v3381, %v3588
  %v3615 = vadd.f32 %v3382, %v3593
  %v3616 = vadd.f32 %v3383, %v3598
  %v3617 = vld [vmem:[%s2434 + $0x2] sm:$0xff]
  %v3618 = vld [vmem:[%s2434 + $0x12] sm:$0xff]
  %v3619 = vld [vmem:[%s2434 + $0x22] sm:$0xff]
  %v3620 = vld [vmem:[%s2434 + $0x32] sm:$0xff]
  %v3621 = vld [vmem:[%s2434 + $0x42] sm:$0xff]
  %v3622 = vld [vmem:[%s2434 + $0x52] sm:$0xff]
  %v3623 = vld [vmem:[%s2434 + $0x62] sm:$0xff]
  %v3624 = vld [vmem:[%s2434 + $0x72] sm:$0xff]
  %v3625 = vld [vmem:[%s2434 + $0xa2] sm:$0xff]
  %v3626 = vld [vmem:[%s2434 + $0xb2] sm:$0xff]
  %v3627 = vld [vmem:[%s2434 + $0xc2] sm:$0xff]
  %v3628 = vld [vmem:[%s2434 + $0xd2] sm:$0xff]
  %v3629 = vld [vmem:[%s2434 + $0xe2] sm:$0xff]
  %v3630 = vld [vmem:[%s2434 + $0xf2] sm:$0xff]
  %v3631 = vld [vmem:[%s2434 + $0x102] sm:$0xff]
  %v3632 = vld [vmem:[%s2434 + $0x112] sm:$0xff]
  %v3633 = vld [vmem:[%s5 + $0x140] sm:$0xff]
  %v3634 = vld [vmem:[%s5 + $0x148] sm:$0xff]
  %v3635 = vld [vmem:[%s5 + $0x150] sm:$0xff]
  %v3636 = vld [vmem:[%s5 + $0x158] sm:$0xff]
  %v3637 = vld [vmem:[%s5 + $0x160] sm:$0xff]
  %v3638 = vld [vmem:[%s5 + $0x168] sm:$0xff]
  %v3639 = vld [vmem:[%s5 + $0x170] sm:$0xff]
  %v3640 = vld [vmem:[%s5 + $0x178] sm:$0xff]
  %v3642 = vsel %vm2423, %v3617, 0
  %v3645 = vsel %vm2423, %v3618, 0
  %v3648 = vsel %vm2423, %v3619, 0
  %v3651 = vsel %vm2423, %v3620, 0
  %v3654 = vsel %vm2423, %v3621, 0
  %v3657 = vsel %vm2423, %v3622, 0
  %v3660 = vsel %vm2423, %v3623, 0
  %v3663 = vsel %vm2423, %v3624, 0
  %v3666 = vsel %vm2423, %v3625, 0
  %v3669 = vsel %vm2423, %v3626, 0
  %v3672 = vsel %vm2423, %v3627, 0
  %v3675 = vsel %vm2423, %v3628, 0
  %v3678 = vsel %vm2423, %v3629, 0
  %v3681 = vsel %vm2423, %v3630, 0
  %v3684 = vsel %vm2423, %v3631, 0
  %v3687 = vsel %vm2423, %v3632, 0
  %3689 = vmatprep.subr.mxu0 0.0
  %3690 = vmatpush1.msra.mxu0 0.0
  %3691 = vmatprep.subr.mxu0 0.0
  %3692 = vmatpush1.msra.mxu0 0.0
  %3693 = vmatprep.subr.mxu0 0.0
  %3694 = vmatpush1.msra.mxu0 0.0
  %3695 = vmatprep.subr.mxu0 0.0
  %3696 = vmatpush1.msra.mxu0 0.0
  %3697 = vmatprep.subr.mxu0 0.0
  %3698 = vmatpush1.msra.mxu0 0.0
  %3699 = vmatprep.subr.mxu0 0.0
  %3700 = vmatpush1.msra.mxu0 0.0
  %3701 = vmatprep.subr.mxu0 0.0
  %3702 = vmatpush1.msra.mxu0 0.0
  %3703 = vmatprep.subr.mxu0 0.0
  %3704 = vmatpush1.msra.mxu0 0.0
  %3705 = vmatprep.subr.mxu0 0.0
  %3706 = vmatpush1.msra.mxu0 %v3640
  %3707 = vmatprep.subr.mxu0 0.0
  %3708 = vmatpush1.msra.mxu0 %v3639
  %3709 = vmatprep.subr.mxu0 0.0
  %3710 = vmatpush1.msra.mxu0 %v3638
  %3711 = vmatprep.subr.mxu0 0.0
  %3712 = vmatpush1.msra.mxu0 %v3637
  %3713 = vmatprep.subr.mxu0 0.0
  %3714 = vmatpush1.msra.mxu0 %v3636
  %3715 = vmatprep.subr.mxu0 0.0
  %3716 = vmatpush1.msra.mxu0 %v3635
  %3717 = vmatprep.subr.mxu0 0.0
  %3718 = vmatpush1.msra.mxu0 %v3634
  %3719 = vmatprep.subr.mxu0 0.0
  %3720 = vmatpush1.msra.mxu0 %v3633
  %3721 = vmatprep.subr.mxu0 0.0
  %3722 = vmatpush2.msra.mxu0 0.0
  %3723 = vmatprep.subr.mxu0 0.0
  %3724 = vmatpush2.msra.mxu0 0.0
  %3725 = vmatprep.subr.mxu0 0.0
  %3726 = vmatpush2.msra.mxu0 0.0
  %3727 = vmatprep.subr.mxu0 0.0
  %3728 = vmatpush2.msra.mxu0 0.0
  %3729 = vmatprep.subr.mxu0 0.0
  %3730 = vmatpush2.msra.mxu0 0.0
  %3731 = vmatprep.subr.mxu0 0.0
  %3732 = vmatpush2.msra.mxu0 0.0
  %3733 = vmatprep.subr.mxu0 0.0
  %3734 = vmatpush2.msra.mxu0 0.0
  %3735 = vmatprep.subr.mxu0 0.0
  %3736 = vmatpush2.msra.mxu0 0.0
  %3737 = vmatprep.subr.mxu0 0.0
  %3738 = vmatpush2.msra.mxu0 0.0
  %3739 = vmatprep.subr.mxu0 0.0
  %3740 = vmatpush2.msra.mxu0 0.0
  %3741 = vmatprep.subr.mxu0 0.0
  %3742 = vmatpush2.msra.mxu0 0.0
  %3743 = vmatprep.subr.mxu0 0.0
  %3744 = vmatpush2.msra.mxu0 0.0
  %3745 = vmatprep.subr.mxu0 0.0
  %3746 = vmatpush2.msra.mxu0 0.0
  %3747 = vmatprep.subr.mxu0 0.0
  %3748 = vmatpush2.msra.mxu0 0.0
  %3749 = vmatprep.subr.mxu0 0.0
  %3750 = vmatpush2.msra.mxu0 0.0
  %3751 = vmatprep.subr.mxu0 0.0
  %3752 = vmatpush2.msra.mxu0 0.0
  %3753 = vmatprep.mubr.f32.mxu0 0.0
  %3754 = vmatmul.mubr.f32.gmra.mxu0 %v3642
  %v3755 = vpop.f32.mrf.mxu0
  %v3756 = vadd.f32 0.0, %v3755
  %v3757 = vpop.f32.mrf.mxu0
  %3758 = vmatprep.mubr.f32.mxu0 0.0
  %3759 = vmatmul.mubr.f32.gmra.mxu0 %v3645
  %v3760 = vpop.f32.mrf.mxu0
  %v3761 = vadd.f32 0.0, %v3760
  %v3762 = vpop.f32.mrf.mxu0
  %3763 = vmatprep.mubr.f32.mxu0 0.0
  %3764 = vmatmul.mubr.f32.gmra.mxu0 %v3648
  %v3765 = vpop.f32.mrf.mxu0
  %v3766 = vadd.f32 0.0, %v3765
  %v3767 = vpop.f32.mrf.mxu0
  %3768 = vmatprep.mubr.f32.mxu0 0.0
  %3769 = vmatmul.mubr.f32.gmra.mxu0 %v3651
  %v3770 = vpop.f32.mrf.mxu0
  %v3771 = vadd.f32 0.0, %v3770
  %v3772 = vpop.f32.mrf.mxu0
  %3773 = vmatprep.mubr.f32.mxu0 0.0
  %3774 = vmatmul.mubr.f32.gmra.mxu0 %v3654
  %v3775 = vpop.f32.mrf.mxu0
  %v3776 = vadd.f32 0.0, %v3775
  %v3777 = vpop.f32.mrf.mxu0
  %3778 = vmatprep.mubr.f32.mxu0 0.0
  %3779 = vmatmul.mubr.f32.gmra.mxu0 %v3657
  %v3780 = vpop.f32.mrf.mxu0
  %v3781 = vadd.f32 0.0, %v3780
  %v3782 = vpop.f32.mrf.mxu0
  %3783 = vmatprep.mubr.f32.mxu0 0.0
  %3784 = vmatmul.mubr.f32.gmra.mxu0 %v3660
  %v3785 = vpop.f32.mrf.mxu0
  %v3786 = vadd.f32 0.0, %v3785
  %v3787 = vpop.f32.mrf.mxu0
  %3788 = vmatprep.mubr.f32.mxu0 0.0
  %3789 = vmatmul.mubr.f32.gmra.mxu0 %v3663
  %v3790 = vpop.f32.mrf.mxu0
  %v3791 = vadd.f32 0.0, %v3790
  %v3792 = vpop.f32.mrf.mxu0
  %3793 = vmatprep.mubr.f32.mxu0 0.0
  %3794 = vmatmul.mubr.f32.gmra.mxu0 %v3666
  %v3795 = vpop.f32.mrf.mxu0
  %v3796 = vadd.f32 0.0, %v3795
  %v3797 = vpop.f32.mrf.mxu0
  %3798 = vmatprep.mubr.f32.mxu0 0.0
  %3799 = vmatmul.mubr.f32.gmra.mxu0 %v3669
  %v3800 = vpop.f32.mrf.mxu0
  %v3801 = vadd.f32 0.0, %v3800
  %v3802 = vpop.f32.mrf.mxu0
  %3803 = vmatprep.mubr.f32.mxu0 0.0
  %3804 = vmatmul.mubr.f32.gmra.mxu0 %v3672
  %v3805 = vpop.f32.mrf.mxu0
  %v3806 = vadd.f32 0.0, %v3805
  %v3807 = vpop.f32.mrf.mxu0
  %3808 = vmatprep.mubr.f32.mxu0 0.0
  %3809 = vmatmul.mubr.f32.gmra.mxu0 %v3675
  %v3810 = vpop.f32.mrf.mxu0
  %v3811 = vadd.f32 0.0, %v3810
  %v3812 = vpop.f32.mrf.mxu0
  %3813 = vmatprep.mubr.f32.mxu0 0.0
  %3814 = vmatmul.mubr.f32.gmra.mxu0 %v3678
  %v3815 = vpop.f32.mrf.mxu0
  %v3816 = vadd.f32 0.0, %v3815
  %v3817 = vpop.f32.mrf.mxu0
  %3818 = vmatprep.mubr.f32.mxu0 0.0
  %3819 = vmatmul.mubr.f32.gmra.mxu0 %v3681
  %v3820 = vpop.f32.mrf.mxu0
  %v3821 = vadd.f32 0.0, %v3820
  %v3822 = vpop.f32.mrf.mxu0
  %3823 = vmatprep.mubr.f32.mxu0 0.0
  %3824 = vmatmul.mubr.f32.gmra.mxu0 %v3684
  %v3825 = vpop.f32.mrf.mxu0
  %v3826 = vadd.f32 0.0, %v3825
  %v3827 = vpop.f32.mrf.mxu0
  %3828 = vmatprep.mubr.f32.mxu0 0.0
  %3829 = vmatmul.mubr.f32.gmra.mxu0 %v3687
  %v3830 = vpop.f32.mrf.mxu0
  %v3831 = vadd.f32 0.0, %v3830
  %v3832 = vpop.f32.mrf.mxu0
  %3833 = vdwg.mxu0
  %v3834 = vadd.f32 %v3601, %v3756
  %v3835 = vadd.f32 %v3602, %v3761
  %v3836 = vadd.f32 %v3603, %v3766
  %v3837 = vadd.f32 %v3604, %v3771
  %v3838 = vadd.f32 %v3605, %v3776
  %v3839 = vadd.f32 %v3606, %v3781
  %v3840 = vadd.f32 %v3607, %v3786
  %v3841 = vadd.f32 %v3608, %v3791
  %v3842 = vadd.f32 %v3609, %v3796
  %v3843 = vadd.f32 %v3610, %v3801
  %v3844 = vadd.f32 %v3611, %v3806
  %v3845 = vadd.f32 %v3612, %v3811
  %v3846 = vadd.f32 %v3613, %v3816
  %v3847 = vadd.f32 %v3614, %v3821
  %v3848 = vadd.f32 %v3615, %v3826
  %v3849 = vadd.f32 %v3616, %v3831
  %s3850 = scalar_lea.vmem [#allocation3], 32
  %v3851 = vld [vmem:[%s3850] sm:$0xff]
  %v3852 = vld [vmem:[%s3850 + $0x10] sm:$0xff]
  %v3853 = vld [vmem:[%s3850 + $0x20] sm:$0xff]
  %v3854 = vld [vmem:[%s3850 + $0x30] sm:$0xff]
  %v3855 = vld [vmem:[%s3850 + $0x40] sm:$0xff]
  %v3856 = vld [vmem:[%s3850 + $0x50] sm:$0xff]
  %v3857 = vld [vmem:[%s3850 + $0x60] sm:$0xff]
  %v3858 = vld [vmem:[%s3850 + $0x70] sm:$0xff]
  %v3859 = vld [vmem:[%s3850 + $0xa0] sm:$0xff]
  %v3860 = vld [vmem:[%s3850 + $0xb0] sm:$0xff]
  %v3861 = vld [vmem:[%s3850 + $0xc0] sm:$0xff]
  %v3862 = vld [vmem:[%s3850 + $0xd0] sm:$0xff]
  %v3863 = vld [vmem:[%s3850 + $0xe0] sm:$0xff]
  %v3864 = vld [vmem:[%s3850 + $0xf0] sm:$0xff]
  %v3865 = vld [vmem:[%s3850 + $0x100] sm:$0xff]
  %v3866 = vld [vmem:[%s3850 + $0x110] sm:$0xff]
  %v3867 = vld [vmem:[%s5 + $0x180] sm:$0xff]
  %v3868 = vld [vmem:[%s5 + $0x188] sm:$0xff]
  %v3869 = vld [vmem:[%s5 + $0x190] sm:$0xff]
  %v3870 = vld [vmem:[%s5 + $0x198] sm:$0xff]
  %v3871 = vld [vmem:[%s5 + $0x1a0] sm:$0xff]
  %v3872 = vld [vmem:[%s5 + $0x1a8] sm:$0xff]
  %v3873 = vld [vmem:[%s5 + $0x1b0] sm:$0xff]
  %v3874 = vld [vmem:[%s5 + $0x1b8] sm:$0xff]
  %v3876 = vsel %vm2423, %v3851, 0
  %v3879 = vsel %vm2423, %v3852, 0
  %v3882 = vsel %vm2423, %v3853, 0
  %v3885 = vsel %vm2423, %v3854, 0
  %v3888 = vsel %vm2423, %v3855, 0
  %v3891 = vsel %vm2423, %v3856, 0
  %v3894 = vsel %vm2423, %v3857, 0
  %v3897 = vsel %vm2423, %v3858, 0
  %v3900 = vsel %vm2423, %v3859, 0
  %v3903 = vsel %vm2423, %v3860, 0
  %v3906 = vsel %vm2423, %v3861, 0
  %v3909 = vsel %vm2423, %v3862, 0
  %v3912 = vsel %vm2423, %v3863, 0
  %v3915 = vsel %vm2423, %v3864, 0
  %v3918 = vsel %vm2423, %v3865, 0
  %v3921 = vsel %vm2423, %v3866, 0
  %3923 = vmatprep.subr.mxu0 0.0
  %3924 = vmatpush1.msra.mxu0 0.0
  %3925 = vmatprep.subr.mxu0 0.0
  %3926 = vmatpush1.msra.mxu0 0.0
  %3927 = vmatprep.subr.mxu0 0.0
  %3928 = vmatpush1.msra.mxu0 0.0
  %3929 = vmatprep.subr.mxu0 0.0
  %3930 = vmatpush1.msra.mxu0 0.0
  %3931 = vmatprep.subr.mxu0 0.0
  %3932 = vmatpush1.msra.mxu0 0.0
  %3933 = vmatprep.subr.mxu0 0.0
  %3934 = vmatpush1.msra.mxu0 0.0
  %3935 = vmatprep.subr.mxu0 0.0
  %3936 = vmatpush1.msra.mxu0 0.0
  %3937 = vmatprep.subr.mxu0 0.0
  %3938 = vmatpush1.msra.mxu0 0.0
  %3939 = vmatprep.subr.mxu0 0.0
  %3940 = vmatpush1.msra.mxu0 %v3874
  %3941 = vmatprep.subr.mxu0 0.0
  %3942 = vmatpush1.msra.mxu0 %v3873
  %3943 = vmatprep.subr.mxu0 0.0
  %3944 = vmatpush1.msra.mxu0 %v3872
  %3945 = vmatprep.subr.mxu0 0.0
  %3946 = vmatpush1.msra.mxu0 %v3871
  %3947 = vmatprep.subr.mxu0 0.0
  %3948 = vmatpush1.msra.mxu0 %v3870
  %3949 = vmatprep.subr.mxu0 0.0
  %3950 = vmatpush1.msra.mxu0 %v3869
  %3951 = vmatprep.subr.mxu0 0.0
  %3952 = vmatpush1.msra.mxu0 %v3868
  %3953 = vmatprep.subr.mxu0 0.0
  %3954 = vmatpush1.msra.mxu0 %v3867
  %3955 = vmatprep.subr.mxu0 0.0
  %3956 = vmatpush2.msra.mxu0 0.0
  %3957 = vmatprep.subr.mxu0 0.0
  %3958 = vmatpush2.msra.mxu0 0.0
  %3959 = vmatprep.subr.mxu0 0.0
  %3960 = vmatpush2.msra.mxu0 0.0
  %3961 = vmatprep.subr.mxu0 0.0
  %3962 = vmatpush2.msra.mxu0 0.0
  %3963 = vmatprep.subr.mxu0 0.0
  %3964 = vmatpush2.msra.mxu0 0.0
  %3965 = vmatprep.subr.mxu0 0.0
  %3966 = vmatpush2.msra.mxu0 0.0
  %3967 = vmatprep.subr.mxu0 0.0
  %3968 = vmatpush2.msra.mxu0 0.0
  %3969 = vmatprep.subr.mxu0 0.0
  %3970 = vmatpush2.msra.mxu0 0.0
  %3971 = vmatprep.subr.mxu0 0.0
  %3972 = vmatpush2.msra.mxu0 0.0
  %3973 = vmatprep.subr.mxu0 0.0
  %3974 = vmatpush2.msra.mxu0 0.0
  %3975 = vmatprep.subr.mxu0 0.0
  %3976 = vmatpush2.msra.mxu0 0.0
  %3977 = vmatprep.subr.mxu0 0.0
  %3978 = vmatpush2.msra.mxu0 0.0
  %3979 = vmatprep.subr.mxu0 0.0
  %3980 = vmatpush2.msra.mxu0 0.0
  %3981 = vmatprep.subr.mxu0 0.0
  %3982 = vmatpush2.msra.mxu0 0.0
  %3983 = vmatprep.subr.mxu0 0.0
  %3984 = vmatpush2.msra.mxu0 0.0
  %3985 = vmatprep.subr.mxu0 0.0
  %3986 = vmatpush2.msra.mxu0 0.0
  %3987 = vmatprep.mubr.f32.mxu0 0.0
  %3988 = vmatmul.mubr.f32.gmra.mxu0 %v3876
  %v3989 = vpop.f32.mrf.mxu0
  %v3990 = vadd.f32 0.0, %v3989
  %v3991 = vpop.f32.mrf.mxu0
  %3992 = vmatprep.mubr.f32.mxu0 0.0
  %3993 = vmatmul.mubr.f32.gmra.mxu0 %v3879
  %v3994 = vpop.f32.mrf.mxu0
  %v3995 = vadd.f32 0.0, %v3994
  %v3996 = vpop.f32.mrf.mxu0
  %3997 = vmatprep.mubr.f32.mxu0 0.0
  %3998 = vmatmul.mubr.f32.gmra.mxu0 %v3882
  %v3999 = vpop.f32.mrf.mxu0
  %v4000 = vadd.f32 0.0, %v3999
  %v4001 = vpop.f32.mrf.mxu0
  %4002 = vmatprep.mubr.f32.mxu0 0.0
  %4003 = vmatmul.mubr.f32.gmra.mxu0 %v3885
  %v4004 = vpop.f32.mrf.mxu0
  %v4005 = vadd.f32 0.0, %v4004
  %v4006 = vpop.f32.mrf.mxu0
  %4007 = vmatprep.mubr.f32.mxu0 0.0
  %4008 = vmatmul.mubr.f32.gmra.mxu0 %v3888
  %v4009 = vpop.f32.mrf.mxu0
  %v4010 = vadd.f32 0.0, %v4009
  %v4011 = vpop.f32.mrf.mxu0
  %4012 = vmatprep.mubr.f32.mxu0 0.0
  %4013 = vmatmul.mubr.f32.gmra.mxu0 %v3891
  %v4014 = vpop.f32.mrf.mxu0
  %v4015 = vadd.f32 0.0, %v4014
  %v4016 = vpop.f32.mrf.mxu0
  %4017 = vmatprep.mubr.f32.mxu0 0.0
  %4018 = vmatmul.mubr.f32.gmra.mxu0 %v3894
  %v4019 = vpop.f32.mrf.mxu0
  %v4020 = vadd.f32 0.0, %v4019
  %v4021 = vpop.f32.mrf.mxu0
  %4022 = vmatprep.mubr.f32.mxu0 0.0
  %4023 = vmatmul.mubr.f32.gmra.mxu0 %v3897
  %v4024 = vpop.f32.mrf.mxu0
  %v4025 = vadd.f32 0.0, %v4024
  %v4026 = vpop.f32.mrf.mxu0
  %4027 = vmatprep.mubr.f32.mxu0 0.0
  %4028 = vmatmul.mubr.f32.gmra.mxu0 %v3900
  %v4029 = vpop.f32.mrf.mxu0
  %v4030 = vadd.f32 0.0, %v4029
  %v4031 = vpop.f32.mrf.mxu0
  %4032 = vmatprep.mubr.f32.mxu0 0.0
  %4033 = vmatmul.mubr.f32.gmra.mxu0 %v3903
  %v4034 = vpop.f32.mrf.mxu0
  %v4035 = vadd.f32 0.0, %v4034
  %v4036 = vpop.f32.mrf.mxu0
  %4037 = vmatprep.mubr.f32.mxu0 0.0
  %4038 = vmatmul.mubr.f32.gmra.mxu0 %v3906
  %v4039 = vpop.f32.mrf.mxu0
  %v4040 = vadd.f32 0.0, %v4039
  %v4041 = vpop.f32.mrf.mxu0
  %4042 = vmatprep.mubr.f32.mxu0 0.0
  %4043 = vmatmul.mubr.f32.gmra.mxu0 %v3909
  %v4044 = vpop.f32.mrf.mxu0
  %v4045 = vadd.f32 0.0, %v4044
  %v4046 = vpop.f32.mrf.mxu0
  %4047 = vmatprep.mubr.f32.mxu0 0.0
  %4048 = vmatmul.mubr.f32.gmra.mxu0 %v3912
  %v4049 = vpop.f32.mrf.mxu0
  %v4050 = vadd.f32 0.0, %v4049
  %v4051 = vpop.f32.mrf.mxu0
  %4052 = vmatprep.mubr.f32.mxu0 0.0
  %4053 = vmatmul.mubr.f32.gmra.mxu0 %v3915
  %v4054 = vpop.f32.mrf.mxu0
  %v4055 = vadd.f32 0.0, %v4054
  %v4056 = vpop.f32.mrf.mxu0
  %4057 = vmatprep.mubr.f32.mxu0 0.0
  %4058 = vmatmul.mubr.f32.gmra.mxu0 %v3918
  %v4059 = vpop.f32.mrf.mxu0
  %v4060 = vadd.f32 0.0, %v4059
  %v4061 = vpop.f32.mrf.mxu0
  %4062 = vmatprep.mubr.f32.mxu0 0.0
  %4063 = vmatmul.mubr.f32.gmra.mxu0 %v3921
  %v4064 = vpop.f32.mrf.mxu0
  %v4065 = vadd.f32 0.0, %v4064
  %v4066 = vpop.f32.mrf.mxu0
  %4067 = vdwg.mxu0
  %v4068 = vadd.f32 %v3834, %v3990
  %v4069 = vadd.f32 %v3835, %v3995
  %v4070 = vadd.f32 %v3836, %v4000
  %v4071 = vadd.f32 %v3837, %v4005
  %v4072 = vadd.f32 %v3838, %v4010
  %v4073 = vadd.f32 %v3839, %v4015
  %v4074 = vadd.f32 %v3840, %v4020
  %v4075 = vadd.f32 %v3841, %v4025
  %v4076 = vadd.f32 %v3842, %v4030
  %v4077 = vadd.f32 %v3843, %v4035
  %v4078 = vadd.f32 %v3844, %v4040
  %v4079 = vadd.f32 %v3845, %v4045
  %v4080 = vadd.f32 %v3846, %v4050
  %v4081 = vadd.f32 %v3847, %v4055
  %v4082 = vadd.f32 %v3848, %v4060
  %v4083 = vadd.f32 %v3849, %v4065
  %v4084 = vld [vmem:[%s3850 + $0x1] sm:$0xff]
  %v4085 = vld [vmem:[%s3850 + $0x11] sm:$0xff]
  %v4086 = vld [vmem:[%s3850 + $0x21] sm:$0xff]
  %v4087 = vld [vmem:[%s3850 + $0x31] sm:$0xff]
  %v4088 = vld [vmem:[%s3850 + $0x41] sm:$0xff]
  %v4089 = vld [vmem:[%s3850 + $0x51] sm:$0xff]
  %v4090 = vld [vmem:[%s3850 + $0x61] sm:$0xff]
  %v4091 = vld [vmem:[%s3850 + $0x71] sm:$0xff]
  %v4092 = vld [vmem:[%s3850 + $0xa1] sm:$0xff]
  %v4093 = vld [vmem:[%s3850 + $0xb1] sm:$0xff]
  %v4094 = vld [vmem:[%s3850 + $0xc1] sm:$0xff]
  %v4095 = vld [vmem:[%s3850 + $0xd1] sm:$0xff]
  %v4096 = vld [vmem:[%s3850 + $0xe1] sm:$0xff]
  %v4097 = vld [vmem:[%s3850 + $0xf1] sm:$0xff]
  %v4098 = vld [vmem:[%s3850 + $0x101] sm:$0xff]
  %v4099 = vld [vmem:[%s3850 + $0x111] sm:$0xff]
  %v4100 = vld [vmem:[%s5 + $0x1c0] sm:$0xff]
  %v4101 = vld [vmem:[%s5 + $0x1c8] sm:$0xff]
  %v4102 = vld [vmem:[%s5 + $0x1d0] sm:$0xff]
  %v4103 = vld [vmem:[%s5 + $0x1d8] sm:$0xff]
  %v4104 = vld [vmem:[%s5 + $0x1e0] sm:$0xff]
  %v4105 = vld [vmem:[%s5 + $0x1e8] sm:$0xff]
  %v4106 = vld [vmem:[%s5 + $0x1f0] sm:$0xff]
  %v4107 = vld [vmem:[%s5 + $0x1f8] sm:$0xff]
  %v4109 = vsel %vm2423, %v4084, 0
  %v4112 = vsel %vm2423, %v4085, 0
  %v4115 = vsel %vm2423, %v4086, 0
  %v4118 = vsel %vm2423, %v4087, 0
  %v4121 = vsel %vm2423, %v4088, 0
  %v4124 = vsel %vm2423, %v4089, 0
  %v4127 = vsel %vm2423, %v4090, 0
  %v4130 = vsel %vm2423, %v4091, 0
  %v4133 = vsel %vm2423, %v4092, 0
  %v4136 = vsel %vm2423, %v4093, 0
  %v4139 = vsel %vm2423, %v4094, 0
  %v4142 = vsel %vm2423, %v4095, 0
  %v4145 = vsel %vm2423, %v4096, 0
  %v4148 = vsel %vm2423, %v4097, 0
  %v4151 = vsel %vm2423, %v4098, 0
  %v4154 = vsel %vm2423, %v4099, 0
  %4156 = vmatprep.subr.mxu0 0.0
  %4157 = vmatpush1.msra.mxu0 0.0
  %4158 = vmatprep.subr.mxu0 0.0
  %4159 = vmatpush1.msra.mxu0 0.0
  %4160 = vmatprep.subr.mxu0 0.0
  %4161 = vmatpush1.msra.mxu0 0.0
  %4162 = vmatprep.subr.mxu0 0.0
  %4163 = vmatpush1.msra.mxu0 0.0
  %4164 = vmatprep.subr.mxu0 0.0
  %4165 = vmatpush1.msra.mxu0 0.0
  %4166 = vmatprep.subr.mxu0 0.0
  %4167 = vmatpush1.msra.mxu0 0.0
  %4168 = vmatprep.subr.mxu0 0.0
  %4169 = vmatpush1.msra.mxu0 0.0
  %4170 = vmatprep.subr.mxu0 0.0
  %4171 = vmatpush1.msra.mxu0 0.0
  %4172 = vmatprep.subr.mxu0 0.0
  %4173 = vmatpush1.msra.mxu0 %v4107
  %4174 = vmatprep.subr.mxu0 0.0
  %4175 = vmatpush1.msra.mxu0 %v4106
  %4176 = vmatprep.subr.mxu0 0.0
  %4177 = vmatpush1.msra.mxu0 %v4105
  %4178 = vmatprep.subr.mxu0 0.0
  %4179 = vmatpush1.msra.mxu0 %v4104
  %4180 = vmatprep.subr.mxu0 0.0
  %4181 = vmatpush1.msra.mxu0 %v4103
  %4182 = vmatprep.subr.mxu0 0.0
  %4183 = vmatpush1.msra.mxu0 %v4102
  %4184 = vmatprep.subr.mxu0 0.0
  %4185 = vmatpush1.msra.mxu0 %v4101
  %4186 = vmatprep.subr.mxu0 0.0
  %4187 = vmatpush1.msra.mxu0 %v4100
  %4188 = vmatprep.subr.mxu0 0.0
  %4189 = vmatpush2.msra.mxu0 0.0
  %4190 = vmatprep.subr.mxu0 0.0
  %4191 = vmatpush2.msra.mxu0 0.0
  %4192 = vmatprep.subr.mxu0 0.0
  %4193 = vmatpush2.msra.mxu0 0.0
  %4194 = vmatprep.subr.mxu0 0.0
  %4195 = vmatpush2.msra.mxu0 0.0
  %4196 = vmatprep.subr.mxu0 0.0
  %4197 = vmatpush2.msra.mxu0 0.0
  %4198 = vmatprep.subr.mxu0 0.0
  %4199 = vmatpush2.msra.mxu0 0.0
  %4200 = vmatprep.subr.mxu0 0.0
  %4201 = vmatpush2.msra.mxu0 0.0
  %4202 = vmatprep.subr.mxu0 0.0
  %4203 = vmatpush2.msra.mxu0 0.0
  %4204 = vmatprep.subr.mxu0 0.0
  %4205 = vmatpush2.msra.mxu0 0.0
  %4206 = vmatprep.subr.mxu0 0.0
  %4207 = vmatpush2.msra.mxu0 0.0
  %4208 = vmatprep.subr.mxu0 0.0
  %4209 = vmatpush2.msra.mxu0 0.0
  %4210 = vmatprep.subr.mxu0 0.0
  %4211 = vmatpush2.msra.mxu0 0.0
  %4212 = vmatprep.subr.mxu0 0.0
  %4213 = vmatpush2.msra.mxu0 0.0
  %4214 = vmatprep.subr.mxu0 0.0
  %4215 = vmatpush2.msra.mxu0 0.0
  %4216 = vmatprep.subr.mxu0 0.0
  %4217 = vmatpush2.msra.mxu0 0.0
  %4218 = vmatprep.subr.mxu0 0.0
  %4219 = vmatpush2.msra.mxu0 0.0
  %4220 = vmatprep.mubr.f32.mxu0 0.0
  %4221 = vmatmul.mubr.f32.gmra.mxu0 %v4109
  %v4222 = vpop.f32.mrf.mxu0
  %v4223 = vadd.f32 0.0, %v4222
  %v4224 = vpop.f32.mrf.mxu0
  %4225 = vmatprep.mubr.f32.mxu0 0.0
  %4226 = vmatmul.mubr.f32.gmra.mxu0 %v4112
  %v4227 = vpop.f32.mrf.mxu0
  %v4228 = vadd.f32 0.0, %v4227
  %v4229 = vpop.f32.mrf.mxu0
  %4230 = vmatprep.mubr.f32.mxu0 0.0
  %4231 = vmatmul.mubr.f32.gmra.mxu0 %v4115
  %v4232 = vpop.f32.mrf.mxu0
  %v4233 = vadd.f32 0.0, %v4232
  %v4234 = vpop.f32.mrf.mxu0
  %4235 = vmatprep.mubr.f32.mxu0 0.0
  %4236 = vmatmul.mubr.f32.gmra.mxu0 %v4118
  %v4237 = vpop.f32.mrf.mxu0
  %v4238 = vadd.f32 0.0, %v4237
  %v4239 = vpop.f32.mrf.mxu0
  %4240 = vmatprep.mubr.f32.mxu0 0.0
  %4241 = vmatmul.mubr.f32.gmra.mxu0 %v4121
  %v4242 = vpop.f32.mrf.mxu0
  %v4243 = vadd.f32 0.0, %v4242
  %v4244 = vpop.f32.mrf.mxu0
  %4245 = vmatprep.mubr.f32.mxu0 0.0
  %4246 = vmatmul.mubr.f32.gmra.mxu0 %v4124
  %v4247 = vpop.f32.mrf.mxu0
  %v4248 = vadd.f32 0.0, %v4247
  %v4249 = vpop.f32.mrf.mxu0
  %4250 = vmatprep.mubr.f32.mxu0 0.0
  %4251 = vmatmul.mubr.f32.gmra.mxu0 %v4127
  %v4252 = vpop.f32.mrf.mxu0
  %v4253 = vadd.f32 0.0, %v4252
  %v4254 = vpop.f32.mrf.mxu0
  %4255 = vmatprep.mubr.f32.mxu0 0.0
  %4256 = vmatmul.mubr.f32.gmra.mxu0 %v4130
  %v4257 = vpop.f32.mrf.mxu0
  %v4258 = vadd.f32 0.0, %v4257
  %v4259 = vpop.f32.mrf.mxu0
  %4260 = vmatprep.mubr.f32.mxu0 0.0
  %4261 = vmatmul.mubr.f32.gmra.mxu0 %v4133
  %v4262 = vpop.f32.mrf.mxu0
  %v4263 = vadd.f32 0.0, %v4262
  %v4264 = vpop.f32.mrf.mxu0
  %4265 = vmatprep.mubr.f32.mxu0 0.0
  %4266 = vmatmul.mubr.f32.gmra.mxu0 %v4136
  %v4267 = vpop.f32.mrf.mxu0
  %v4268 = vadd.f32 0.0, %v4267
  %v4269 = vpop.f32.mrf.mxu0
  %4270 = vmatprep.mubr.f32.mxu0 0.0
  %4271 = vmatmul.mubr.f32.gmra.mxu0 %v4139
  %v4272 = vpop.f32.mrf.mxu0
  %v4273 = vadd.f32 0.0, %v4272
  %v4274 = vpop.f32.mrf.mxu0
  %4275 = vmatprep.mubr.f32.mxu0 0.0
  %4276 = vmatmul.mubr.f32.gmra.mxu0 %v4142
  %v4277 = vpop.f32.mrf.mxu0
  %v4278 = vadd.f32 0.0, %v4277
  %v4279 = vpop.f32.mrf.mxu0
  %4280 = vmatprep.mubr.f32.mxu0 0.0
  %4281 = vmatmul.mubr.f32.gmra.mxu0 %v4145
  %v4282 = vpop.f32.mrf.mxu0
  %v4283 = vadd.f32 0.0, %v4282
  %v4284 = vpop.f32.mrf.mxu0
  %4285 = vmatprep.mubr.f32.mxu0 0.0
  %4286 = vmatmul.mubr.f32.gmra.mxu0 %v4148
  %v4287 = vpop.f32.mrf.mxu0
  %v4288 = vadd.f32 0.0, %v4287
  %v4289 = vpop.f32.mrf.mxu0
  %4290 = vmatprep.mubr.f32.mxu0 0.0
  %4291 = vmatmul.mubr.f32.gmra.mxu0 %v4151
  %v4292 = vpop.f32.mrf.mxu0
  %v4293 = vadd.f32 0.0, %v4292
  %v4294 = vpop.f32.mrf.mxu0
  %4295 = vmatprep.mubr.f32.mxu0 0.0
  %4296 = vmatmul.mubr.f32.gmra.mxu0 %v4154
  %v4297 = vpop.f32.mrf.mxu0
  %v4298 = vadd.f32 0.0, %v4297
  %v4299 = vpop.f32.mrf.mxu0
  %4300 = vdwg.mxu0
  %v4301 = vadd.f32 %v4068, %v4223
  %v4302 = vadd.f32 %v4069, %v4228
  %v4303 = vadd.f32 %v4070, %v4233
  %v4304 = vadd.f32 %v4071, %v4238
  %v4305 = vadd.f32 %v4072, %v4243
  %v4306 = vadd.f32 %v4073, %v4248
  %v4307 = vadd.f32 %v4074, %v4253
  %v4308 = vadd.f32 %v4075, %v4258
  %v4309 = vadd.f32 %v4076, %v4263
  %v4310 = vadd.f32 %v4077, %v4268
  %v4311 = vadd.f32 %v4078, %v4273
  %v4312 = vadd.f32 %v4079, %v4278
  %v4313 = vadd.f32 %v4080, %v4283
  %v4314 = vadd.f32 %v4081, %v4288
  %v4315 = vadd.f32 %v4082, %v4293
  %v4316 = vadd.f32 %v4083, %v4298
  %v4317 = vld [vmem:[%s3850 + $0x2] sm:$0xff]
  %v4318 = vld [vmem:[%s3850 + $0x12] sm:$0xff]
  %v4319 = vld [vmem:[%s3850 + $0x22] sm:$0xff]
  %v4320 = vld [vmem:[%s3850 + $0x32] sm:$0xff]
  %v4321 = vld [vmem:[%s3850 + $0x42] sm:$0xff]
  %v4322 = vld [vmem:[%s3850 + $0x52] sm:$0xff]
  %v4323 = vld [vmem:[%s3850 + $0x62] sm:$0xff]
  %v4324 = vld [vmem:[%s3850 + $0x72] sm:$0xff]
  %v4325 = vld [vmem:[%s3850 + $0xa2] sm:$0xff]
  %v4326 = vld [vmem:[%s3850 + $0xb2] sm:$0xff]
  %v4327 = vld [vmem:[%s3850 + $0xc2] sm:$0xff]
  %v4328 = vld [vmem:[%s3850 + $0xd2] sm:$0xff]
  %v4329 = vld [vmem:[%s3850 + $0xe2] sm:$0xff]
  %v4330 = vld [vmem:[%s3850 + $0xf2] sm:$0xff]
  %v4331 = vld [vmem:[%s3850 + $0x102] sm:$0xff]
  %v4332 = vld [vmem:[%s3850 + $0x112] sm:$0xff]
  %v4333 = vld [vmem:[%s5 + $0x200] sm:$0xff]
  %v4334 = vld [vmem:[%s5 + $0x208] sm:$0xff]
  %v4335 = vld [vmem:[%s5 + $0x210] sm:$0xff]
  %v4336 = vld [vmem:[%s5 + $0x218] sm:$0xff]
  %v4337 = vld [vmem:[%s5 + $0x220] sm:$0xff]
  %v4338 = vld [vmem:[%s5 + $0x228] sm:$0xff]
  %v4339 = vld [vmem:[%s5 + $0x230] sm:$0xff]
  %v4340 = vld [vmem:[%s5 + $0x238] sm:$0xff]
  %v4342 = vsel %vm2423, %v4317, 0
  %v4345 = vsel %vm2423, %v4318, 0
  %v4348 = vsel %vm2423, %v4319, 0
  %v4351 = vsel %vm2423, %v4320, 0
  %v4354 = vsel %vm2423, %v4321, 0
  %v4357 = vsel %vm2423, %v4322, 0
  %v4360 = vsel %vm2423, %v4323, 0
  %v4363 = vsel %vm2423, %v4324, 0
  %v4366 = vsel %vm2423, %v4325, 0
  %v4369 = vsel %vm2423, %v4326, 0
  %v4372 = vsel %vm2423, %v4327, 0
  %v4375 = vsel %vm2423, %v4328, 0
  %v4378 = vsel %vm2423, %v4329, 0
  %v4381 = vsel %vm2423, %v4330, 0
  %v4384 = vsel %vm2423, %v4331, 0
  %v4387 = vsel %vm2423, %v4332, 0
  %4389 = vmatprep.subr.mxu0 0.0
  %4390 = vmatpush1.msra.mxu0 0.0
  %4391 = vmatprep.subr.mxu0 0.0
  %4392 = vmatpush1.msra.mxu0 0.0
  %4393 = vmatprep.subr.mxu0 0.0
  %4394 = vmatpush1.msra.mxu0 0.0
  %4395 = vmatprep.subr.mxu0 0.0
  %4396 = vmatpush1.msra.mxu0 0.0
  %4397 = vmatprep.subr.mxu0 0.0
  %4398 = vmatpush1.msra.mxu0 0.0
  %4399 = vmatprep.subr.mxu0 0.0
  %4400 = vmatpush1.msra.mxu0 0.0
  %4401 = vmatprep.subr.mxu0 0.0
  %4402 = vmatpush1.msra.mxu0 0.0
  %4403 = vmatprep.subr.mxu0 0.0
  %4404 = vmatpush1.msra.mxu0 0.0
  %4405 = vmatprep.subr.mxu0 0.0
  %4406 = vmatpush1.msra.mxu0 %v4340
  %4407 = vmatprep.subr.mxu0 0.0
  %4408 = vmatpush1.msra.mxu0 %v4339
  %4409 = vmatprep.subr.mxu0 0.0
  %4410 = vmatpush1.msra.mxu0 %v4338
  %4411 = vmatprep.subr.mxu0 0.0
  %4412 = vmatpush1.msra.mxu0 %v4337
  %4413 = vmatprep.subr.mxu0 0.0
  %4414 = vmatpush1.msra.mxu0 %v4336
  %4415 = vmatprep.subr.mxu0 0.0
  %4416 = vmatpush1.msra.mxu0 %v4335
  %4417 = vmatprep.subr.mxu0 0.0
  %4418 = vmatpush1.msra.mxu0 %v4334
  %4419 = vmatprep.subr.mxu0 0.0
  %4420 = vmatpush1.msra.mxu0 %v4333
  %4421 = vmatprep.subr.mxu0 0.0
  %4422 = vmatpush2.msra.mxu0 0.0
  %4423 = vmatprep.subr.mxu0 0.0
  %4424 = vmatpush2.msra.mxu0 0.0
  %4425 = vmatprep.subr.mxu0 0.0
  %4426 = vmatpush2.msra.mxu0 0.0
  %4427 = vmatprep.subr.mxu0 0.0
  %4428 = vmatpush2.msra.mxu0 0.0
  %4429 = vmatprep.subr.mxu0 0.0
  %4430 = vmatpush2.msra.mxu0 0.0
  %4431 = vmatprep.subr.mxu0 0.0
  %4432 = vmatpush2.msra.mxu0 0.0
  %4433 = vmatprep.subr.mxu0 0.0
  %4434 = vmatpush2.msra.mxu0 0.0
  %4435 = vmatprep.subr.mxu0 0.0
  %4436 = vmatpush2.msra.mxu0 0.0
  %4437 = vmatprep.subr.mxu0 0.0
  %4438 = vmatpush2.msra.mxu0 0.0
  %4439 = vmatprep.subr.mxu0 0.0
  %4440 = vmatpush2.msra.mxu0 0.0
  %4441 = vmatprep.subr.mxu0 0.0
  %4442 = vmatpush2.msra.mxu0 0.0
  %4443 = vmatprep.subr.mxu0 0.0
  %4444 = vmatpush2.msra.mxu0 0.0
  %4445 = vmatprep.subr.mxu0 0.0
  %4446 = vmatpush2.msra.mxu0 0.0
  %4447 = vmatprep.subr.mxu0 0.0
  %4448 = vmatpush2.msra.mxu0 0.0
  %4449 = vmatprep.subr.mxu0 0.0
  %4450 = vmatpush2.msra.mxu0 0.0
  %4451 = vmatprep.subr.mxu0 0.0
  %4452 = vmatpush2.msra.mxu0 0.0
  %4453 = vmatprep.mubr.f32.mxu0 0.0
  %4454 = vmatmul.mubr.f32.gmra.mxu0 %v4342
  %v4455 = vpop.f32.mrf.mxu0
  %v4456 = vadd.f32 0.0, %v4455
  %v4457 = vpop.f32.mrf.mxu0
  %4458 = vmatprep.mubr.f32.mxu0 0.0
  %4459 = vmatmul.mubr.f32.gmra.mxu0 %v4345
  %v4460 = vpop.f32.mrf.mxu0
  %v4461 = vadd.f32 0.0, %v4460
  %v4462 = vpop.f32.mrf.mxu0
  %4463 = vmatprep.mubr.f32.mxu0 0.0
  %4464 = vmatmul.mubr.f32.gmra.mxu0 %v4348
  %v4465 = vpop.f32.mrf.mxu0
  %v4466 = vadd.f32 0.0, %v4465
  %v4467 = vpop.f32.mrf.mxu0
  %4468 = vmatprep.mubr.f32.mxu0 0.0
  %4469 = vmatmul.mubr.f32.gmra.mxu0 %v4351
  %v4470 = vpop.f32.mrf.mxu0
  %v4471 = vadd.f32 0.0, %v4470
  %v4472 = vpop.f32.mrf.mxu0
  %4473 = vmatprep.mubr.f32.mxu0 0.0
  %4474 = vmatmul.mubr.f32.gmra.mxu0 %v4354
  %v4475 = vpop.f32.mrf.mxu0
  %v4476 = vadd.f32 0.0, %v4475
  %v4477 = vpop.f32.mrf.mxu0
  %4478 = vmatprep.mubr.f32.mxu0 0.0
  %4479 = vmatmul.mubr.f32.gmra.mxu0 %v4357
  %v4480 = vpop.f32.mrf.mxu0
  %v4481 = vadd.f32 0.0, %v4480
  %v4482 = vpop.f32.mrf.mxu0
  %4483 = vmatprep.mubr.f32.mxu0 0.0
  %4484 = vmatmul.mubr.f32.gmra.mxu0 %v4360
  %v4485 = vpop.f32.mrf.mxu0
  %v4486 = vadd.f32 0.0, %v4485
  %v4487 = vpop.f32.mrf.mxu0
  %4488 = vmatprep.mubr.f32.mxu0 0.0
  %4489 = vmatmul.mubr.f32.gmra.mxu0 %v4363
  %v4490 = vpop.f32.mrf.mxu0
  %v4491 = vadd.f32 0.0, %v4490
  %v4492 = vpop.f32.mrf.mxu0
  %4493 = vmatprep.mubr.f32.mxu0 0.0
  %4494 = vmatmul.mubr.f32.gmra.mxu0 %v4366
  %v4495 = vpop.f32.mrf.mxu0
  %v4496 = vadd.f32 0.0, %v4495
  %v4497 = vpop.f32.mrf.mxu0
  %4498 = vmatprep.mubr.f32.mxu0 0.0
  %4499 = vmatmul.mubr.f32.gmra.mxu0 %v4369
  %v4500 = vpop.f32.mrf.mxu0
  %v4501 = vadd.f32 0.0, %v4500
  %v4502 = vpop.f32.mrf.mxu0
  %4503 = vmatprep.mubr.f32.mxu0 0.0
  %4504 = vmatmul.mubr.f32.gmra.mxu0 %v4372
  %v4505 = vpop.f32.mrf.mxu0
  %v4506 = vadd.f32 0.0, %v4505
  %v4507 = vpop.f32.mrf.mxu0
  %4508 = vmatprep.mubr.f32.mxu0 0.0
  %4509 = vmatmul.mubr.f32.gmra.mxu0 %v4375
  %v4510 = vpop.f32.mrf.mxu0
  %v4511 = vadd.f32 0.0, %v4510
  %v4512 = vpop.f32.mrf.mxu0
  %4513 = vmatprep.mubr.f32.mxu0 0.0
  %4514 = vmatmul.mubr.f32.gmra.mxu0 %v4378
  %v4515 = vpop.f32.mrf.mxu0
  %v4516 = vadd.f32 0.0, %v4515
  %v4517 = vpop.f32.mrf.mxu0
  %4518 = vmatprep.mubr.f32.mxu0 0.0
  %4519 = vmatmul.mubr.f32.gmra.mxu0 %v4381
  %v4520 = vpop.f32.mrf.mxu0
  %v4521 = vadd.f32 0.0, %v4520
  %v4522 = vpop.f32.mrf.mxu0
  %4523 = vmatprep.mubr.f32.mxu0 0.0
  %4524 = vmatmul.mubr.f32.gmra.mxu0 %v4384
  %v4525 = vpop.f32.mrf.mxu0
  %v4526 = vadd.f32 0.0, %v4525
  %v4527 = vpop.f32.mrf.mxu0
  %4528 = vmatprep.mubr.f32.mxu0 0.0
  %4529 = vmatmul.mubr.f32.gmra.mxu0 %v4387
  %v4530 = vpop.f32.mrf.mxu0
  %v4531 = vadd.f32 0.0, %v4530
  %v4532 = vpop.f32.mrf.mxu0
  %4533 = vdwg.mxu0
  %v4534 = vadd.f32 %v4301, %v4456
  %v4535 = vadd.f32 %v4302, %v4461
  %v4536 = vadd.f32 %v4303, %v4466
  %v4537 = vadd.f32 %v4304, %v4471
  %v4538 = vadd.f32 %v4305, %v4476
  %v4539 = vadd.f32 %v4306, %v4481
  %v4540 = vadd.f32 %v4307, %v4486
  %v4541 = vadd.f32 %v4308, %v4491
  %v4542 = vadd.f32 %v4309, %v4496
  %v4543 = vadd.f32 %v4310, %v4501
  %v4544 = vadd.f32 %v4311, %v4506
  %v4545 = vadd.f32 %v4312, %v4511
  %v4546 = vadd.f32 %v4313, %v4516
  %v4547 = vadd.f32 %v4314, %v4521
  %v4548 = vadd.f32 %v4315, %v4526
  %v4549 = vadd.f32 %v4316, %v4531
  %v4550 = vld [vmem:[%s6] sm:$0x1]
  %v4552 = vlaneseq
  %v4553 = vshrl.u32 %v4552, 7
  %v4554 = vsub.s32 0, %v4553
  %v4555 = vrot.slane %v4550, %v4554
  %v4557 = vadd.f32 %v4534, %v4555
  %v4558 = vadd.f32 %v4535, %v4555
  %v4559 = vadd.f32 %v4536, %v4555
  %v4560 = vadd.f32 %v4537, %v4555
  %v4561 = vadd.f32 %v4538, %v4555
  %v4562 = vadd.f32 %v4539, %v4555
  %v4563 = vadd.f32 %v4540, %v4555
  %v4564 = vadd.f32 %v4541, %v4555
  %v4565 = vadd.f32 %v4542, %v4555
  %v4566 = vadd.f32 %v4543, %v4555
  %v4567 = vadd.f32 %v4544, %v4555
  %v4568 = vadd.f32 %v4545, %v4555
  %v4569 = vadd.f32 %v4546, %v4555
  %v4570 = vadd.f32 %v4547, %v4555
  %v4571 = vadd.f32 %v4548, %v4555
  %v4572 = vadd.f32 %v4549, %v4555
  %v4573 = vmax.f32 %v4557, 0.0
  %v4574 = vmax.f32 %v4558, 0.0
  %v4575 = vmax.f32 %v4559, 0.0
  %v4576 = vmax.f32 %v4560, 0.0
  %v4577 = vmax.f32 %v4561, 0.0
  %v4578 = vmax.f32 %v4562, 0.0
  %v4579 = vmax.f32 %v4563, 0.0
  %v4580 = vmax.f32 %v4564, 0.0
  %v4581 = vmax.f32 %v4565, 0.0
  %v4582 = vmax.f32 %v4566, 0.0
  %v4583 = vmax.f32 %v4567, 0.0
  %v4584 = vmax.f32 %v4568, 0.0
  %v4585 = vmax.f32 %v4569, 0.0
  %v4586 = vmax.f32 %v4570, 0.0
  %v4587 = vmax.f32 %v4571, 0.0
  %v4588 = vmax.f32 %v4572, 0.0
  %v4589 = vld [vmem:[%s7] sm:$0xff]
  %v4590 = vld [vmem:[%s8] sm:$0xff]
  %4592 = vset.pattern.permute.xlu0 0
  %4593 = vperm.xlu0 %4592, %v4590
  %v4594 = vpop.permute.xlu0 %4593
  %4596 = vmatprep.subr.mxu0 0.0
  %4597 = vmatpush1.xpose.msra.mxu0 %v4588
  %4598 = vmatprep.subr.mxu0 0.0
  %4599 = vmatpush1.xpose.msra.mxu0 %v4587
  %4600 = vmatprep.subr.mxu0 0.0
  %4601 = vmatpush1.xpose.msra.mxu0 %v4586
  %4602 = vmatprep.subr.mxu0 0.0
  %4603 = vmatpush1.xpose.msra.mxu0 %v4585
  %4604 = vmatprep.subr.mxu0 0.0
  %4605 = vmatpush1.xpose.msra.mxu0 %v4584
  %4606 = vmatprep.subr.mxu0 0.0
  %4607 = vmatpush1.xpose.msra.mxu0 %v4583
  %4608 = vmatprep.subr.mxu0 0.0
  %4609 = vmatpush1.xpose.msra.mxu0 %v4582
  %4610 = vmatprep.subr.mxu0 0.0
  %4611 = vmatpush1.xpose.msra.mxu0 %v4581
  %4612 = vmatprep.subr.mxu0 0.0
  %4613 = vmatpush1.xpose.msra.mxu0 %v4580
  %4614 = vmatprep.subr.mxu0 0.0
  %4615 = vmatpush1.xpose.msra.mxu0 %v4579
  %4616 = vmatprep.subr.mxu0 0.0
  %4617 = vmatpush1.xpose.msra.mxu0 %v4578
  %4618 = vmatprep.subr.mxu0 0.0
  %4619 = vmatpush1.xpose.msra.mxu0 %v4577
  %4620 = vmatprep.subr.mxu0 0.0
  %4621 = vmatpush1.xpose.msra.mxu0 %v4576
  %4622 = vmatprep.subr.mxu0 0.0
  %4623 = vmatpush1.xpose.msra.mxu0 %v4575
  %4624 = vmatprep.subr.mxu0 0.0
  %4625 = vmatpush1.xpose.msra.mxu0 %v4574
  %4626 = vmatprep.subr.mxu0 0.0
  %4627 = vmatpush1.xpose.msra.mxu0 %v4573
  %4628 = vmatprep.subr.mxu0 0.0
  %4629 = vmatpush2.xpose.msra.mxu0 0.0
  %4630 = vmatprep.subr.mxu0 0.0
  %4631 = vmatpush2.xpose.msra.mxu0 0.0
  %4632 = vmatprep.subr.mxu0 0.0
  %4633 = vmatpush2.xpose.msra.mxu0 0.0
  %4634 = vmatprep.subr.mxu0 0.0
  %4635 = vmatpush2.xpose.msra.mxu0 0.0
  %4636 = vmatprep.subr.mxu0 0.0
  %4637 = vmatpush2.xpose.msra.mxu0 0.0
  %4638 = vmatprep.subr.mxu0 0.0
  %4639 = vmatpush2.xpose.msra.mxu0 0.0
  %4640 = vmatprep.subr.mxu0 0.0
  %4641 = vmatpush2.xpose.msra.mxu0 0.0
  %4642 = vmatprep.subr.mxu0 0.0
  %4643 = vmatpush2.xpose.msra.mxu0 0.0
  %4644 = vmatprep.subr.mxu0 0.0
  %4645 = vmatpush2.xpose.msra.mxu0 0.0
  %4646 = vmatprep.subr.mxu0 0.0
  %4647 = vmatpush2.xpose.msra.mxu0 0.0
  %4648 = vmatprep.subr.mxu0 0.0
  %4649 = vmatpush2.xpose.msra.mxu0 0.0
  %4650 = vmatprep.subr.mxu0 0.0
  %4651 = vmatpush2.xpose.msra.mxu0 0.0
  %4652 = vmatprep.subr.mxu0 0.0
  %4653 = vmatpush2.xpose.msra.mxu0 0.0
  %4654 = vmatprep.subr.mxu0 0.0
  %4655 = vmatpush2.xpose.msra.mxu0 0.0
  %4656 = vmatprep.subr.mxu0 0.0
  %4657 = vmatpush2.xpose.msra.mxu0 0.0
  %4658 = vmatprep.subr.mxu0 0.0
  %4659 = vmatpush2.xpose.msra.mxu0 0.0
  %4660 = vmatprep.mubr.f32.mxu0 0.0
  %4661 = vmatmul.mubr.f32.gmra.mxu0 %v4589
  %v4662 = vpop.f32.mrf.mxu0
  %v4663 = vadd.f32 %v4594, %v4662
  %v4664 = vpop.f32.mrf.mxu0
  %4665 = vdwg.mxu0
  %v4666 = vmax.f32 %v4663, 0.0
  %v4667 = vsel %vm128, %v4666, -inf
  %4668 = vmax.xlane.f32.xlu0 %v4667
  %v4669 = vpop.xlane.xlu0 %4668
  %v4670 = vrot.slane %v4669, 4
  %v4671 = vmax.f32 %v4669, %v4670
  %v4672 = vrot.slane %v4671, 2
  %v4673 = vmax.f32 %v4671, %v4672
  %v4674 = vrot.slane %v4673, 1
  %v4675 = vmax.f32 %v4673, %v4674
  %s4676 = vtos %v4675
  %v4677 = vstv %s4676
  %v4678 = vsub.f32 %v4666, %v4677
  %v4679 = vmul.f32 %v4678, 1.442695
  %v4680 = vpow.pop %v4679
  %v4681 = vsel %vm128, %v4680, 0.0
  %4682 = vadd.xlane.f32.xlu0 %v4681
  %v4683 = vpop.xlane.xlu0 %4682
  %v4684 = vrot.slane %v4683, 4
  %v4685 = vadd.f32 %v4683, %v4684
  %v4686 = vrot.slane %v4685, 2
  %v4687 = vadd.f32 %v4685, %v4686
  %v4688 = vrot.slane %v4687, 1
  %v4689 = vadd.f32 %v4687, %v4688
  %s4690 = vtos %v4689
  %v4691 = vstv %s4690
  %v4692 = vrcp.pop %v4691
  %v4693 = vmul.f32 %v4680, %v4692
  %4694 = vst [vmem:[%s14] sm:$0xf] %v4693
  %v4695 = vld [vmem:[%s9] sm:$0xff]
  %v4696 = vld [vmem:[%s9 + $0x8] sm:$0xff]
  %v4697 = vld [vmem:[%s9 + $0x10] sm:$0xff]
  %v4698 = vld [vmem:[%s9 + $0x18] sm:$0xff]
  %v4699 = vld [vmem:[%s9 + $0x20] sm:$0xff]
  %v4700 = vld [vmem:[%s9 + $0x28] sm:$0xff]
  %v4701 = vld [vmem:[%s9 + $0x30] sm:$0xff]
  %v4702 = vld [vmem:[%s9 + $0x38] sm:$0xff]
  %v4703 = vld [vmem:[%s10] sm:$0xff]
  %v4704 = vld [vmem:[%s10 + $0x8] sm:$0xff]
  %v4705 = vld [vmem:[%s10 + $0x10] sm:$0xff]
  %v4706 = vld [vmem:[%s10 + $0x18] sm:$0xff]
  %v4707 = vld [vmem:[%s10 + $0x20] sm:$0xff]
  %v4708 = vld [vmem:[%s10 + $0x28] sm:$0xff]
  %v4709 = vld [vmem:[%s10 + $0x30] sm:$0xff]
  %v4710 = vld [vmem:[%s10 + $0x38] sm:$0xff]
  %v4711 = vld [vmem:[%s11] sm:$0x1]
  %v4712 = vld [vmem:[%s12] sm:$0xff]
  %v4713 = vld [vmem:[%s12 + $0x8] sm:$0xff]
  %v4714 = vld [vmem:[%s12 + $0x10] sm:$0xff]
  %v4715 = vld [vmem:[%s12 + $0x18] sm:$0xff]
  %v4716 = vld [vmem:[%s12 + $0x20] sm:$0xff]
  %v4717 = vld [vmem:[%s12 + $0x28] sm:$0xff]
  %v4718 = vld [vmem:[%s12 + $0x30] sm:$0xff]
  %v4719 = vld [vmem:[%s12 + $0x38] sm:$0xff]
  %v4720 = vld [vmem:[#allocation4] sm:$0x1]
  %v4722 = vrot.slane %v4666, 5
  %v4723 = vsel %vm2423, %v4722, 0
  %4725 = vmatprep.subr.mxu0 0.0
  %4726 = vmatpush1.msra.mxu0 0.0
  %4727 = vmatprep.subr.mxu0 0.0
  %4728 = vmatpush1.msra.mxu0 0.0
  %4729 = vmatprep.subr.mxu0 0.0
  %4730 = vmatpush1.msra.mxu0 0.0
  %4731 = vmatprep.subr.mxu0 0.0
  %4732 = vmatpush1.msra.mxu0 0.0
  %4733 = vmatprep.subr.mxu0 0.0
  %4734 = vmatpush1.msra.mxu0 0.0
  %4735 = vmatprep.subr.mxu0 0.0
  %4736 = vmatpush1.msra.mxu0 0.0
  %4737 = vmatprep.subr.mxu0 0.0
  %4738 = vmatpush1.msra.mxu0 0.0
  %4739 = vmatprep.subr.mxu0 0.0
  %4740 = vmatpush1.msra.mxu0 0.0
  %4741 = vmatprep.subr.mxu0 0.0
  %4742 = vmatpush1.msra.mxu0 %v4710
  %4743 = vmatprep.subr.mxu0 0.0
  %4744 = vmatpush1.msra.mxu0 %v4709
  %4745 = vmatprep.subr.mxu0 0.0
  %4746 = vmatpush1.msra.mxu0 %v4708
  %4747 = vmatprep.subr.mxu0 0.0
  %4748 = vmatpush1.msra.mxu0 %v4707
  %4749 = vmatprep.subr.mxu0 0.0
  %4750 = vmatpush1.msra.mxu0 %v4706
  %4751 = vmatprep.subr.mxu0 0.0
  %4752 = vmatpush1.msra.mxu0 %v4705
  %4753 = vmatprep.subr.mxu0 0.0
  %4754 = vmatpush1.msra.mxu0 %v4704
  %4755 = vmatprep.subr.mxu0 0.0
  %4756 = vmatpush1.msra.mxu0 %v4703
  %4757 = vmatprep.subr.mxu0 0.0
  %4758 = vmatpush2.msra.mxu0 0.0
  %4759 = vmatprep.subr.mxu0 0.0
  %4760 = vmatpush2.msra.mxu0 0.0
  %4761 = vmatprep.subr.mxu0 0.0
  %4762 = vmatpush2.msra.mxu0 0.0
  %4763 = vmatprep.subr.mxu0 0.0
  %4764 = vmatpush2.msra.mxu0 0.0
  %4765 = vmatprep.subr.mxu0 0.0
  %4766 = vmatpush2.msra.mxu0 0.0
  %4767 = vmatprep.subr.mxu0 0.0
  %4768 = vmatpush2.msra.mxu0 0.0
  %4769 = vmatprep.subr.mxu0 0.0
  %4770 = vmatpush2.msra.mxu0 0.0
  %4771 = vmatprep.subr.mxu0 0.0
  %4772 = vmatpush2.msra.mxu0 0.0
  %4773 = vmatprep.subr.mxu0 0.0
  %4774 = vmatpush2.msra.mxu0 0.0
  %4775 = vmatprep.subr.mxu0 0.0
  %4776 = vmatpush2.msra.mxu0 0.0
  %4777 = vmatprep.subr.mxu0 0.0
  %4778 = vmatpush2.msra.mxu0 0.0
  %4779 = vmatprep.subr.mxu0 0.0
  %4780 = vmatpush2.msra.mxu0 0.0
  %4781 = vmatprep.subr.mxu0 0.0
  %4782 = vmatpush2.msra.mxu0 0.0
  %4783 = vmatprep.subr.mxu0 0.0
  %4784 = vmatpush2.msra.mxu0 0.0
  %4785 = vmatprep.subr.mxu0 0.0
  %4786 = vmatpush2.msra.mxu0 0.0
  %4787 = vmatprep.subr.mxu0 0.0
  %4788 = vmatpush2.msra.mxu0 0.0
  %4789 = vmatprep.mubr.f32.mxu0 0.0
  %4790 = vmatmul.mubr.f32.gmra.mxu0 %v4723
  %v4791 = vpop.f32.mrf.mxu0
  %v4792 = vadd.f32 0.0, %v4791
  %v4793 = vpop.f32.mrf.mxu0
  %4794 = vdwg.mxu0
  %v4795 = vrot.slane %v4666, 4
  %v4796 = vsel %vm2423, %v4795, 0
  %4798 = vmatprep.subr.mxu0 0.0
  %4799 = vmatpush1.msra.mxu0 0.0
  %4800 = vmatprep.subr.mxu0 0.0
  %4801 = vmatpush1.msra.mxu0 0.0
  %4802 = vmatprep.subr.mxu0 0.0
  %4803 = vmatpush1.msra.mxu0 0.0
  %4804 = vmatprep.subr.mxu0 0.0
  %4805 = vmatpush1.msra.mxu0 0.0
  %4806 = vmatprep.subr.mxu0 0.0
  %4807 = vmatpush1.msra.mxu0 0.0
  %4808 = vmatprep.subr.mxu0 0.0
  %4809 = vmatpush1.msra.mxu0 0.0
  %4810 = vmatprep.subr.mxu0 0.0
  %4811 = vmatpush1.msra.mxu0 0.0
  %4812 = vmatprep.subr.mxu0 0.0
  %4813 = vmatpush1.msra.mxu0 0.0
  %4814 = vmatprep.subr.mxu0 0.0
  %4815 = vmatpush1.msra.mxu0 %v4702
  %4816 = vmatprep.subr.mxu0 0.0
  %4817 = vmatpush1.msra.mxu0 %v4701
  %4818 = vmatprep.subr.mxu0 0.0
  %4819 = vmatpush1.msra.mxu0 %v4700
  %4820 = vmatprep.subr.mxu0 0.0
  %4821 = vmatpush1.msra.mxu0 %v4699
  %4822 = vmatprep.subr.mxu0 0.0
  %4823 = vmatpush1.msra.mxu0 %v4698
  %4824 = vmatprep.subr.mxu0 0.0
  %4825 = vmatpush1.msra.mxu0 %v4697
  %4826 = vmatprep.subr.mxu0 0.0
  %4827 = vmatpush1.msra.mxu0 %v4696
  %4828 = vmatprep.subr.mxu0 0.0
  %4829 = vmatpush1.msra.mxu0 %v4695
  %4830 = vmatprep.subr.mxu0 0.0
  %4831 = vmatpush2.msra.mxu0 0.0
  %4832 = vmatprep.subr.mxu0 0.0
  %4833 = vmatpush2.msra.mxu0 0.0
  %4834 = vmatprep.subr.mxu0 0.0
  %4835 = vmatpush2.msra.mxu0 0.0
  %4836 = vmatprep.subr.mxu0 0.0
  %4837 = vmatpush2.msra.mxu0 0.0
  %4838 = vmatprep.subr.mxu0 0.0
  %4839 = vmatpush2.msra.mxu0 0.0
  %4840 = vmatprep.subr.mxu0 0.0
  %4841 = vmatpush2.msra.mxu0 0.0
  %4842 = vmatprep.subr.mxu0 0.0
  %4843 = vmatpush2.msra.mxu0 0.0
  %4844 = vmatprep.subr.mxu0 0.0
  %4845 = vmatpush2.msra.mxu0 0.0
  %4846 = vmatprep.subr.mxu0 0.0
  %4847 = vmatpush2.msra.mxu0 0.0
  %4848 = vmatprep.subr.mxu0 0.0
  %4849 = vmatpush2.msra.mxu0 0.0
  %4850 = vmatprep.subr.mxu0 0.0
  %4851 = vmatpush2.msra.mxu0 0.0
  %4852 = vmatprep.subr.mxu0 0.0
  %4853 = vmatpush2.msra.mxu0 0.0
  %4854 = vmatprep.subr.mxu0 0.0
  %4855 = vmatpush2.msra.mxu0 0.0
  %4856 = vmatprep.subr.mxu0 0.0
  %4857 = vmatpush2.msra.mxu0 0.0
  %4858 = vmatprep.subr.mxu0 0.0
  %4859 = vmatpush2.msra.mxu0 0.0
  %4860 = vmatprep.subr.mxu0 0.0
  %4861 = vmatpush2.msra.mxu0 0.0
  %4862 = vmatprep.mubr.f32.mxu0 0.0
  %4863 = vmatmul.mubr.f32.gmra.mxu0 %v4796
  %v4864 = vpop.f32.mrf.mxu0
  %v4865 = vadd.f32 %v4792, %v4864
  %v4866 = vpop.f32.mrf.mxu0
  %4867 = vdwg.mxu0
  %v4868 = vadd.f32 %v4865, %v4711
  %v4869 = vmax.f32 %v4868, 0.0
  %v4871 = vsel %vm2423, %v4869, 0
  %4873 = vmatprep.subr.mxu0 0.0
  %4874 = vmatpush1.msra.mxu0 0.0
  %4875 = vmatprep.subr.mxu0 0.0
  %4876 = vmatpush1.msra.mxu0 0.0
  %4877 = vmatprep.subr.mxu0 0.0
  %4878 = vmatpush1.msra.mxu0 0.0
  %4879 = vmatprep.subr.mxu0 0.0
  %4880 = vmatpush1.msra.mxu0 0.0
  %4881 = vmatprep.subr.mxu0 0.0
  %4882 = vmatpush1.msra.mxu0 0.0
  %4883 = vmatprep.subr.mxu0 0.0
  %4884 = vmatpush1.msra.mxu0 0.0
  %4885 = vmatprep.subr.mxu0 0.0
  %4886 = vmatpush1.msra.mxu0 0.0
  %4887 = vmatprep.subr.mxu0 0.0
  %4888 = vmatpush1.msra.mxu0 0.0
  %4889 = vmatprep.subr.mxu0 0.0
  %4890 = vmatpush1.msra.mxu0 %v4719
  %4891 = vmatprep.subr.mxu0 0.0
  %4892 = vmatpush1.msra.mxu0 %v4718
  %4893 = vmatprep.subr.mxu0 0.0
  %4894 = vmatpush1.msra.mxu0 %v4717
  %4895 = vmatprep.subr.mxu0 0.0
  %4896 = vmatpush1.msra.mxu0 %v4716
  %4897 = vmatprep.subr.mxu0 0.0
  %4898 = vmatpush1.msra.mxu0 %v4715
  %4899 = vmatprep.subr.mxu0 0.0
  %4900 = vmatpush1.msra.mxu0 %v4714
  %4901 = vmatprep.subr.mxu0 0.0
  %4902 = vmatpush1.msra.mxu0 %v4713
  %4903 = vmatprep.subr.mxu0 0.0
  %4904 = vmatpush1.msra.mxu0 %v4712
  %4905 = vmatprep.subr.mxu0 0.0
  %4906 = vmatpush2.msra.mxu0 0.0
  %4907 = vmatprep.subr.mxu0 0.0
  %4908 = vmatpush2.msra.mxu0 0.0
  %4909 = vmatprep.subr.mxu0 0.0
  %4910 = vmatpush2.msra.mxu0 0.0
  %4911 = vmatprep.subr.mxu0 0.0
  %4912 = vmatpush2.msra.mxu0 0.0
  %4913 = vmatprep.subr.mxu0 0.0
  %4914 = vmatpush2.msra.mxu0 0.0
  %4915 = vmatprep.subr.mxu0 0.0
  %4916 = vmatpush2.msra.mxu0 0.0
  %4917 = vmatprep.subr.mxu0 0.0
  %4918 = vmatpush2.msra.mxu0 0.0
  %4919 = vmatprep.subr.mxu0 0.0
  %4920 = vmatpush2.msra.mxu0 0.0
  %4921 = vmatprep.subr.mxu0 0.0
  %4922 = vmatpush2.msra.mxu0 0.0
  %4923 = vmatprep.subr.mxu0 0.0
  %4924 = vmatpush2.msra.mxu0 0.0
  %4925 = vmatprep.subr.mxu0 0.0
  %4926 = vmatpush2.msra.mxu0 0.0
  %4927 = vmatprep.subr.mxu0 0.0
  %4928 = vmatpush2.msra.mxu0 0.0
  %4929 = vmatprep.subr.mxu0 0.0
  %4930 = vmatpush2.msra.mxu0 0.0
  %4931 = vmatprep.subr.mxu0 0.0
  %4932 = vmatpush2.msra.mxu0 0.0
  %4933 = vmatprep.subr.mxu0 0.0
  %4934 = vmatpush2.msra.mxu0 0.0
  %4935 = vmatprep.subr.mxu0 0.0
  %4936 = vmatpush2.msra.mxu0 0.0
  %4937 = vmatprep.mubr.f32.mxu0 0.0
  %4938 = vmatmul.mubr.f32.gmra.mxu0 %v4871
  %v4939 = vpop.f32.mrf.mxu0
  %v4940 = vadd.f32 %v4720, %v4939
  %v4941 = vpop.f32.mrf.mxu0
  %4942 = vdwg.mxu0
  %v4943 = vtanh.pop %v4940
  %4945 = vset.pattern.permute.xlu0 0
  %4946 = vperm.xlu0 %4945, %v4943
  %v4947 = vpop.permute.xlu0 %4946
  %4949 = vst [vmem:[%s15] sm:$0x1] %v4947
  %4950 = vrot.lane.b32.xlu0 %v4722, 64
  %v4951 = vpop.permute.xlu0 %4950
  %v4952 = vsel %vm2423, %v4951, 0
  %4954 = vmatprep.subr.mxu0 0.0
  %4955 = vmatpush1.msra.mxu0 0.0
  %4956 = vmatprep.subr.mxu0 0.0
  %4957 = vmatpush1.msra.mxu0 0.0
  %4958 = vmatprep.subr.mxu0 0.0
  %4959 = vmatpush1.msra.mxu0 0.0
  %4960 = vmatprep.subr.mxu0 0.0
  %4961 = vmatpush1.msra.mxu0 0.0
  %4962 = vmatprep.subr.mxu0 0.0
  %4963 = vmatpush1.msra.mxu0 0.0
  %4964 = vmatprep.subr.mxu0 0.0
  %4965 = vmatpush1.msra.mxu0 0.0
  %4966 = vmatprep.subr.mxu0 0.0
  %4967 = vmatpush1.msra.mxu0 0.0
  %4968 = vmatprep.subr.mxu0 0.0
  %4969 = vmatpush1.msra.mxu0 0.0
  %4970 = vmatprep.subr.mxu0 0.0
  %4971 = vmatpush1.msra.mxu0 %v4710
  %4972 = vmatprep.subr.mxu0 0.0
  %4973 = vmatpush1.msra.mxu0 %v4709
  %4974 = vmatprep.subr.mxu0 0.0
  %4975 = vmatpush1.msra.mxu0 %v4708
  %4976 = vmatprep.subr.mxu0 0.0
  %4977 = vmatpush1.msra.mxu0 %v4707
  %4978 = vmatprep.subr.mxu0 0.0
  %4979 = vmatpush1.msra.mxu0 %v4706
  %4980 = vmatprep.subr.mxu0 0.0
  %4981 = vmatpush1.msra.mxu0 %v4705
  %4982 = vmatprep.subr.mxu0 0.0
  %4983 = vmatpush1.msra.mxu0 %v4704
  %4984 = vmatprep.subr.mxu0 0.0
  %4985 = vmatpush1.msra.mxu0 %v4703
  %4986 = vmatprep.subr.mxu0 0.0
  %4987 = vmatpush2.msra.mxu0 0.0
  %4988 = vmatprep.subr.mxu0 0.0
  %4989 = vmatpush2.msra.mxu0 0.0
  %4990 = vmatprep.subr.mxu0 0.0
  %4991 = vmatpush2.msra.mxu0 0.0
  %4992 = vmatprep.subr.mxu0 0.0
  %4993 = vmatpush2.msra.mxu0 0.0
  %4994 = vmatprep.subr.mxu0 0.0
  %4995 = vmatpush2.msra.mxu0 0.0
  %4996 = vmatprep.subr.mxu0 0.0
  %4997 = vmatpush2.msra.mxu0 0.0
  %4998 = vmatprep.subr.mxu0 0.0
  %4999 = vmatpush2.msra.mxu0 0.0
  %5000 = vmatprep.subr.mxu0 0.0
  %5001 = vmatpush2.msra.mxu0 0.0
  %5002 = vmatprep.subr.mxu0 0.0
  %5003 = vmatpush2.msra.mxu0 0.0
  %5004 = vmatprep.subr.mxu0 0.0
  %5005 = vmatpush2.msra.mxu0 0.0
  %5006 = vmatprep.subr.mxu0 0.0
  %5007 = vmatpush2.msra.mxu0 0.0
  %5008 = vmatprep.subr.mxu0 0.0
  %5009 = vmatpush2.msra.mxu0 0.0
  %5010 = vmatprep.subr.mxu0 0.0
  %5011 = vmatpush2.msra.mxu0 0.0
  %5012 = vmatprep.subr.mxu0 0.0
  %5013 = vmatpush2.msra.mxu0 0.0
  %5014 = vmatprep.subr.mxu0 0.0
  %5015 = vmatpush2.msra.mxu0 0.0
  %5016 = vmatprep.subr.mxu0 0.0
  %5017 = vmatpush2.msra.mxu0 0.0
  %5018 = vmatprep.mubr.f32.mxu0 0.0
  %5019 = vmatmul.mubr.f32.gmra.mxu0 %v4952
  %v5020 = vpop.f32.mrf.mxu0
  %v5021 = vadd.f32 0.0, %v5020
  %v5022 = vpop.f32.mrf.mxu0
  %5023 = vdwg.mxu0
  %5024 = vrot.lane.b32.xlu0 %v4795, 64
  %v5025 = vpop.permute.xlu0 %5024
  %v5026 = vsel %vm2423, %v5025, 0
  %5028 = vmatprep.subr.mxu0 0.0
  %5029 = vmatpush1.msra.mxu0 0.0
  %5030 = vmatprep.subr.mxu0 0.0
  %5031 = vmatpush1.msra.mxu0 0.0
  %5032 = vmatprep.subr.mxu0 0.0
  %5033 = vmatpush1.msra.mxu0 0.0
  %5034 = vmatprep.subr.mxu0 0.0
  %5035 = vmatpush1.msra.mxu0 0.0
  %5036 = vmatprep.subr.mxu0 0.0
  %5037 = vmatpush1.msra.mxu0 0.0
  %5038 = vmatprep.subr.mxu0 0.0
  %5039 = vmatpush1.msra.mxu0 0.0
  %5040 = vmatprep.subr.mxu0 0.0
  %5041 = vmatpush1.msra.mxu0 0.0
  %5042 = vmatprep.subr.mxu0 0.0
  %5043 = vmatpush1.msra.mxu0 0.0
  %5044 = vmatprep.subr.mxu0 0.0
  %5045 = vmatpush1.msra.mxu0 %v4702
  %5046 = vmatprep.subr.mxu0 0.0
  %5047 = vmatpush1.msra.mxu0 %v4701
  %5048 = vmatprep.subr.mxu0 0.0
  %5049 = vmatpush1.msra.mxu0 %v4700
  %5050 = vmatprep.subr.mxu0 0.0
  %5051 = vmatpush1.msra.mxu0 %v4699
  %5052 = vmatprep.subr.mxu0 0.0
  %5053 = vmatpush1.msra.mxu0 %v4698
  %5054 = vmatprep.subr.mxu0 0.0
  %5055 = vmatpush1.msra.mxu0 %v4697
  %5056 = vmatprep.subr.mxu0 0.0
  %5057 = vmatpush1.msra.mxu0 %v4696
  %5058 = vmatprep.subr.mxu0 0.0
  %5059 = vmatpush1.msra.mxu0 %v4695
  %5060 = vmatprep.subr.mxu0 0.0
  %5061 = vmatpush2.msra.mxu0 0.0
  %5062 = vmatprep.subr.mxu0 0.0
  %5063 = vmatpush2.msra.mxu0 0.0
  %5064 = vmatprep.subr.mxu0 0.0
  %5065 = vmatpush2.msra.mxu0 0.0
  %5066 = vmatprep.subr.mxu0 0.0
  %5067 = vmatpush2.msra.mxu0 0.0
  %5068 = vmatprep.subr.mxu0 0.0
  %5069 = vmatpush2.msra.mxu0 0.0
  %5070 = vmatprep.subr.mxu0 0.0
  %5071 = vmatpush2.msra.mxu0 0.0
  %5072 = vmatprep.subr.mxu0 0.0
  %5073 = vmatpush2.msra.mxu0 0.0
  %5074 = vmatprep.subr.mxu0 0.0
  %5075 = vmatpush2.msra.mxu0 0.0
  %5076 = vmatprep.subr.mxu0 0.0
  %5077 = vmatpush2.msra.mxu0 0.0
  %5078 = vmatprep.subr.mxu0 0.0
  %5079 = vmatpush2.msra.mxu0 0.0
  %5080 = vmatprep.subr.mxu0 0.0
  %5081 = vmatpush2.msra.mxu0 0.0
  %5082 = vmatprep.subr.mxu0 0.0
  %5083 = vmatpush2.msra.mxu0 0.0
  %5084 = vmatprep.subr.mxu0 0.0
  %5085 = vmatpush2.msra.mxu0 0.0
  %5086 = vmatprep.subr.mxu0 0.0
  %5087 = vmatpush2.msra.mxu0 0.0
  %5088 = vmatprep.subr.mxu0 0.0
  %5089 = vmatpush2.msra.mxu0 0.0
  %5090 = vmatprep.subr.mxu0 0.0
  %5091 = vmatpush2.msra.mxu0 0.0
  %5092 = vmatprep.mubr.f32.mxu0 0.0
  %5093 = vmatmul.mubr.f32.gmra.mxu0 %v5026
  %v5094 = vpop.f32.mrf.mxu0
  %v5095 = vadd.f32 %v5021, %v5094
  %v5096 = vpop.f32.mrf.mxu0
  %5097 = vdwg.mxu0
  %v5098 = vadd.f32 %v5095, %v4711
  %v5099 = vmax.f32 %v5098, 0.0
  %v5101 = vsel %vm2423, %v5099, 0
  %5103 = vmatprep.subr.mxu0 0.0
  %5104 = vmatpush1.msra.mxu0 0.0
  %5105 = vmatprep.subr.mxu0 0.0
  %5106 = vmatpush1.msra.mxu0 0.0
  %5107 = vmatprep.subr.mxu0 0.0
  %5108 = vmatpush1.msra.mxu0 0.0
  %5109 = vmatprep.subr.mxu0 0.0
  %5110 = vmatpush1.msra.mxu0 0.0
  %5111 = vmatprep.subr.mxu0 0.0
  %5112 = vmatpush1.msra.mxu0 0.0
  %5113 = vmatprep.subr.mxu0 0.0
  %5114 = vmatpush1.msra.mxu0 0.0
  %5115 = vmatprep.subr.mxu0 0.0
  %5116 = vmatpush1.msra.mxu0 0.0
  %5117 = vmatprep.subr.mxu0 0.0
  %5118 = vmatpush1.msra.mxu0 0.0
  %5119 = vmatprep.subr.mxu0 0.0
  %5120 = vmatpush1.msra.mxu0 %v4719
  %5121 = vmatprep.subr.mxu0 0.0
  %5122 = vmatpush1.msra.mxu0 %v4718
  %5123 = vmatprep.subr.mxu0 0.0
  %5124 = vmatpush1.msra.mxu0 %v4717
  %5125 = vmatprep.subr.mxu0 0.0
  %5126 = vmatpush1.msra.mxu0 %v4716
  %5127 = vmatprep.subr.mxu0 0.0
  %5128 = vmatpush1.msra.mxu0 %v4715
  %5129 = vmatprep.subr.mxu0 0.0
  %5130 = vmatpush1.msra.mxu0 %v4714
  %5131 = vmatprep.subr.mxu0 0.0
  %5132 = vmatpush1.msra.mxu0 %v4713
  %5133 = vmatprep.subr.mxu0 0.0
  %5134 = vmatpush1.msra.mxu0 %v4712
  %5135 = vmatprep.subr.mxu0 0.0
  %5136 = vmatpush2.msra.mxu0 0.0
  %5137 = vmatprep.subr.mxu0 0.0
  %5138 = vmatpush2.msra.mxu0 0.0
  %5139 = vmatprep.subr.mxu0 0.0
  %5140 = vmatpush2.msra.mxu0 0.0
  %5141 = vmatprep.subr.mxu0 0.0
  %5142 = vmatpush2.msra.mxu0 0.0
  %5143 = vmatprep.subr.mxu0 0.0
  %5144 = vmatpush2.msra.mxu0 0.0
  %5145 = vmatprep.subr.mxu0 0.0
  %5146 = vmatpush2.msra.mxu0 0.0
  %5147 = vmatprep.subr.mxu0 0.0
  %5148 = vmatpush2.msra.mxu0 0.0
  %5149 = vmatprep.subr.mxu0 0.0
  %5150 = vmatpush2.msra.mxu0 0.0
  %5151 = vmatprep.subr.mxu0 0.0
  %5152 = vmatpush2.msra.mxu0 0.0
  %5153 = vmatprep.subr.mxu0 0.0
  %5154 = vmatpush2.msra.mxu0 0.0
  %5155 = vmatprep.subr.mxu0 0.0
  %5156 = vmatpush2.msra.mxu0 0.0
  %5157 = vmatprep.subr.mxu0 0.0
  %5158 = vmatpush2.msra.mxu0 0.0
  %5159 = vmatprep.subr.mxu0 0.0
  %5160 = vmatpush2.msra.mxu0 0.0
  %5161 = vmatprep.subr.mxu0 0.0
  %5162 = vmatpush2.msra.mxu0 0.0
  %5163 = vmatprep.subr.mxu0 0.0
  %5164 = vmatpush2.msra.mxu0 0.0
  %5165 = vmatprep.subr.mxu0 0.0
  %5166 = vmatpush2.msra.mxu0 0.0
  %5167 = vmatprep.mubr.f32.mxu0 0.0
  %5168 = vmatmul.mubr.f32.gmra.mxu0 %v5101
  %v5169 = vpop.f32.mrf.mxu0
  %v5170 = vadd.f32 %v4720, %v5169
  %v5171 = vpop.f32.mrf.mxu0
  %5172 = vdwg.mxu0
  %v5173 = vtanh.pop %v5170
  %5175 = vset.pattern.permute.xlu0 0
  %5176 = vperm.xlu0 %5175, %v5173
  %v5177 = vpop.permute.xlu0 %5176
  %5179 = vst [vmem:[%s15 + $0x1] sm:$0x1] %v5177
  // Predicated region
  $region58: #{policy_value_net_forward.1} parent=0 // pred_check
    _
  $region59: #{policy_value_net_forward.1} parent=0 // pred_check_branch
    %5181 = sbr.rel (0) target = $region61
  $region60: #{policy_value_net_forward.1} parent=0 // pred_region
    _
  $region61: #{policy_value_net_forward.1} parent=0 // pred_fallthru
    _
  // Predicated region
  $region62: #{policy_value_net_forward.1} parent=0 // pred_check
    _
  $region63: #{policy_value_net_forward.1} parent=0 // pred_check_branch
    %5183 = sbr.rel (0) target = $region65
  $region64: #{policy_value_net_forward.1} parent=0 // pred_region
    _
  $region65: #{policy_value_net_forward.1} parent=0 // pred_fallthru
    _
  // Predicated region
  $region66: #{policy_value_net_forward.1} parent=0 // pred_check
    _
  $region67: #{policy_value_net_forward.1} parent=0 // pred_check_branch
    %5185 = sbr.rel (0) target = $region69
  $region68: #{policy_value_net_forward.1} parent=0 // pred_region
    _
  $region69: #{policy_value_net_forward.1} parent=0 // pred_fallthru
    _
  // Predicated region
  $region70: #{policy_value_net_forward.1} parent=0 // pred_check
    _
  $region71: #{policy_value_net_forward.1} parent=0 // pred_check_branch
    %5187 = sbr.rel (0) target = $region73
  $region72: #{policy_value_net_forward.1} parent=0 // pred_region
    _
  $region73: #{policy_value_net_forward.1} parent=0 // pred_fallthru
    _

</llo_original>
